<compile_context>
chip_gen: v5e
topology: v5e:2x2
jax: 0.10.0
libtpu: 0.0.40
codegen_flags: <defaults>
</compile_context>

<pallas_src>
import jax
import jax.numpy as jnp
from jax import lax
from jax.experimental import pallas as pl
from jax.experimental.pallas import tpu as pltpu


# ------------------------------ fused kernel ---------------------------------

def _make_birnn_kernel(T, B, H, num_layers):
    """B is the sublane-padded batch. Returns kernel(x, *layer_weights, dec_w, dec_b)."""
    H2, H8 = 2 * H, 8 * H

    def kernel(*refs):
        x_ref = refs[0]                                            # (T*B, E) bf16
        layer_refs = [tuple(refs[1 + 3 * l: 4 + 3 * l]) for l in range(num_layers)]
        dw_ref = refs[1 + 3 * num_layers]                          # (4H, 6) bf16, permuted rows
        db_ref = refs[2 + 3 * num_layers]                          # (1, 6) f32
        out_ref = refs[3 + 3 * num_layers]                         # (B, 6) f32
        gx_sc = refs[4 + 3 * num_layers]                           # (T*B, 8H) f32 scratch
        y_sc = refs[5 + 3 * num_layers]                            # (T*B, 2H) f32 scratch

        # Lane selector for the interleaved gate layout: True on forward-direction
        # lanes (first H of every 2H gate block). Only used in the bulk merge pass.
        lane = lax.broadcasted_iota(jnp.int32, (B, H8), 1)
        fwd_lane = (lane % H2) < H

        h_first = None
        h_last = None
        for layer in range(num_layers):
            wih_ref, whh_ref, b_ref = layer_refs[layer]
            last_layer = (layer == num_layers - 1)

            # (1) Whole-sequence input projection for BOTH directions in one bf16
            #     matmul (f32 accumulate), bias folded in; hoisted out of the
            #     recurrence.
            if layer == 0:
                src = x_ref[...]                                   # already bf16
            else:
                src = y_sc[...].astype(jnp.bfloat16)
            gx_sc[...] = (jnp.dot(src, wih_ref[...],
                                  preferred_element_type=jnp.float32)
                          + b_ref[...])

            # (2) Direction merge hoisted out of the serial chain: after this bulk
            #     pairwise pass, gx_sc row-block s already holds
            #     [fwd gates @ time s | bwd gates @ time T-1-s].
            for s in range(T // 2):
                tb = T - 1 - s
                g_s = gx_sc[s * B:(s + 1) * B, :]
                g_t = gx_sc[tb * B:(tb + 1) * B, :]
                gx_sc[s * B:(s + 1) * B, :] = jnp.where(fwd_lane, g_s, g_t)
                gx_sc[tb * B:(tb + 1) * B, :] = jnp.where(fwd_lane, g_t, g_s)

            h = jnp.zeros((B, H2), jnp.float32)                    # [h_f | h_b]
            c = jnp.zeros((B, H2), jnp.float32)                    # [c_f | c_b]

            # (3) Serial recurrence (static unroll; T is small — switch to a lightly
            #     unrolled lax.fori_loop if T/num_layers grow).  One (B,2H)@(2H,8H)
            #     bf16 matmul + cell update per step; whh re-read from VMEM at the
            #     dot site instead of pinning it in vregs across the unrolled region.
            for s in range(T):
                gates = (gx_sc[s * B:(s + 1) * B, :]
                         + jnp.dot(h.astype(jnp.bfloat16), whh_ref[...],
                                   preferred_element_type=jnp.float32))
                i = jax.nn.sigmoid(gates[:, 0:H2])
                f = jax.nn.sigmoid(gates[:, H2:2 * H2])
                g = jnp.tanh(gates[:, 2 * H2:3 * H2])
                o = jax.nn.sigmoid(gates[:, 3 * H2:4 * H2])
                c = f * c + i * g
                h = o * jnp.tanh(c)

                if last_layer:
                    # Only out[0] / out[-1] of the last layer feed the decoder.
                    if s == 0:
                        h_first = h
                    if s == T - 1:
                        h_last = h
                else:
                    # ONE wide store per step (no masked half-stores on the chain).
                    y_sc[s * B:(s + 1) * B, :] = h

            # (4) Bulk time-reversal of the backward half, outside the recurrence,
            #     so y_sc row t = [out_f(t) | out_b(t)] for the next layer.
            if not last_layer:
                for s in range(T // 2):
                    tb = T - 1 - s
                    b_s = y_sc[s * B:(s + 1) * B, H:H2]
                    b_t = y_sc[tb * B:(tb + 1) * B, H:H2]
                    y_sc[s * B:(s + 1) * B, H:H2] = b_t
                    y_sc[tb * B:(tb + 1) * B, H:H2] = b_s

        # (5) Fused decoder epilogue.  dec_w rows were permuted on the host to
        #     [0:H, 3H:4H, 2H:3H, H:2H], so the PyTorch encoding
        #     cat(out[0], out[-1]) @ W  ==  h_first @ W[:2H] + h_last @ W[2H:]
        #     with no in-kernel slicing/concatenation of the states.
        out_ref[...] = (
            jnp.dot(h_first.astype(jnp.bfloat16), dw_ref[0:H2, :],
                    preferred_element_type=jnp.float32)
            + jnp.dot(h_last.astype(jnp.bfloat16), dw_ref[H2:, :],
                      preferred_element_type=jnp.float32)
            + db_ref[...])

    return kernel


# ------------------------------ weight packing --------------------------------

def _quantize_bf16(x):
    """Round to the bf16 grid but keep f32 (kernel and reference share exact values)."""
    return x.astype(jnp.bfloat16).astype(jnp.float32)


def _pack_layer(wih_f, whh_f, b_f, wih_b, whh_b, b_b, H):
    """Pack PyTorch-layout per-direction LSTM weights into the fused kernel layout.

    Inputs (PyTorch nn.LSTM layout, gate row order i,f,g,o), already bf16-quantized:
      wih_* : (4H, In), whh_* : (4H, H), b_* : (4H,)  (= b_ih + b_hh)
    Returns:
      wih_packed (In, 8H) bf16, whh_packed (2H, 8H) bf16 block-diagonal per gate,
      b_packed (1, 8H) f32, lane layout [i_f|i_b|f_f|f_b|g_f|g_b|o_f|o_b].
    """
    wih_cols, b_cols, whh_blocks = [], [], []
    zeros_hh = jnp.zeros((H, H), jnp.float32)
    for g in range(4):
        wih_cols += [wih_f[g * H:(g + 1) * H, :].T, wih_b[g * H:(g + 1) * H, :].T]
        b_cols += [b_f[g * H:(g + 1) * H], b_b[g * H:(g + 1) * H]]
        hf = whh_f[g * H:(g + 1) * H, :].T                        # (H, H)
        hb = whh_b[g * H:(g + 1) * H, :].T
        whh_blocks.append(jnp.concatenate(
            [jnp.concatenate([hf, zeros_hh], axis=1),             # fwd rows -> fwd lanes
             jnp.concatenate([zeros_hh, hb], axis=1)], axis=0))    # bwd rows -> bwd lanes
    wih_packed = jnp.concatenate(wih_cols, axis=1).astype(jnp.bfloat16)   # (In, 8H)
    whh_packed = jnp.concatenate(whh_blocks, axis=1).astype(jnp.bfloat16)  # (2H, 8H)
    b_packed = jnp.concatenate(b_cols).reshape(1, 8 * H)                   # (1, 8H) f32
    return wih_packed, whh_packed, b_packed


def init_params(key, vocab_num, embed_size, num_hiddens, num_layers):
    H = num_hiddens
    params = {}
    key, k_embed = jax.random.split(key)
    # nn.Embedding ~ N(0, 1); quantized to the bf16 grid so the kernel's bf16 input
    # cast is exact vs the f32 reference.
    params["embedding"] = _quantize_bf16(
        jax.random.normal(k_embed, (vocab_num, embed_size), jnp.float32))

    bound = 1.0 / (H ** 0.5)                                       # PyTorch LSTM init range
    lstm_packed, lstm_raw = [], []
    in_size = embed_size
    for _ in range(num_layers):
        dirs = []
        for _ in range(2):                                         # forward, backward
            key, k1, k2, k3, k4 = jax.random.split(key, 5)
            wih = _quantize_bf16(
                jax.random.uniform(k1, (4 * H, in_size), jnp.float32, -bound, bound))
            whh = _quantize_bf16(
                jax.random.uniform(k2, (4 * H, H), jnp.float32, -bound, bound))
            bih = jax.random.uniform(k3, (4 * H,), jnp.float32, -bound, bound)
            bhh = jax.random.uniform(k4, (4 * H,), jnp.float32, -bound, bound)
            dirs.append((wih, whh, bih + bhh))
        (wf, hf, bf), (wb, hb, bb) = dirs
        lstm_packed.append(_pack_layer(wf, hf, bf, wb, hb, bb, H))
        lstm_raw.append(((wf, hf, bf), (wb, hb, bb)))
        in_size = 2 * H                                            # next layer eats fwd||bwd
    params["lstm"] = lstm_packed
    params["lstm_raw"] = lstm_raw                                  # for the pure-JAX reference

    key, k5, k6 = jax.random.split(key, 3)
    dbound = 1.0 / ((4 * H) ** 0.5)
    dec_w = _quantize_bf16(
        jax.random.uniform(k5, (6, 4 * H), jnp.float32, -dbound, dbound)).T   # (4H, 6)
    params["dec_w_ref"] = dec_w                                    # reference layout (f32)
    # Kernel layout: rows permuted to [0:H, 3H:4H, 2H:3H, H:2H] so the epilogue is
    # h_first @ W[:2H] + h_last @ W[2H:]  (no slicing/concat of the encoding in-kernel).
    params["dec_w"] = jnp.concatenate(
        [dec_w[0:H], dec_w[3 * H:4 * H], dec_w[2 * H:3 * H], dec_w[H:2 * H]],
        axis=0).astype(jnp.bfloat16)                               # (4H, 6) bf16
    params["dec_b"] = jax.random.uniform(k6, (6,), jnp.float32, -dbound, dbound).reshape(1, 6)
    return params


# ------------------------------- forward pass ---------------------------------

def birnn_forward(params, inputs, num_hiddens, num_layers):
    """inputs: (batch, seq) int32 token ids -> (batch, 6) logits."""
    H = num_hiddens
    idx = inputs.T                                                 # inputs.permute(1, 0) -> (T, B)
    # Embedding lookup kept in plain JAX (pure gather glue, no matmul/reduction).
    emb = jnp.take(params["embedding"], idx, axis=0)               # (T, B, E)
    T, B, E = emb.shape

    # Pad batch to a full 16-row sublane tile (bf16 LHS operands); the recurrence is
    # latency-bound at tiny M so extra rows are essentially free — pack real
    # sequences here rather than padding when batch grows.
    B_pad = 16 * pl.cdiv(B, 16)
    x = jnp.pad(emb, ((0, 0), (0, B_pad - B), (0, 0)))
    x_flat = x.reshape(T * B_pad, E).astype(jnp.bfloat16)          # (T*B_pad, E) bf16

    flat_weights = []
    for wih_p, whh_p, b_p in params["lstm"]:
        flat_weights += [wih_p, whh_p, b_p]

    n_inputs = 1 + 3 * num_layers + 2
    vmem = pl.BlockSpec(memory_space=pltpu.MemorySpace.VMEM)       # whole array resident in VMEM

    # TODO(synk): at larger batch/H/T, add a batch-tile grid axis ("parallel", uses the
    # 2nd TensorCore on v7x) and a per-layer "arbitrary" grid axis to pipeline layer
    # weights/gx tiles instead of keeping everything resident (v7x has 64 MiB VMEM).
    out_padded = pl.pallas_call(
        _make_birnn_kernel(T, B_pad, H, num_layers),
        out_shape=jax.ShapeDtypeStruct((B_pad, 6), jnp.float32),
        in_specs=[vmem] * n_inputs,
        out_specs=vmem,
        scratch_shapes=[
            pltpu.VMEM((T * B_pad, 8 * H), jnp.float32),           # per-layer x @ W_ih (+b), merged
            pltpu.VMEM((T * B_pad, 2 * H), jnp.float32),           # inter-layer activations
        ],
    )(x_flat, *flat_weights, params["dec_w"], params["dec_b"])

    return out_padded[:B]                                          # drop batch padding -> (B, 6)


# --------------------------- pure-JAX reference -------------------------------

def birnn_reference(params, inputs, num_hiddens):
    """Straightforward nn.LSTM(bidirectional)-semantics reference for validation (f32)."""
    H = num_hiddens
    x = jnp.take(params["embedding"], inputs.T, axis=0)            # (T, B, E)
    B = x.shape[1]

    def run_dir(x_seq, wih, whh, b):
        def step(carry, x_t):
            h, c = carry
            gates = x_t @ wih.T + h @ whh.T + b
            i = jax.nn.sigmoid(gates[:, 0:H])
            f = jax.nn.sigmoid(gates[:, H:2 * H])
            g = jnp.tanh(gates[:, 2 * H:3 * H])
            o = jax.nn.sigmoid(gates[:, 3 * H:4 * H])
            c = f * c + i * g
            h = o * jnp.tanh(c)
            return (h, c), h
        init = (jnp.zeros((B, H), jnp.float32), jnp.zeros((B, H), jnp.float32))
        _, hs = lax.scan(step, init, x_seq)
        return hs

    for (wf, hf, bf), (wb, hb, bb) in params["lstm_raw"]:
        fwd = run_dir(x, wf, hf, bf)
        bwd = jnp.flip(run_dir(jnp.flip(x, axis=0), wb, hb, bb), axis=0)
        x = jnp.concatenate([fwd, bwd], axis=-1)
    enc = jnp.concatenate([x[0], x[-1]], axis=-1)
    return enc @ params["dec_w_ref"] + params["dec_b"]


# ----------------------------------- main --------------------------------------

if __name__ == "__main__":
    vocab_num, embed_size, num_hiddens, num_layers = 50, 32, 32, 2
    batch, seq_len = 4, 8

    key = jax.random.PRNGKey(0)
    key, k_params, k_inputs = jax.random.split(key, 3)
    params = init_params(k_params, vocab_num, embed_size, num_hiddens, num_layers)
    inputs = jax.random.randint(k_inputs, (batch, seq_len), 0, vocab_num, jnp.int32)

    out = birnn_forward(params, inputs, num_hiddens, num_layers)
    out = jax.block_until_ready(out)
    assert out.shape == (batch, 6) and out.dtype == jnp.float32

    ref = birnn_reference(params, inputs, num_hiddens)
    # Weights are shared exactly (bf16-quantized); remaining diff is the bf16 cast of
    # activations at the matmul LHS (f32 accumulation), hence the loosened tolerance.
    assert jnp.allclose(out, ref, atol=1e-2, rtol=1e-2), "Pallas BiRNN mismatch vs reference"

    print("KERNEL_OK")
</pallas_src>

<mosaic_0001>
module attributes {stable_mosaic.version = 11 : i64} {
  func.func @kernel(%arg0: memref<128x32xbf16, #tpu.memory_space<vmem>>, %arg1: memref<32x256xbf16, #tpu.memory_space<vmem>>, %arg2: memref<64x256xbf16, #tpu.memory_space<vmem>>, %arg3: memref<1x256xf32, #tpu.memory_space<vmem>>, %arg4: memref<64x256xbf16, #tpu.memory_space<vmem>>, %arg5: memref<64x256xbf16, #tpu.memory_space<vmem>>, %arg6: memref<1x256xf32, #tpu.memory_space<vmem>>, %arg7: memref<128x6xbf16, #tpu.memory_space<vmem>>, %arg8: memref<1x6xf32, #tpu.memory_space<vmem>>, %arg9: memref<16x6xf32, #tpu.memory_space<vmem>>, %arg10: memref<128x256xf32, #tpu.memory_space<vmem>>, %arg11: memref<128x64xf32, #tpu.memory_space<vmem>>) attributes {dimension_semantics = [], scalar_prefetch = 0 : i64, scratch_operands = 2 : i64, tpu.core_type = #tpu.core_type<tc>} {
    %0 = tpu.iota {dimensions = array<i32: 1>} : vector<16x256xi32>
    %c64_i32 = arith.constant 64 : i32
    %c0_i32 = arith.constant 0 : i32
    %1 = arith.cmpi eq, %c64_i32, %c0_i32 : i32
    %c1_i32 = arith.constant 1 : i32
    %2 = arith.select %1, %c1_i32, %c64_i32 : i32
    %3 = vector.broadcast %2 : i32 to vector<16x256xi32>
    %4 = arith.remsi %0, %3 : vector<16x256xi32>
    %c0_i32_0 = arith.constant 0 : i32
    %5 = vector.broadcast %c0_i32_0 : i32 to vector<16x256xi32>
    %6 = arith.cmpi ne, %4, %5 : vector<16x256xi32>
    %c0_i32_1 = arith.constant 0 : i32
    %7 = vector.broadcast %c0_i32_1 : i32 to vector<16x256xi32>
    %8 = arith.cmpi slt, %4, %7 : vector<16x256xi32>
    %c0_i32_2 = arith.constant 0 : i32
    %9 = arith.cmpi slt, %2, %c0_i32_2 : i32
    %10 = vector.broadcast %9 : i1 to vector<16x256xi1>
    %11 = vector.broadcast %10 : vector<16x256xi1> to vector<16x256xi1>
    %12 = arith.xori %8, %11 : vector<16x256xi1>
    %13 = arith.andi %12, %6 : vector<16x256xi1>
    %14 = vector.broadcast %2 : i32 to vector<16x256xi32>
    %15 = arith.addi %4, %14 : vector<16x256xi32>
    %16 = arith.select %13, %15, %4 : vector<16x256xi1>, vector<16x256xi32>
    %c32_i32 = arith.constant 32 : i32
    %17 = vector.broadcast %c32_i32 : i32 to vector<16x256xi32>
    %18 = arith.cmpi slt, %16, %17 : vector<16x256xi32>
    %c0 = arith.constant 0 : index
    %c0_3 = arith.constant 0 : index
    %19 = vector.load %arg0[%c0, %c0_3] : memref<128x32xbf16, #tpu.memory_space<vmem>>, vector<128x32xbf16>
    %c0_4 = arith.constant 0 : index
    %c0_5 = arith.constant 0 : index
    %20 = vector.load %arg1[%c0_4, %c0_5] : memref<32x256xbf16, #tpu.memory_space<vmem>>, vector<32x256xbf16>
    %cst = arith.constant dense<0.000000e+00> : vector<128x256xf32>
    %21 = tpu.matmul %19, %20, %cst {dimension_numbers = #tpu.dot_dimension_numbers<[1], [0], [0], [1], [0, 0, 1, 1], [], []>} : vector<128x32xbf16>, vector<32x256xbf16>, vector<128x256xf32> -> vector<128x256xf32>
    %c0_6 = arith.constant 0 : index
    %c0_7 = arith.constant 0 : index
    %22 = vector.load %arg3[%c0_6, %c0_7] : memref<1x256xf32, #tpu.memory_space<vmem>>, vector<1x256xf32>
    %23 = vector.broadcast %22 : vector<1x256xf32> to vector<128x256xf32>
    %24 = arith.addf %21, %23 : vector<128x256xf32>
    %c0_8 = arith.constant 0 : index
    %c0_9 = arith.constant 0 : index
    %25 = vector.load %arg10[%c0_8, %c0_9] : memref<128x256xf32, #tpu.memory_space<vmem>>, vector<128x256xf32>
    tpu.vector_store %arg10[%c0_8, %c0_9], %24 {strides = array<i32>} : memref<128x256xf32, #tpu.memory_space<vmem>>, vector<128x256xf32>,
    %c0_10 = arith.constant 0 : index
    %c0_11 = arith.constant 0 : index
    %26 = vector.load %arg10[%c0_10, %c0_11] : memref<128x256xf32, #tpu.memory_space<vmem>>, vector<16x256xf32>
    %c112 = arith.constant 112 : index
    %c0_12 = arith.constant 0 : index
    %27 = vector.load %arg10[%c112, %c0_12] : memref<128x256xf32, #tpu.memory_space<vmem>>, vector<16x256xf32>
    %28 = arith.select %18, %26, %27 : vector<16x256xi1>, vector<16x256xf32>
    %c0_13 = arith.constant 0 : index
    %c0_14 = arith.constant 0 : index
    %29 = vector.load %arg10[%c0_13, %c0_14] : memref<128x256xf32, #tpu.memory_space<vmem>>, vector<16x256xf32>
    tpu.vector_store %arg10[%c0_13, %c0_14], %28 {strides = array<i32>} : memref<128x256xf32, #tpu.memory_space<vmem>>, vector<16x256xf32>,
    %30 = arith.select %18, %27, %26 : vector<16x256xi1>, vector<16x256xf32>
    %c112_15 = arith.constant 112 : index
    %c0_16 = arith.constant 0 : index
    %31 = vector.load %arg10[%c112_15, %c0_16] : memref<128x256xf32, #tpu.memory_space<vmem>>, vector<16x256xf32>
    tpu.vector_store %arg10[%c112_15, %c0_16], %30 {strides = array<i32>} : memref<128x256xf32, #tpu.memory_space<vmem>>, vector<16x256xf32>,
    %c16 = arith.constant 16 : index
    %c0_17 = arith.constant 0 : index
    %32 = vector.load %arg10[%c16, %c0_17] : memref<128x256xf32, #tpu.memory_space<vmem>>, vector<16x256xf32>
    %c96 = arith.constant 96 : index
    %c0_18 = arith.constant 0 : index
    %33 = vector.load %arg10[%c96, %c0_18] : memref<128x256xf32, #tpu.memory_space<vmem>>, vector<16x256xf32>
    %34 = arith.select %18, %32, %33 : vector<16x256xi1>, vector<16x256xf32>
    %c16_19 = arith.constant 16 : index
    %c0_20 = arith.constant 0 : index
    %35 = vector.load %arg10[%c16_19, %c0_20] : memref<128x256xf32, #tpu.memory_space<vmem>>, vector<16x256xf32>
    tpu.vector_store %arg10[%c16_19, %c0_20], %34 {strides = array<i32>} : memref<128x256xf32, #tpu.memory_space<vmem>>, vector<16x256xf32>,
    %36 = arith.select %18, %33, %32 : vector<16x256xi1>, vector<16x256xf32>
    %c96_21 = arith.constant 96 : index
    %c0_22 = arith.constant 0 : index
    %37 = vector.load %arg10[%c96_21, %c0_22] : memref<128x256xf32, #tpu.memory_space<vmem>>, vector<16x256xf32>
    tpu.vector_store %arg10[%c96_21, %c0_22], %36 {strides = array<i32>} : memref<128x256xf32, #tpu.memory_space<vmem>>, vector<16x256xf32>,
    %c32 = arith.constant 32 : index
    %c0_23 = arith.constant 0 : index
    %38 = vector.load %arg10[%c32, %c0_23] : memref<128x256xf32, #tpu.memory_space<vmem>>, vector<16x256xf32>
    %c80 = arith.constant 80 : index
    %c0_24 = arith.constant 0 : index
    %39 = vector.load %arg10[%c80, %c0_24] : memref<128x256xf32, #tpu.memory_space<vmem>>, vector<16x256xf32>
    %40 = arith.select %18, %38, %39 : vector<16x256xi1>, vector<16x256xf32>
    %c32_25 = arith.constant 32 : index
    %c0_26 = arith.constant 0 : index
    %41 = vector.load %arg10[%c32_25, %c0_26] : memref<128x256xf32, #tpu.memory_space<vmem>>, vector<16x256xf32>
    tpu.vector_store %arg10[%c32_25, %c0_26], %40 {strides = array<i32>} : memref<128x256xf32, #tpu.memory_space<vmem>>, vector<16x256xf32>,
    %42 = arith.select %18, %39, %38 : vector<16x256xi1>, vector<16x256xf32>
    %c80_27 = arith.constant 80 : index
    %c0_28 = arith.constant 0 : index
    %43 = vector.load %arg10[%c80_27, %c0_28] : memref<128x256xf32, #tpu.memory_space<vmem>>, vector<16x256xf32>
    tpu.vector_store %arg10[%c80_27, %c0_28], %42 {strides = array<i32>} : memref<128x256xf32, #tpu.memory_space<vmem>>, vector<16x256xf32>,
    %c48 = arith.constant 48 : index
    %c0_29 = arith.constant 0 : index
    %44 = vector.load %arg10[%c48, %c0_29] : memref<128x256xf32, #tpu.memory_space<vmem>>, vector<16x256xf32>
    %c64 = arith.constant 64 : index
    %c0_30 = arith.constant 0 : index
    %45 = vector.load %arg10[%c64, %c0_30] : memref<128x256xf32, #tpu.memory_space<vmem>>, vector<16x256xf32>
    %46 = arith.select %18, %44, %45 : vector<16x256xi1>, vector<16x256xf32>
    %c48_31 = arith.constant 48 : index
    %c0_32 = arith.constant 0 : index
    %47 = vector.load %arg10[%c48_31, %c0_32] : memref<128x256xf32, #tpu.memory_space<vmem>>, vector<16x256xf32>
    tpu.vector_store %arg10[%c48_31, %c0_32], %46 {strides = array<i32>} : memref<128x256xf32, #tpu.memory_space<vmem>>, vector<16x256xf32>,
    %48 = arith.select %18, %45, %44 : vector<16x256xi1>, vector<16x256xf32>
    %c64_33 = arith.constant 64 : index
    %c0_34 = arith.constant 0 : index
    %49 = vector.load %arg10[%c64_33, %c0_34] : memref<128x256xf32, #tpu.memory_space<vmem>>, vector<16x256xf32>
    tpu.vector_store %arg10[%c64_33, %c0_34], %48 {strides = array<i32>} : memref<128x256xf32, #tpu.memory_space<vmem>>, vector<16x256xf32>,
    %cst_35 = arith.constant 0.000000e+00 : f32
    %50 = vector.broadcast %cst_35 : f32 to vector<16x64xf32>
    %cst_36 = arith.constant 0.000000e+00 : f32
    %51 = vector.broadcast %cst_36 : f32 to vector<16x64xf32>
    %c0_37 = arith.constant 0 : index
    %c0_38 = arith.constant 0 : index
    %52 = vector.load %arg10[%c0_37, %c0_38] : memref<128x256xf32, #tpu.memory_space<vmem>>, vector<16x256xf32>
    %53 = arith.truncf %50 : vector<16x64xf32> to vector<16x64xbf16>
    %c0_39 = arith.constant 0 : index
    %c0_40 = arith.constant 0 : index
    %54 = vector.load %arg2[%c0_39, %c0_40] : memref<64x256xbf16, #tpu.memory_space<vmem>>, vector<64x256xbf16>
    %cst_41 = arith.constant dense<0.000000e+00> : vector<16x256xf32>
    %55 = tpu.matmul %53, %54, %cst_41 {dimension_numbers = #tpu.dot_dimension_numbers<[1], [0], [0], [1], [0, 0, 1, 1], [], []>} : vector<16x64xbf16>, vector<64x256xbf16>, vector<16x256xf32> -> vector<16x256xf32>
    %56 = arith.addf %52, %55 : vector<16x256xf32>
    %57 = vector.extract_strided_slice %56 {offsets = [0, 0], sizes = [16, 64], strides = [1, 1]} : vector<16x256xf32> to vector<16x64xf32>
    %58 = arith.negf %57 : vector<16x64xf32>
    %59 = math.exp %58 : vector<16x64xf32>
    %cst_42 = arith.constant 1.000000e+00 : f32
    %60 = vector.broadcast %cst_42 : f32 to vector<16x64xf32>
    %61 = arith.addf %60, %59 : vector<16x64xf32>
    %62 = arith.divf %60, %61 : vector<16x64xf32>
    %63 = vector.extract_strided_slice %56 {offsets = [0, 64], sizes = [16, 64], strides = [1, 1]} : vector<16x256xf32> to vector<16x64xf32>
    %64 = arith.negf %63 : vector<16x64xf32>
    %65 = math.exp %64 : vector<16x64xf32>
    %cst_43 = arith.constant 1.000000e+00 : f32
    %66 = vector.broadcast %cst_43 : f32 to vector<16x64xf32>
    %67 = arith.addf %66, %65 : vector<16x64xf32>
    %68 = arith.divf %66, %67 : vector<16x64xf32>
    %69 = vector.extract_strided_slice %56 {offsets = [0, 128], sizes = [16, 64], strides = [1, 1]} : vector<16x256xf32> to vector<16x64xf32>
    %70 = math.tanh %69 : vector<16x64xf32>
    %71 = vector.extract_strided_slice %56 {offsets = [0, 192], sizes = [16, 64], strides = [1, 1]} : vector<16x256xf32> to vector<16x64xf32>
    %72 = arith.negf %71 : vector<16x64xf32>
    %73 = math.exp %72 : vector<16x64xf32>
    %cst_44 = arith.constant 1.000000e+00 : f32
    %74 = vector.broadcast %cst_44 : f32 to vector<16x64xf32>
    %75 = arith.addf %74, %73 : vector<16x64xf32>
    %76 = arith.divf %74, %75 : vector<16x64xf32>
    %77 = arith.mulf %68, %51 : vector<16x64xf32>
    %78 = arith.mulf %62, %70 : vector<16x64xf32>
    %79 = arith.addf %77, %78 : vector<16x64xf32>
    %80 = math.tanh %79 : vector<16x64xf32>
    %81 = arith.mulf %76, %80 : vector<16x64xf32>
    %c0_45 = arith.constant 0 : index
    %c0_46 = arith.constant 0 : index
    %82 = vector.load %arg11[%c0_45, %c0_46] : memref<128x64xf32, #tpu.memory_space<vmem>>, vector<16x64xf32>
    tpu.vector_store %arg11[%c0_45, %c0_46], %81 {strides = array<i32>} : memref<128x64xf32, #tpu.memory_space<vmem>>, vector<16x64xf32>,
    %c16_47 = arith.constant 16 : index
    %c0_48 = arith.constant 0 : index
    %83 = vector.load %arg10[%c16_47, %c0_48] : memref<128x256xf32, #tpu.memory_space<vmem>>, vector<16x256xf32>
    %84 = arith.truncf %81 : vector<16x64xf32> to vector<16x64xbf16>
    %c0_49 = arith.constant 0 : index
    %c0_50 = arith.constant 0 : index
    %85 = vector.load %arg2[%c0_49, %c0_50] : memref<64x256xbf16, #tpu.memory_space<vmem>>, vector<64x256xbf16>
    %cst_51 = arith.constant dense<0.000000e+00> : vector<16x256xf32>
    %86 = tpu.matmul %84, %85, %cst_51 {dimension_numbers = #tpu.dot_dimension_numbers<[1], [0], [0], [1], [0, 0, 1, 1], [], []>} : vector<16x64xbf16>, vector<64x256xbf16>, vector<16x256xf32> -> vector<16x256xf32>
    %87 = arith.addf %83, %86 : vector<16x256xf32>
    %88 = vector.extract_strided_slice %87 {offsets = [0, 0], sizes = [16, 64], strides = [1, 1]} : vector<16x256xf32> to vector<16x64xf32>
    %89 = arith.negf %88 : vector<16x64xf32>
    %90 = math.exp %89 : vector<16x64xf32>
    %cst_52 = arith.constant 1.000000e+00 : f32
    %91 = vector.broadcast %cst_52 : f32 to vector<16x64xf32>
    %92 = arith.addf %91, %90 : vector<16x64xf32>
    %93 = arith.divf %91, %92 : vector<16x64xf32>
    %94 = vector.extract_strided_slice %87 {offsets = [0, 64], sizes = [16, 64], strides = [1, 1]} : vector<16x256xf32> to vector<16x64xf32>
    %95 = arith.negf %94 : vector<16x64xf32>
    %96 = math.exp %95 : vector<16x64xf32>
    %cst_53 = arith.constant 1.000000e+00 : f32
    %97 = vector.broadcast %cst_53 : f32 to vector<16x64xf32>
    %98 = arith.addf %97, %96 : vector<16x64xf32>
    %99 = arith.divf %97, %98 : vector<16x64xf32>
    %100 = vector.extract_strided_slice %87 {offsets = [0, 128], sizes = [16, 64], strides = [1, 1]} : vector<16x256xf32> to vector<16x64xf32>
    %101 = math.tanh %100 : vector<16x64xf32>
    %102 = vector.extract_strided_slice %87 {offsets = [0, 192], sizes = [16, 64], strides = [1, 1]} : vector<16x256xf32> to vector<16x64xf32>
    %103 = arith.negf %102 : vector<16x64xf32>
    %104 = math.exp %103 : vector<16x64xf32>
    %cst_54 = arith.constant 1.000000e+00 : f32
    %105 = vector.broadcast %cst_54 : f32 to vector<16x64xf32>
    %106 = arith.addf %105, %104 : vector<16x64xf32>
    %107 = arith.divf %105, %106 : vector<16x64xf32>
    %108 = arith.mulf %99, %79 : vector<16x64xf32>
    %109 = arith.mulf %93, %101 : vector<16x64xf32>
    %110 = arith.addf %108, %109 : vector<16x64xf32>
    %111 = math.tanh %110 : vector<16x64xf32>
    %112 = arith.mulf %107, %111 : vector<16x64xf32>
    %c16_55 = arith.constant 16 : index
    %c0_56 = arith.constant 0 : index
    %113 = vector.load %arg11[%c16_55, %c0_56] : memref<128x64xf32, #tpu.memory_space<vmem>>, vector<16x64xf32>
    tpu.vector_store %arg11[%c16_55, %c0_56], %112 {strides = array<i32>} : memref<128x64xf32, #tpu.memory_space<vmem>>, vector<16x64xf32>,
    %c32_57 = arith.constant 32 : index
    %c0_58 = arith.constant 0 : index
    %114 = vector.load %arg10[%c32_57, %c0_58] : memref<128x256xf32, #tpu.memory_space<vmem>>, vector<16x256xf32>
    %115 = arith.truncf %112 : vector<16x64xf32> to vector<16x64xbf16>
    %c0_59 = arith.constant 0 : index
    %c0_60 = arith.constant 0 : index
    %116 = vector.load %arg2[%c0_59, %c0_60] : memref<64x256xbf16, #tpu.memory_space<vmem>>, vector<64x256xbf16>
    %cst_61 = arith.constant dense<0.000000e+00> : vector<16x256xf32>
    %117 = tpu.matmul %115, %116, %cst_61 {dimension_numbers = #tpu.dot_dimension_numbers<[1], [0], [0], [1], [0, 0, 1, 1], [], []>} : vector<16x64xbf16>, vector<64x256xbf16>, vector<16x256xf32> -> vector<16x256xf32>
    %118 = arith.addf %114, %117 : vector<16x256xf32>
    %119 = vector.extract_strided_slice %118 {offsets = [0, 0], sizes = [16, 64], strides = [1, 1]} : vector<16x256xf32> to vector<16x64xf32>
    %120 = arith.negf %119 : vector<16x64xf32>
    %121 = math.exp %120 : vector<16x64xf32>
    %cst_62 = arith.constant 1.000000e+00 : f32
    %122 = vector.broadcast %cst_62 : f32 to vector<16x64xf32>
    %123 = arith.addf %122, %121 : vector<16x64xf32>
    %124 = arith.divf %122, %123 : vector<16x64xf32>
    %125 = vector.extract_strided_slice %118 {offsets = [0, 64], sizes = [16, 64], strides = [1, 1]} : vector<16x256xf32> to vector<16x64xf32>
    %126 = arith.negf %125 : vector<16x64xf32>
    %127 = math.exp %126 : vector<16x64xf32>
    %cst_63 = arith.constant 1.000000e+00 : f32
    %128 = vector.broadcast %cst_63 : f32 to vector<16x64xf32>
    %129 = arith.addf %128, %127 : vector<16x64xf32>
    %130 = arith.divf %128, %129 : vector<16x64xf32>
    %131 = vector.extract_strided_slice %118 {offsets = [0, 128], sizes = [16, 64], strides = [1, 1]} : vector<16x256xf32> to vector<16x64xf32>
    %132 = math.tanh %131 : vector<16x64xf32>
    %133 = vector.extract_strided_slice %118 {offsets = [0, 192], sizes = [16, 64], strides = [1, 1]} : vector<16x256xf32> to vector<16x64xf32>
    %134 = arith.negf %133 : vector<16x64xf32>
    %135 = math.exp %134 : vector<16x64xf32>
    %cst_64 = arith.constant 1.000000e+00 : f32
    %136 = vector.broadcast %cst_64 : f32 to vector<16x64xf32>
    %137 = arith.addf %136, %135 : vector<16x64xf32>
    %138 = arith.divf %136, %137 : vector<16x64xf32>
    %139 = arith.mulf %130, %110 : vector<16x64xf32>
    %140 = arith.mulf %124, %132 : vector<16x64xf32>
    %141 = arith.addf %139, %140 : vector<16x64xf32>
    %142 = math.tanh %141 : vector<16x64xf32>
    %143 = arith.mulf %138, %142 : vector<16x64xf32>
    %c32_65 = arith.constant 32 : index
    %c0_66 = arith.constant 0 : index
    %144 = vector.load %arg11[%c32_65, %c0_66] : memref<128x64xf32, #tpu.memory_space<vmem>>, vector<16x64xf32>
    tpu.vector_store %arg11[%c32_65, %c0_66], %143 {strides = array<i32>} : memref<128x64xf32, #tpu.memory_space<vmem>>, vector<16x64xf32>,
    %c48_67 = arith.constant 48 : index
    %c0_68 = arith.constant 0 : index
    %145 = vector.load %arg10[%c48_67, %c0_68] : memref<128x256xf32, #tpu.memory_space<vmem>>, vector<16x256xf32>
    %146 = arith.truncf %143 : vector<16x64xf32> to vector<16x64xbf16>
    %c0_69 = arith.constant 0 : index
    %c0_70 = arith.constant 0 : index
    %147 = vector.load %arg2[%c0_69, %c0_70] : memref<64x256xbf16, #tpu.memory_space<vmem>>, vector<64x256xbf16>
    %cst_71 = arith.constant dense<0.000000e+00> : vector<16x256xf32>
    %148 = tpu.matmul %146, %147, %cst_71 {dimension_numbers = #tpu.dot_dimension_numbers<[1], [0], [0], [1], [0, 0, 1, 1], [], []>} : vector<16x64xbf16>, vector<64x256xbf16>, vector<16x256xf32> -> vector<16x256xf32>
    %149 = arith.addf %145, %148 : vector<16x256xf32>
    %150 = vector.extract_strided_slice %149 {offsets = [0, 0], sizes = [16, 64], strides = [1, 1]} : vector<16x256xf32> to vector<16x64xf32>
    %151 = arith.negf %150 : vector<16x64xf32>
    %152 = math.exp %151 : vector<16x64xf32>
    %cst_72 = arith.constant 1.000000e+00 : f32
    %153 = vector.broadcast %cst_72 : f32 to vector<16x64xf32>
    %154 = arith.addf %153, %152 : vector<16x64xf32>
    %155 = arith.divf %153, %154 : vector<16x64xf32>
    %156 = vector.extract_strided_slice %149 {offsets = [0, 64], sizes = [16, 64], strides = [1, 1]} : vector<16x256xf32> to vector<16x64xf32>
    %157 = arith.negf %156 : vector<16x64xf32>
    %158 = math.exp %157 : vector<16x64xf32>
    %cst_73 = arith.constant 1.000000e+00 : f32
    %159 = vector.broadcast %cst_73 : f32 to vector<16x64xf32>
    %160 = arith.addf %159, %158 : vector<16x64xf32>
    %161 = arith.divf %159, %160 : vector<16x64xf32>
    %162 = vector.extract_strided_slice %149 {offsets = [0, 128], sizes = [16, 64], strides = [1, 1]} : vector<16x256xf32> to vector<16x64xf32>
    %163 = math.tanh %162 : vector<16x64xf32>
    %164 = vector.extract_strided_slice %149 {offsets = [0, 192], sizes = [16, 64], strides = [1, 1]} : vector<16x256xf32> to vector<16x64xf32>
    %165 = arith.negf %164 : vector<16x64xf32>
    %166 = math.exp %165 : vector<16x64xf32>
    %cst_74 = arith.constant 1.000000e+00 : f32
    %167 = vector.broadcast %cst_74 : f32 to vector<16x64xf32>
    %168 = arith.addf %167, %166 : vector<16x64xf32>
    %169 = arith.divf %167, %168 : vector<16x64xf32>
    %170 = arith.mulf %161, %141 : vector<16x64xf32>
    %171 = arith.mulf %155, %163 : vector<16x64xf32>
    %172 = arith.addf %170, %171 : vector<16x64xf32>
    %173 = math.tanh %172 : vector<16x64xf32>
    %174 = arith.mulf %169, %173 : vector<16x64xf32>
    %c48_75 = arith.constant 48 : index
    %c0_76 = arith.constant 0 : index
    %175 = vector.load %arg11[%c48_75, %c0_76] : memref<128x64xf32, #tpu.memory_space<vmem>>, vector<16x64xf32>
    tpu.vector_store %arg11[%c48_75, %c0_76], %174 {strides = array<i32>} : memref<128x64xf32, #tpu.memory_space<vmem>>, vector<16x64xf32>,
    %c64_77 = arith.constant 64 : index
    %c0_78 = arith.constant 0 : index
    %176 = vector.load %arg10[%c64_77, %c0_78] : memref<128x256xf32, #tpu.memory_space<vmem>>, vector<16x256xf32>
    %177 = arith.truncf %174 : vector<16x64xf32> to vector<16x64xbf16>
    %c0_79 = arith.constant 0 : index
    %c0_80 = arith.constant 0 : index
    %178 = vector.load %arg2[%c0_79, %c0_80] : memref<64x256xbf16, #tpu.memory_space<vmem>>, vector<64x256xbf16>
    %cst_81 = arith.constant dense<0.000000e+00> : vector<16x256xf32>
    %179 = tpu.matmul %177, %178, %cst_81 {dimension_numbers = #tpu.dot_dimension_numbers<[1], [0], [0], [1], [0, 0, 1, 1], [], []>} : vector<16x64xbf16>, vector<64x256xbf16>, vector<16x256xf32> -> vector<16x256xf32>
    %180 = arith.addf %176, %179 : vector<16x256xf32>
    %181 = vector.extract_strided_slice %180 {offsets = [0, 0], sizes = [16, 64], strides = [1, 1]} : vector<16x256xf32> to vector<16x64xf32>
    %182 = arith.negf %181 : vector<16x64xf32>
    %183 = math.exp %182 : vector<16x64xf32>
    %cst_82 = arith.constant 1.000000e+00 : f32
    %184 = vector.broadcast %cst_82 : f32 to vector<16x64xf32>
    %185 = arith.addf %184, %183 : vector<16x64xf32>
    %186 = arith.divf %184, %185 : vector<16x64xf32>
    %187 = vector.extract_strided_slice %180 {offsets = [0, 64], sizes = [16, 64], strides = [1, 1]} : vector<16x256xf32> to vector<16x64xf32>
    %188 = arith.negf %187 : vector<16x64xf32>
    %189 = math.exp %188 : vector<16x64xf32>
    %cst_83 = arith.constant 1.000000e+00 : f32
    %190 = vector.broadcast %cst_83 : f32 to vector<16x64xf32>
    %191 = arith.addf %190, %189 : vector<16x64xf32>
    %192 = arith.divf %190, %191 : vector<16x64xf32>
    %193 = vector.extract_strided_slice %180 {offsets = [0, 128], sizes = [16, 64], strides = [1, 1]} : vector<16x256xf32> to vector<16x64xf32>
    %194 = math.tanh %193 : vector<16x64xf32>
    %195 = vector.extract_strided_slice %180 {offsets = [0, 192], sizes = [16, 64], strides = [1, 1]} : vector<16x256xf32> to vector<16x64xf32>
    %196 = arith.negf %195 : vector<16x64xf32>
    %197 = math.exp %196 : vector<16x64xf32>
    %cst_84 = arith.constant 1.000000e+00 : f32
    %198 = vector.broadcast %cst_84 : f32 to vector<16x64xf32>
    %199 = arith.addf %198, %197 : vector<16x64xf32>
    %200 = arith.divf %198, %199 : vector<16x64xf32>
    %201 = arith.mulf %192, %172 : vector<16x64xf32>
    %202 = arith.mulf %186, %194 : vector<16x64xf32>
    %203 = arith.addf %201, %202 : vector<16x64xf32>
    %204 = math.tanh %203 : vector<16x64xf32>
    %205 = arith.mulf %200, %204 : vector<16x64xf32>
    %c64_85 = arith.constant 64 : index
    %c0_86 = arith.constant 0 : index
    %206 = vector.load %arg11[%c64_85, %c0_86] : memref<128x64xf32, #tpu.memory_space<vmem>>, vector<16x64xf32>
    tpu.vector_store %arg11[%c64_85, %c0_86], %205 {strides = array<i32>} : memref<128x64xf32, #tpu.memory_space<vmem>>, vector<16x64xf32>,
    %c80_87 = arith.constant 80 : index
    %c0_88 = arith.constant 0 : index
    %207 = vector.load %arg10[%c80_87, %c0_88] : memref<128x256xf32, #tpu.memory_space<vmem>>, vector<16x256xf32>
    %208 = arith.truncf %205 : vector<16x64xf32> to vector<16x64xbf16>
    %c0_89 = arith.constant 0 : index
    %c0_90 = arith.constant 0 : index
    %209 = vector.load %arg2[%c0_89, %c0_90] : memref<64x256xbf16, #tpu.memory_space<vmem>>, vector<64x256xbf16>
    %cst_91 = arith.constant dense<0.000000e+00> : vector<16x256xf32>
    %210 = tpu.matmul %208, %209, %cst_91 {dimension_numbers = #tpu.dot_dimension_numbers<[1], [0], [0], [1], [0, 0, 1, 1], [], []>} : vector<16x64xbf16>, vector<64x256xbf16>, vector<16x256xf32> -> vector<16x256xf32>
    %211 = arith.addf %207, %210 : vector<16x256xf32>
    %212 = vector.extract_strided_slice %211 {offsets = [0, 0], sizes = [16, 64], strides = [1, 1]} : vector<16x256xf32> to vector<16x64xf32>
    %213 = arith.negf %212 : vector<16x64xf32>
    %214 = math.exp %213 : vector<16x64xf32>
    %cst_92 = arith.constant 1.000000e+00 : f32
    %215 = vector.broadcast %cst_92 : f32 to vector<16x64xf32>
    %216 = arith.addf %215, %214 : vector<16x64xf32>
    %217 = arith.divf %215, %216 : vector<16x64xf32>
    %218 = vector.extract_strided_slice %211 {offsets = [0, 64], sizes = [16, 64], strides = [1, 1]} : vector<16x256xf32> to vector<16x64xf32>
    %219 = arith.negf %218 : vector<16x64xf32>
    %220 = math.exp %219 : vector<16x64xf32>
    %cst_93 = arith.constant 1.000000e+00 : f32
    %221 = vector.broadcast %cst_93 : f32 to vector<16x64xf32>
    %222 = arith.addf %221, %220 : vector<16x64xf32>
    %223 = arith.divf %221, %222 : vector<16x64xf32>
    %224 = vector.extract_strided_slice %211 {offsets = [0, 128], sizes = [16, 64], strides = [1, 1]} : vector<16x256xf32> to vector<16x64xf32>
    %225 = math.tanh %224 : vector<16x64xf32>
    %226 = vector.extract_strided_slice %211 {offsets = [0, 192], sizes = [16, 64], strides = [1, 1]} : vector<16x256xf32> to vector<16x64xf32>
    %227 = arith.negf %226 : vector<16x64xf32>
    %228 = math.exp %227 : vector<16x64xf32>
    %cst_94 = arith.constant 1.000000e+00 : f32
    %229 = vector.broadcast %cst_94 : f32 to vector<16x64xf32>
    %230 = arith.addf %229, %228 : vector<16x64xf32>
    %231 = arith.divf %229, %230 : vector<16x64xf32>
    %232 = arith.mulf %223, %203 : vector<16x64xf32>
    %233 = arith.mulf %217, %225 : vector<16x64xf32>
    %234 = arith.addf %232, %233 : vector<16x64xf32>
    %235 = math.tanh %234 : vector<16x64xf32>
    %236 = arith.mulf %231, %235 : vector<16x64xf32>
    %c80_95 = arith.constant 80 : index
    %c0_96 = arith.constant 0 : index
    %237 = vector.load %arg11[%c80_95, %c0_96] : memref<128x64xf32, #tpu.memory_space<vmem>>, vector<16x64xf32>
    tpu.vector_store %arg11[%c80_95, %c0_96], %236 {strides = array<i32>} : memref<128x64xf32, #tpu.memory_space<vmem>>, vector<16x64xf32>,
    %c96_97 = arith.constant 96 : index
    %c0_98 = arith.constant 0 : index
    %238 = vector.load %arg10[%c96_97, %c0_98] : memref<128x256xf32, #tpu.memory_space<vmem>>, vector<16x256xf32>
    %239 = arith.truncf %236 : vector<16x64xf32> to vector<16x64xbf16>
    %c0_99 = arith.constant 0 : index
    %c0_100 = arith.constant 0 : index
    %240 = vector.load %arg2[%c0_99, %c0_100] : memref<64x256xbf16, #tpu.memory_space<vmem>>, vector<64x256xbf16>
    %cst_101 = arith.constant dense<0.000000e+00> : vector<16x256xf32>
    %241 = tpu.matmul %239, %240, %cst_101 {dimension_numbers = #tpu.dot_dimension_numbers<[1], [0], [0], [1], [0, 0, 1, 1], [], []>} : vector<16x64xbf16>, vector<64x256xbf16>, vector<16x256xf32> -> vector<16x256xf32>
    %242 = arith.addf %238, %241 : vector<16x256xf32>
    %243 = vector.extract_strided_slice %242 {offsets = [0, 0], sizes = [16, 64], strides = [1, 1]} : vector<16x256xf32> to vector<16x64xf32>
    %244 = arith.negf %243 : vector<16x64xf32>
    %245 = math.exp %244 : vector<16x64xf32>
    %cst_102 = arith.constant 1.000000e+00 : f32
    %246 = vector.broadcast %cst_102 : f32 to vector<16x64xf32>
    %247 = arith.addf %246, %245 : vector<16x64xf32>
    %248 = arith.divf %246, %247 : vector<16x64xf32>
    %249 = vector.extract_strided_slice %242 {offsets = [0, 64], sizes = [16, 64], strides = [1, 1]} : vector<16x256xf32> to vector<16x64xf32>
    %250 = arith.negf %249 : vector<16x64xf32>
    %251 = math.exp %250 : vector<16x64xf32>
    %cst_103 = arith.constant 1.000000e+00 : f32
    %252 = vector.broadcast %cst_103 : f32 to vector<16x64xf32>
    %253 = arith.addf %252, %251 : vector<16x64xf32>
    %254 = arith.divf %252, %253 : vector<16x64xf32>
    %255 = vector.extract_strided_slice %242 {offsets = [0, 128], sizes = [16, 64], strides = [1, 1]} : vector<16x256xf32> to vector<16x64xf32>
    %256 = math.tanh %255 : vector<16x64xf32>
    %257 = vector.extract_strided_slice %242 {offsets = [0, 192], sizes = [16, 64], strides = [1, 1]} : vector<16x256xf32> to vector<16x64xf32>
    %258 = arith.negf %257 : vector<16x64xf32>
    %259 = math.exp %258 : vector<16x64xf32>
    %cst_104 = arith.constant 1.000000e+00 : f32
    %260 = vector.broadcast %cst_104 : f32 to vector<16x64xf32>
    %261 = arith.addf %260, %259 : vector<16x64xf32>
    %262 = arith.divf %260, %261 : vector<16x64xf32>
    %263 = arith.mulf %254, %234 : vector<16x64xf32>
    %264 = arith.mulf %248, %256 : vector<16x64xf32>
    %265 = arith.addf %263, %264 : vector<16x64xf32>
    %266 = math.tanh %265 : vector<16x64xf32>
    %267 = arith.mulf %262, %266 : vector<16x64xf32>
    %c96_105 = arith.constant 96 : index
    %c0_106 = arith.constant 0 : index
    %268 = vector.load %arg11[%c96_105, %c0_106] : memref<128x64xf32, #tpu.memory_space<vmem>>, vector<16x64xf32>
    tpu.vector_store %arg11[%c96_105, %c0_106], %267 {strides = array<i32>} : memref<128x64xf32, #tpu.memory_space<vmem>>, vector<16x64xf32>,
    %c112_107 = arith.constant 112 : index
    %c0_108 = arith.constant 0 : index
    %269 = vector.load %arg10[%c112_107, %c0_108] : memref<128x256xf32, #tpu.memory_space<vmem>>, vector<16x256xf32>
    %270 = arith.truncf %267 : vector<16x64xf32> to vector<16x64xbf16>
    %c0_109 = arith.constant 0 : index
    %c0_110 = arith.constant 0 : index
    %271 = vector.load %arg2[%c0_109, %c0_110] : memref<64x256xbf16, #tpu.memory_space<vmem>>, vector<64x256xbf16>
    %cst_111 = arith.constant dense<0.000000e+00> : vector<16x256xf32>
    %272 = tpu.matmul %270, %271, %cst_111 {dimension_numbers = #tpu.dot_dimension_numbers<[1], [0], [0], [1], [0, 0, 1, 1], [], []>} : vector<16x64xbf16>, vector<64x256xbf16>, vector<16x256xf32> -> vector<16x256xf32>
    %273 = arith.addf %269, %272 : vector<16x256xf32>
    %274 = vector.extract_strided_slice %273 {offsets = [0, 0], sizes = [16, 64], strides = [1, 1]} : vector<16x256xf32> to vector<16x64xf32>
    %275 = arith.negf %274 : vector<16x64xf32>
    %276 = math.exp %275 : vector<16x64xf32>
    %cst_112 = arith.constant 1.000000e+00 : f32
    %277 = vector.broadcast %cst_112 : f32 to vector<16x64xf32>
    %278 = arith.addf %277, %276 : vector<16x64xf32>
    %279 = arith.divf %277, %278 : vector<16x64xf32>
    %280 = vector.extract_strided_slice %273 {offsets = [0, 64], sizes = [16, 64], strides = [1, 1]} : vector<16x256xf32> to vector<16x64xf32>
    %281 = arith.negf %280 : vector<16x64xf32>
    %282 = math.exp %281 : vector<16x64xf32>
    %cst_113 = arith.constant 1.000000e+00 : f32
    %283 = vector.broadcast %cst_113 : f32 to vector<16x64xf32>
    %284 = arith.addf %283, %282 : vector<16x64xf32>
    %285 = arith.divf %283, %284 : vector<16x64xf32>
    %286 = vector.extract_strided_slice %273 {offsets = [0, 128], sizes = [16, 64], strides = [1, 1]} : vector<16x256xf32> to vector<16x64xf32>
    %287 = math.tanh %286 : vector<16x64xf32>
    %288 = vector.extract_strided_slice %273 {offsets = [0, 192], sizes = [16, 64], strides = [1, 1]} : vector<16x256xf32> to vector<16x64xf32>
    %289 = arith.negf %288 : vector<16x64xf32>
    %290 = math.exp %289 : vector<16x64xf32>
    %cst_114 = arith.constant 1.000000e+00 : f32
    %291 = vector.broadcast %cst_114 : f32 to vector<16x64xf32>
    %292 = arith.addf %291, %290 : vector<16x64xf32>
    %293 = arith.divf %291, %292 : vector<16x64xf32>
    %294 = arith.mulf %285, %265 : vector<16x64xf32>
    %295 = arith.mulf %279, %287 : vector<16x64xf32>
    %296 = arith.addf %294, %295 : vector<16x64xf32>
    %297 = math.tanh %296 : vector<16x64xf32>
    %298 = arith.mulf %293, %297 : vector<16x64xf32>
    %c112_115 = arith.constant 112 : index
    %c0_116 = arith.constant 0 : index
    %299 = vector.load %arg11[%c112_115, %c0_116] : memref<128x64xf32, #tpu.memory_space<vmem>>, vector<16x64xf32>
    tpu.vector_store %arg11[%c112_115, %c0_116], %298 {strides = array<i32>} : memref<128x64xf32, #tpu.memory_space<vmem>>, vector<16x64xf32>,
    %c0_117 = arith.constant 0 : index
    %c32_118 = arith.constant 32 : index
    %300 = vector.load %arg11[%c0_117, %c32_118] : memref<128x64xf32, #tpu.memory_space<vmem>>, vector<16x32xf32>
    %c112_119 = arith.constant 112 : index
    %c32_120 = arith.constant 32 : index
    %301 = vector.load %arg11[%c112_119, %c32_120] : memref<128x64xf32, #tpu.memory_space<vmem>>, vector<16x32xf32>
    %c0_121 = arith.constant 0 : index
    %c32_122 = arith.constant 32 : index
    %302 = vector.load %arg11[%c0_121, %c32_122] : memref<128x64xf32, #tpu.memory_space<vmem>>, vector<16x32xf32>
    tpu.vector_store %arg11[%c0_121, %c32_122], %301 {strides = array<i32>} : memref<128x64xf32, #tpu.memory_space<vmem>>, vector<16x32xf32>,
    %c112_123 = arith.constant 112 : index
    %c32_124 = arith.constant 32 : index
    %303 = vector.load %arg11[%c112_123, %c32_124] : memref<128x64xf32, #tpu.memory_space<vmem>>, vector<16x32xf32>
    tpu.vector_store %arg11[%c112_123, %c32_124], %300 {strides = array<i32>} : memref<128x64xf32, #tpu.memory_space<vmem>>, vector<16x32xf32>,
    %c16_125 = arith.constant 16 : index
    %c32_126 = arith.constant 32 : index
    %304 = vector.load %arg11[%c16_125, %c32_126] : memref<128x64xf32, #tpu.memory_space<vmem>>, vector<16x32xf32>
    %c96_127 = arith.constant 96 : index
    %c32_128 = arith.constant 32 : index
    %305 = vector.load %arg11[%c96_127, %c32_128] : memref<128x64xf32, #tpu.memory_space<vmem>>, vector<16x32xf32>
    %c16_129 = arith.constant 16 : index
    %c32_130 = arith.constant 32 : index
    %306 = vector.load %arg11[%c16_129, %c32_130] : memref<128x64xf32, #tpu.memory_space<vmem>>, vector<16x32xf32>
    tpu.vector_store %arg11[%c16_129, %c32_130], %305 {strides = array<i32>} : memref<128x64xf32, #tpu.memory_space<vmem>>, vector<16x32xf32>,
    %c96_131 = arith.constant 96 : index
    %c32_132 = arith.constant 32 : index
    %307 = vector.load %arg11[%c96_131, %c32_132] : memref<128x64xf32, #tpu.memory_space<vmem>>, vector<16x32xf32>
    tpu.vector_store %arg11[%c96_131, %c32_132], %304 {strides = array<i32>} : memref<128x64xf32, #tpu.memory_space<vmem>>, vector<16x32xf32>,
    %c32_133 = arith.constant 32 : index
    %c32_134 = arith.constant 32 : index
    %308 = vector.load %arg11[%c32_133, %c32_134] : memref<128x64xf32, #tpu.memory_space<vmem>>, vector<16x32xf32>
    %c80_135 = arith.constant 80 : index
    %c32_136 = arith.constant 32 : index
    %309 = vector.load %arg11[%c80_135, %c32_136] : memref<128x64xf32, #tpu.memory_space<vmem>>, vector<16x32xf32>
    %c32_137 = arith.constant 32 : index
    %c32_138 = arith.constant 32 : index
    %310 = vector.load %arg11[%c32_137, %c32_138] : memref<128x64xf32, #tpu.memory_space<vmem>>, vector<16x32xf32>
    tpu.vector_store %arg11[%c32_137, %c32_138], %309 {strides = array<i32>} : memref<128x64xf32, #tpu.memory_space<vmem>>, vector<16x32xf32>,
    %c80_139 = arith.constant 80 : index
    %c32_140 = arith.constant 32 : index
    %311 = vector.load %arg11[%c80_139, %c32_140] : memref<128x64xf32, #tpu.memory_space<vmem>>, vector<16x32xf32>
    tpu.vector_store %arg11[%c80_139, %c32_140], %308 {strides = array<i32>} : memref<128x64xf32, #tpu.memory_space<vmem>>, vector<16x32xf32>,
    %c48_141 = arith.constant 48 : index
    %c32_142 = arith.constant 32 : index
    %312 = vector.load %arg11[%c48_141, %c32_142] : memref<128x64xf32, #tpu.memory_space<vmem>>, vector<16x32xf32>
    %c64_143 = arith.constant 64 : index
    %c32_144 = arith.constant 32 : index
    %313 = vector.load %arg11[%c64_143, %c32_144] : memref<128x64xf32, #tpu.memory_space<vmem>>, vector<16x32xf32>
    %c48_145 = arith.constant 48 : index
    %c32_146 = arith.constant 32 : index
    %314 = vector.load %arg11[%c48_145, %c32_146] : memref<128x64xf32, #tpu.memory_space<vmem>>, vector<16x32xf32>
    tpu.vector_store %arg11[%c48_145, %c32_146], %313 {strides = array<i32>} : memref<128x64xf32, #tpu.memory_space<vmem>>, vector<16x32xf32>,
    %c64_147 = arith.constant 64 : index
    %c32_148 = arith.constant 32 : index
    %315 = vector.load %arg11[%c64_147, %c32_148] : memref<128x64xf32, #tpu.memory_space<vmem>>, vector<16x32xf32>
    tpu.vector_store %arg11[%c64_147, %c32_148], %312 {strides = array<i32>} : memref<128x64xf32, #tpu.memory_space<vmem>>, vector<16x32xf32>,
    %c0_149 = arith.constant 0 : index
    %c0_150 = arith.constant 0 : index
    %316 = vector.load %arg11[%c0_149, %c0_150] : memref<128x64xf32, #tpu.memory_space<vmem>>, vector<128x64xf32>
    %317 = arith.truncf %316 : vector<128x64xf32> to vector<128x64xbf16>
    %c0_151 = arith.constant 0 : index
    %c0_152 = arith.constant 0 : index
    %318 = vector.load %arg4[%c0_151, %c0_152] : memref<64x256xbf16, #tpu.memory_space<vmem>>, vector<64x256xbf16>
    %cst_153 = arith.constant dense<0.000000e+00> : vector<128x256xf32>
    %319 = tpu.matmul %317, %318, %cst_153 {dimension_numbers = #tpu.dot_dimension_numbers<[1], [0], [0], [1], [0, 0, 1, 1], [], []>} : vector<128x64xbf16>, vector<64x256xbf16>, vector<128x256xf32> -> vector<128x256xf32>
    %c0_154 = arith.constant 0 : index
    %c0_155 = arith.constant 0 : index
    %320 = vector.load %arg6[%c0_154, %c0_155] : memref<1x256xf32, #tpu.memory_space<vmem>>, vector<1x256xf32>
    %321 = vector.broadcast %320 : vector<1x256xf32> to vector<128x256xf32>
    %322 = arith.addf %319, %321 : vector<128x256xf32>
    %c0_156 = arith.constant 0 : index
    %c0_157 = arith.constant 0 : index
    %323 = vector.load %arg10[%c0_156, %c0_157] : memref<128x256xf32, #tpu.memory_space<vmem>>, vector<128x256xf32>
    tpu.vector_store %arg10[%c0_156, %c0_157], %322 {strides = array<i32>} : memref<128x256xf32, #tpu.memory_space<vmem>>, vector<128x256xf32>,
    %c0_158 = arith.constant 0 : index
    %c0_159 = arith.constant 0 : index
    %324 = vector.load %arg10[%c0_158, %c0_159] : memref<128x256xf32, #tpu.memory_space<vmem>>, vector<16x256xf32>
    %c112_160 = arith.constant 112 : index
    %c0_161 = arith.constant 0 : index
    %325 = vector.load %arg10[%c112_160, %c0_161] : memref<128x256xf32, #tpu.memory_space<vmem>>, vector<16x256xf32>
    %326 = arith.select %18, %324, %325 : vector<16x256xi1>, vector<16x256xf32>
    %c0_162 = arith.constant 0 : index
    %c0_163 = arith.constant 0 : index
    %327 = vector.load %arg10[%c0_162, %c0_163] : memref<128x256xf32, #tpu.memory_space<vmem>>, vector<16x256xf32>
    tpu.vector_store %arg10[%c0_162, %c0_163], %326 {strides = array<i32>} : memref<128x256xf32, #tpu.memory_space<vmem>>, vector<16x256xf32>,
    %328 = arith.select %18, %325, %324 : vector<16x256xi1>, vector<16x256xf32>
    %c112_164 = arith.constant 112 : index
    %c0_165 = arith.constant 0 : index
    %329 = vector.load %arg10[%c112_164, %c0_165] : memref<128x256xf32, #tpu.memory_space<vmem>>, vector<16x256xf32>
    tpu.vector_store %arg10[%c112_164, %c0_165], %328 {strides = array<i32>} : memref<128x256xf32, #tpu.memory_space<vmem>>, vector<16x256xf32>,
    %c16_166 = arith.constant 16 : index
    %c0_167 = arith.constant 0 : index
    %330 = vector.load %arg10[%c16_166, %c0_167] : memref<128x256xf32, #tpu.memory_space<vmem>>, vector<16x256xf32>
    %c96_168 = arith.constant 96 : index
    %c0_169 = arith.constant 0 : index
    %331 = vector.load %arg10[%c96_168, %c0_169] : memref<128x256xf32, #tpu.memory_space<vmem>>, vector<16x256xf32>
    %332 = arith.select %18, %330, %331 : vector<16x256xi1>, vector<16x256xf32>
    %c16_170 = arith.constant 16 : index
    %c0_171 = arith.constant 0 : index
    %333 = vector.load %arg10[%c16_170, %c0_171] : memref<128x256xf32, #tpu.memory_space<vmem>>, vector<16x256xf32>
    tpu.vector_store %arg10[%c16_170, %c0_171], %332 {strides = array<i32>} : memref<128x256xf32, #tpu.memory_space<vmem>>, vector<16x256xf32>,
    %334 = arith.select %18, %331, %330 : vector<16x256xi1>, vector<16x256xf32>
    %c96_172 = arith.constant 96 : index
    %c0_173 = arith.constant 0 : index
    %335 = vector.load %arg10[%c96_172, %c0_173] : memref<128x256xf32, #tpu.memory_space<vmem>>, vector<16x256xf32>
    tpu.vector_store %arg10[%c96_172, %c0_173], %334 {strides = array<i32>} : memref<128x256xf32, #tpu.memory_space<vmem>>, vector<16x256xf32>,
    %c32_174 = arith.constant 32 : index
    %c0_175 = arith.constant 0 : index
    %336 = vector.load %arg10[%c32_174, %c0_175] : memref<128x256xf32, #tpu.memory_space<vmem>>, vector<16x256xf32>
    %c80_176 = arith.constant 80 : index
    %c0_177 = arith.constant 0 : index
    %337 = vector.load %arg10[%c80_176, %c0_177] : memref<128x256xf32, #tpu.memory_space<vmem>>, vector<16x256xf32>
    %338 = arith.select %18, %336, %337 : vector<16x256xi1>, vector<16x256xf32>
    %c32_178 = arith.constant 32 : index
    %c0_179 = arith.constant 0 : index
    %339 = vector.load %arg10[%c32_178, %c0_179] : memref<128x256xf32, #tpu.memory_space<vmem>>, vector<16x256xf32>
    tpu.vector_store %arg10[%c32_178, %c0_179], %338 {strides = array<i32>} : memref<128x256xf32, #tpu.memory_space<vmem>>, vector<16x256xf32>,
    %340 = arith.select %18, %337, %336 : vector<16x256xi1>, vector<16x256xf32>
    %c80_180 = arith.constant 80 : index
    %c0_181 = arith.constant 0 : index
    %341 = vector.load %arg10[%c80_180, %c0_181] : memref<128x256xf32, #tpu.memory_space<vmem>>, vector<16x256xf32>
    tpu.vector_store %arg10[%c80_180, %c0_181], %340 {strides = array<i32>} : memref<128x256xf32, #tpu.memory_space<vmem>>, vector<16x256xf32>,
    %c48_182 = arith.constant 48 : index
    %c0_183 = arith.constant 0 : index
    %342 = vector.load %arg10[%c48_182, %c0_183] : memref<128x256xf32, #tpu.memory_space<vmem>>, vector<16x256xf32>
    %c64_184 = arith.constant 64 : index
    %c0_185 = arith.constant 0 : index
    %343 = vector.load %arg10[%c64_184, %c0_185] : memref<128x256xf32, #tpu.memory_space<vmem>>, vector<16x256xf32>
    %344 = arith.select %18, %342, %343 : vector<16x256xi1>, vector<16x256xf32>
    %c48_186 = arith.constant 48 : index
    %c0_187 = arith.constant 0 : index
    %345 = vector.load %arg10[%c48_186, %c0_187] : memref<128x256xf32, #tpu.memory_space<vmem>>, vector<16x256xf32>
    tpu.vector_store %arg10[%c48_186, %c0_187], %344 {strides = array<i32>} : memref<128x256xf32, #tpu.memory_space<vmem>>, vector<16x256xf32>,
    %346 = arith.select %18, %343, %342 : vector<16x256xi1>, vector<16x256xf32>
    %c64_188 = arith.constant 64 : index
    %c0_189 = arith.constant 0 : index
    %347 = vector.load %arg10[%c64_188, %c0_189] : memref<128x256xf32, #tpu.memory_space<vmem>>, vector<16x256xf32>
    tpu.vector_store %arg10[%c64_188, %c0_189], %346 {strides = array<i32>} : memref<128x256xf32, #tpu.memory_space<vmem>>, vector<16x256xf32>,
    %cst_190 = arith.constant 0.000000e+00 : f32
    %348 = vector.broadcast %cst_190 : f32 to vector<16x64xf32>
    %cst_191 = arith.constant 0.000000e+00 : f32
    %349 = vector.broadcast %cst_191 : f32 to vector<16x64xf32>
    %c0_192 = arith.constant 0 : index
    %c0_193 = arith.constant 0 : index
    %350 = vector.load %arg10[%c0_192, %c0_193] : memref<128x256xf32, #tpu.memory_space<vmem>>, vector<16x256xf32>
    %351 = arith.truncf %348 : vector<16x64xf32> to vector<16x64xbf16>
    %c0_194 = arith.constant 0 : index
    %c0_195 = arith.constant 0 : index
    %352 = vector.load %arg5[%c0_194, %c0_195] : memref<64x256xbf16, #tpu.memory_space<vmem>>, vector<64x256xbf16>
    %cst_196 = arith.constant dense<0.000000e+00> : vector<16x256xf32>
    %353 = tpu.matmul %351, %352, %cst_196 {dimension_numbers = #tpu.dot_dimension_numbers<[1], [0], [0], [1], [0, 0, 1, 1], [], []>} : vector<16x64xbf16>, vector<64x256xbf16>, vector<16x256xf32> -> vector<16x256xf32>
    %354 = arith.addf %350, %353 : vector<16x256xf32>
    %355 = vector.extract_strided_slice %354 {offsets = [0, 0], sizes = [16, 64], strides = [1, 1]} : vector<16x256xf32> to vector<16x64xf32>
    %356 = arith.negf %355 : vector<16x64xf32>
    %357 = math.exp %356 : vector<16x64xf32>
    %cst_197 = arith.constant 1.000000e+00 : f32
    %358 = vector.broadcast %cst_197 : f32 to vector<16x64xf32>
    %359 = arith.addf %358, %357 : vector<16x64xf32>
    %360 = arith.divf %358, %359 : vector<16x64xf32>
    %361 = vector.extract_strided_slice %354 {offsets = [0, 64], sizes = [16, 64], strides = [1, 1]} : vector<16x256xf32> to vector<16x64xf32>
    %362 = arith.negf %361 : vector<16x64xf32>
    %363 = math.exp %362 : vector<16x64xf32>
    %cst_198 = arith.constant 1.000000e+00 : f32
    %364 = vector.broadcast %cst_198 : f32 to vector<16x64xf32>
    %365 = arith.addf %364, %363 : vector<16x64xf32>
    %366 = arith.divf %364, %365 : vector<16x64xf32>
    %367 = vector.extract_strided_slice %354 {offsets = [0, 128], sizes = [16, 64], strides = [1, 1]} : vector<16x256xf32> to vector<16x64xf32>
    %368 = math.tanh %367 : vector<16x64xf32>
    %369 = vector.extract_strided_slice %354 {offsets = [0, 192], sizes = [16, 64], strides = [1, 1]} : vector<16x256xf32> to vector<16x64xf32>
    %370 = arith.negf %369 : vector<16x64xf32>
    %371 = math.exp %370 : vector<16x64xf32>
    %cst_199 = arith.constant 1.000000e+00 : f32
    %372 = vector.broadcast %cst_199 : f32 to vector<16x64xf32>
    %373 = arith.addf %372, %371 : vector<16x64xf32>
    %374 = arith.divf %372, %373 : vector<16x64xf32>
    %375 = arith.mulf %366, %349 : vector<16x64xf32>
    %376 = arith.mulf %360, %368 : vector<16x64xf32>
    %377 = arith.addf %375, %376 : vector<16x64xf32>
    %378 = math.tanh %377 : vector<16x64xf32>
    %379 = arith.mulf %374, %378 : vector<16x64xf32>
    %c16_200 = arith.constant 16 : index
    %c0_201 = arith.constant 0 : index
    %380 = vector.load %arg10[%c16_200, %c0_201] : memref<128x256xf32, #tpu.memory_space<vmem>>, vector<16x256xf32>
    %381 = arith.truncf %379 : vector<16x64xf32> to vector<16x64xbf16>
    %c0_202 = arith.constant 0 : index
    %c0_203 = arith.constant 0 : index
    %382 = vector.load %arg5[%c0_202, %c0_203] : memref<64x256xbf16, #tpu.memory_space<vmem>>, vector<64x256xbf16>
    %cst_204 = arith.constant dense<0.000000e+00> : vector<16x256xf32>
    %383 = tpu.matmul %381, %382, %cst_204 {dimension_numbers = #tpu.dot_dimension_numbers<[1], [0], [0], [1], [0, 0, 1, 1], [], []>} : vector<16x64xbf16>, vector<64x256xbf16>, vector<16x256xf32> -> vector<16x256xf32>
    %384 = arith.addf %380, %383 : vector<16x256xf32>
    %385 = vector.extract_strided_slice %384 {offsets = [0, 0], sizes = [16, 64], strides = [1, 1]} : vector<16x256xf32> to vector<16x64xf32>
    %386 = arith.negf %385 : vector<16x64xf32>
    %387 = math.exp %386 : vector<16x64xf32>
    %cst_205 = arith.constant 1.000000e+00 : f32
    %388 = vector.broadcast %cst_205 : f32 to vector<16x64xf32>
    %389 = arith.addf %388, %387 : vector<16x64xf32>
    %390 = arith.divf %388, %389 : vector<16x64xf32>
    %391 = vector.extract_strided_slice %384 {offsets = [0, 64], sizes = [16, 64], strides = [1, 1]} : vector<16x256xf32> to vector<16x64xf32>
    %392 = arith.negf %391 : vector<16x64xf32>
    %393 = math.exp %392 : vector<16x64xf32>
    %cst_206 = arith.constant 1.000000e+00 : f32
    %394 = vector.broadcast %cst_206 : f32 to vector<16x64xf32>
    %395 = arith.addf %394, %393 : vector<16x64xf32>
    %396 = arith.divf %394, %395 : vector<16x64xf32>
    %397 = vector.extract_strided_slice %384 {offsets = [0, 128], sizes = [16, 64], strides = [1, 1]} : vector<16x256xf32> to vector<16x64xf32>
    %398 = math.tanh %397 : vector<16x64xf32>
    %399 = vector.extract_strided_slice %384 {offsets = [0, 192], sizes = [16, 64], strides = [1, 1]} : vector<16x256xf32> to vector<16x64xf32>
    %400 = arith.negf %399 : vector<16x64xf32>
    %401 = math.exp %400 : vector<16x64xf32>
    %cst_207 = arith.constant 1.000000e+00 : f32
    %402 = vector.broadcast %cst_207 : f32 to vector<16x64xf32>
    %403 = arith.addf %402, %401 : vector<16x64xf32>
    %404 = arith.divf %402, %403 : vector<16x64xf32>
    %405 = arith.mulf %396, %377 : vector<16x64xf32>
    %406 = arith.mulf %390, %398 : vector<16x64xf32>
    %407 = arith.addf %405, %406 : vector<16x64xf32>
    %408 = math.tanh %407 : vector<16x64xf32>
    %409 = arith.mulf %404, %408 : vector<16x64xf32>
    %c32_208 = arith.constant 32 : index
    %c0_209 = arith.constant 0 : index
    %410 = vector.load %arg10[%c32_208, %c0_209] : memref<128x256xf32, #tpu.memory_space<vmem>>, vector<16x256xf32>
    %411 = arith.truncf %409 : vector<16x64xf32> to vector<16x64xbf16>
    %c0_210 = arith.constant 0 : index
    %c0_211 = arith.constant 0 : index
    %412 = vector.load %arg5[%c0_210, %c0_211] : memref<64x256xbf16, #tpu.memory_space<vmem>>, vector<64x256xbf16>
    %cst_212 = arith.constant dense<0.000000e+00> : vector<16x256xf32>
    %413 = tpu.matmul %411, %412, %cst_212 {dimension_numbers = #tpu.dot_dimension_numbers<[1], [0], [0], [1], [0, 0, 1, 1], [], []>} : vector<16x64xbf16>, vector<64x256xbf16>, vector<16x256xf32> -> vector<16x256xf32>
    %414 = arith.addf %410, %413 : vector<16x256xf32>
    %415 = vector.extract_strided_slice %414 {offsets = [0, 0], sizes = [16, 64], strides = [1, 1]} : vector<16x256xf32> to vector<16x64xf32>
    %416 = arith.negf %415 : vector<16x64xf32>
    %417 = math.exp %416 : vector<16x64xf32>
    %cst_213 = arith.constant 1.000000e+00 : f32
    %418 = vector.broadcast %cst_213 : f32 to vector<16x64xf32>
    %419 = arith.addf %418, %417 : vector<16x64xf32>
    %420 = arith.divf %418, %419 : vector<16x64xf32>
    %421 = vector.extract_strided_slice %414 {offsets = [0, 64], sizes = [16, 64], strides = [1, 1]} : vector<16x256xf32> to vector<16x64xf32>
    %422 = arith.negf %421 : vector<16x64xf32>
    %423 = math.exp %422 : vector<16x64xf32>
    %cst_214 = arith.constant 1.000000e+00 : f32
    %424 = vector.broadcast %cst_214 : f32 to vector<16x64xf32>
    %425 = arith.addf %424, %423 : vector<16x64xf32>
    %426 = arith.divf %424, %425 : vector<16x64xf32>
    %427 = vector.extract_strided_slice %414 {offsets = [0, 128], sizes = [16, 64], strides = [1, 1]} : vector<16x256xf32> to vector<16x64xf32>
    %428 = math.tanh %427 : vector<16x64xf32>
    %429 = vector.extract_strided_slice %414 {offsets = [0, 192], sizes = [16, 64], strides = [1, 1]} : vector<16x256xf32> to vector<16x64xf32>
    %430 = arith.negf %429 : vector<16x64xf32>
    %431 = math.exp %430 : vector<16x64xf32>
    %cst_215 = arith.constant 1.000000e+00 : f32
    %432 = vector.broadcast %cst_215 : f32 to vector<16x64xf32>
    %433 = arith.addf %432, %431 : vector<16x64xf32>
    %434 = arith.divf %432, %433 : vector<16x64xf32>
    %435 = arith.mulf %426, %407 : vector<16x64xf32>
    %436 = arith.mulf %420, %428 : vector<16x64xf32>
    %437 = arith.addf %435, %436 : vector<16x64xf32>
    %438 = math.tanh %437 : vector<16x64xf32>
    %439 = arith.mulf %434, %438 : vector<16x64xf32>
    %c48_216 = arith.constant 48 : index
    %c0_217 = arith.constant 0 : index
    %440 = vector.load %arg10[%c48_216, %c0_217] : memref<128x256xf32, #tpu.memory_space<vmem>>, vector<16x256xf32>
    %441 = arith.truncf %439 : vector<16x64xf32> to vector<16x64xbf16>
    %c0_218 = arith.constant 0 : index
    %c0_219 = arith.constant 0 : index
    %442 = vector.load %arg5[%c0_218, %c0_219] : memref<64x256xbf16, #tpu.memory_space<vmem>>, vector<64x256xbf16>
    %cst_220 = arith.constant dense<0.000000e+00> : vector<16x256xf32>
    %443 = tpu.matmul %441, %442, %cst_220 {dimension_numbers = #tpu.dot_dimension_numbers<[1], [0], [0], [1], [0, 0, 1, 1], [], []>} : vector<16x64xbf16>, vector<64x256xbf16>, vector<16x256xf32> -> vector<16x256xf32>
    %444 = arith.addf %440, %443 : vector<16x256xf32>
    %445 = vector.extract_strided_slice %444 {offsets = [0, 0], sizes = [16, 64], strides = [1, 1]} : vector<16x256xf32> to vector<16x64xf32>
    %446 = arith.negf %445 : vector<16x64xf32>
    %447 = math.exp %446 : vector<16x64xf32>
    %cst_221 = arith.constant 1.000000e+00 : f32
    %448 = vector.broadcast %cst_221 : f32 to vector<16x64xf32>
    %449 = arith.addf %448, %447 : vector<16x64xf32>
    %450 = arith.divf %448, %449 : vector<16x64xf32>
    %451 = vector.extract_strided_slice %444 {offsets = [0, 64], sizes = [16, 64], strides = [1, 1]} : vector<16x256xf32> to vector<16x64xf32>
    %452 = arith.negf %451 : vector<16x64xf32>
    %453 = math.exp %452 : vector<16x64xf32>
    %cst_222 = arith.constant 1.000000e+00 : f32
    %454 = vector.broadcast %cst_222 : f32 to vector<16x64xf32>
    %455 = arith.addf %454, %453 : vector<16x64xf32>
    %456 = arith.divf %454, %455 : vector<16x64xf32>
    %457 = vector.extract_strided_slice %444 {offsets = [0, 128], sizes = [16, 64], strides = [1, 1]} : vector<16x256xf32> to vector<16x64xf32>
    %458 = math.tanh %457 : vector<16x64xf32>
    %459 = vector.extract_strided_slice %444 {offsets = [0, 192], sizes = [16, 64], strides = [1, 1]} : vector<16x256xf32> to vector<16x64xf32>
    %460 = arith.negf %459 : vector<16x64xf32>
    %461 = math.exp %460 : vector<16x64xf32>
    %cst_223 = arith.constant 1.000000e+00 : f32
    %462 = vector.broadcast %cst_223 : f32 to vector<16x64xf32>
    %463 = arith.addf %462, %461 : vector<16x64xf32>
    %464 = arith.divf %462, %463 : vector<16x64xf32>
    %465 = arith.mulf %456, %437 : vector<16x64xf32>
    %466 = arith.mulf %450, %458 : vector<16x64xf32>
    %467 = arith.addf %465, %466 : vector<16x64xf32>
    %468 = math.tanh %467 : vector<16x64xf32>
    %469 = arith.mulf %464, %468 : vector<16x64xf32>
    %c64_224 = arith.constant 64 : index
    %c0_225 = arith.constant 0 : index
    %470 = vector.load %arg10[%c64_224, %c0_225] : memref<128x256xf32, #tpu.memory_space<vmem>>, vector<16x256xf32>
    %471 = arith.truncf %469 : vector<16x64xf32> to vector<16x64xbf16>
    %c0_226 = arith.constant 0 : index
    %c0_227 = arith.constant 0 : index
    %472 = vector.load %arg5[%c0_226, %c0_227] : memref<64x256xbf16, #tpu.memory_space<vmem>>, vector<64x256xbf16>
    %cst_228 = arith.constant dense<0.000000e+00> : vector<16x256xf32>
    %473 = tpu.matmul %471, %472, %cst_228 {dimension_numbers = #tpu.dot_dimension_numbers<[1], [0], [0], [1], [0, 0, 1, 1], [], []>} : vector<16x64xbf16>, vector<64x256xbf16>, vector<16x256xf32> -> vector<16x256xf32>
    %474 = arith.addf %470, %473 : vector<16x256xf32>
    %475 = vector.extract_strided_slice %474 {offsets = [0, 0], sizes = [16, 64], strides = [1, 1]} : vector<16x256xf32> to vector<16x64xf32>
    %476 = arith.negf %475 : vector<16x64xf32>
    %477 = math.exp %476 : vector<16x64xf32>
    %cst_229 = arith.constant 1.000000e+00 : f32
    %478 = vector.broadcast %cst_229 : f32 to vector<16x64xf32>
    %479 = arith.addf %478, %477 : vector<16x64xf32>
    %480 = arith.divf %478, %479 : vector<16x64xf32>
    %481 = vector.extract_strided_slice %474 {offsets = [0, 64], sizes = [16, 64], strides = [1, 1]} : vector<16x256xf32> to vector<16x64xf32>
    %482 = arith.negf %481 : vector<16x64xf32>
    %483 = math.exp %482 : vector<16x64xf32>
    %cst_230 = arith.constant 1.000000e+00 : f32
    %484 = vector.broadcast %cst_230 : f32 to vector<16x64xf32>
    %485 = arith.addf %484, %483 : vector<16x64xf32>
    %486 = arith.divf %484, %485 : vector<16x64xf32>
    %487 = vector.extract_strided_slice %474 {offsets = [0, 128], sizes = [16, 64], strides = [1, 1]} : vector<16x256xf32> to vector<16x64xf32>
    %488 = math.tanh %487 : vector<16x64xf32>
    %489 = vector.extract_strided_slice %474 {offsets = [0, 192], sizes = [16, 64], strides = [1, 1]} : vector<16x256xf32> to vector<16x64xf32>
    %490 = arith.negf %489 : vector<16x64xf32>
    %491 = math.exp %490 : vector<16x64xf32>
    %cst_231 = arith.constant 1.000000e+00 : f32
    %492 = vector.broadcast %cst_231 : f32 to vector<16x64xf32>
    %493 = arith.addf %492, %491 : vector<16x64xf32>
    %494 = arith.divf %492, %493 : vector<16x64xf32>
    %495 = arith.mulf %486, %467 : vector<16x64xf32>
    %496 = arith.mulf %480, %488 : vector<16x64xf32>
    %497 = arith.addf %495, %496 : vector<16x64xf32>
    %498 = math.tanh %497 : vector<16x64xf32>
    %499 = arith.mulf %494, %498 : vector<16x64xf32>
    %c80_232 = arith.constant 80 : index
    %c0_233 = arith.constant 0 : index
    %500 = vector.load %arg10[%c80_232, %c0_233] : memref<128x256xf32, #tpu.memory_space<vmem>>, vector<16x256xf32>
    %501 = arith.truncf %499 : vector<16x64xf32> to vector<16x64xbf16>
    %c0_234 = arith.constant 0 : index
    %c0_235 = arith.constant 0 : index
    %502 = vector.load %arg5[%c0_234, %c0_235] : memref<64x256xbf16, #tpu.memory_space<vmem>>, vector<64x256xbf16>
    %cst_236 = arith.constant dense<0.000000e+00> : vector<16x256xf32>
    %503 = tpu.matmul %501, %502, %cst_236 {dimension_numbers = #tpu.dot_dimension_numbers<[1], [0], [0], [1], [0, 0, 1, 1], [], []>} : vector<16x64xbf16>, vector<64x256xbf16>, vector<16x256xf32> -> vector<16x256xf32>
    %504 = arith.addf %500, %503 : vector<16x256xf32>
    %505 = vector.extract_strided_slice %504 {offsets = [0, 0], sizes = [16, 64], strides = [1, 1]} : vector<16x256xf32> to vector<16x64xf32>
    %506 = arith.negf %505 : vector<16x64xf32>
    %507 = math.exp %506 : vector<16x64xf32>
    %cst_237 = arith.constant 1.000000e+00 : f32
    %508 = vector.broadcast %cst_237 : f32 to vector<16x64xf32>
    %509 = arith.addf %508, %507 : vector<16x64xf32>
    %510 = arith.divf %508, %509 : vector<16x64xf32>
    %511 = vector.extract_strided_slice %504 {offsets = [0, 64], sizes = [16, 64], strides = [1, 1]} : vector<16x256xf32> to vector<16x64xf32>
    %512 = arith.negf %511 : vector<16x64xf32>
    %513 = math.exp %512 : vector<16x64xf32>
    %cst_238 = arith.constant 1.000000e+00 : f32
    %514 = vector.broadcast %cst_238 : f32 to vector<16x64xf32>
    %515 = arith.addf %514, %513 : vector<16x64xf32>
    %516 = arith.divf %514, %515 : vector<16x64xf32>
    %517 = vector.extract_strided_slice %504 {offsets = [0, 128], sizes = [16, 64], strides = [1, 1]} : vector<16x256xf32> to vector<16x64xf32>
    %518 = math.tanh %517 : vector<16x64xf32>
    %519 = vector.extract_strided_slice %504 {offsets = [0, 192], sizes = [16, 64], strides = [1, 1]} : vector<16x256xf32> to vector<16x64xf32>
    %520 = arith.negf %519 : vector<16x64xf32>
    %521 = math.exp %520 : vector<16x64xf32>
    %cst_239 = arith.constant 1.000000e+00 : f32
    %522 = vector.broadcast %cst_239 : f32 to vector<16x64xf32>
    %523 = arith.addf %522, %521 : vector<16x64xf32>
    %524 = arith.divf %522, %523 : vector<16x64xf32>
    %525 = arith.mulf %516, %497 : vector<16x64xf32>
    %526 = arith.mulf %510, %518 : vector<16x64xf32>
    %527 = arith.addf %525, %526 : vector<16x64xf32>
    %528 = math.tanh %527 : vector<16x64xf32>
    %529 = arith.mulf %524, %528 : vector<16x64xf32>
    %c96_240 = arith.constant 96 : index
    %c0_241 = arith.constant 0 : index
    %530 = vector.load %arg10[%c96_240, %c0_241] : memref<128x256xf32, #tpu.memory_space<vmem>>, vector<16x256xf32>
    %531 = arith.truncf %529 : vector<16x64xf32> to vector<16x64xbf16>
    %c0_242 = arith.constant 0 : index
    %c0_243 = arith.constant 0 : index
    %532 = vector.load %arg5[%c0_242, %c0_243] : memref<64x256xbf16, #tpu.memory_space<vmem>>, vector<64x256xbf16>
    %cst_244 = arith.constant dense<0.000000e+00> : vector<16x256xf32>
    %533 = tpu.matmul %531, %532, %cst_244 {dimension_numbers = #tpu.dot_dimension_numbers<[1], [0], [0], [1], [0, 0, 1, 1], [], []>} : vector<16x64xbf16>, vector<64x256xbf16>, vector<16x256xf32> -> vector<16x256xf32>
    %534 = arith.addf %530, %533 : vector<16x256xf32>
    %535 = vector.extract_strided_slice %534 {offsets = [0, 0], sizes = [16, 64], strides = [1, 1]} : vector<16x256xf32> to vector<16x64xf32>
    %536 = arith.negf %535 : vector<16x64xf32>
    %537 = math.exp %536 : vector<16x64xf32>
    %cst_245 = arith.constant 1.000000e+00 : f32
    %538 = vector.broadcast %cst_245 : f32 to vector<16x64xf32>
    %539 = arith.addf %538, %537 : vector<16x64xf32>
    %540 = arith.divf %538, %539 : vector<16x64xf32>
    %541 = vector.extract_strided_slice %534 {offsets = [0, 64], sizes = [16, 64], strides = [1, 1]} : vector<16x256xf32> to vector<16x64xf32>
    %542 = arith.negf %541 : vector<16x64xf32>
    %543 = math.exp %542 : vector<16x64xf32>
    %cst_246 = arith.constant 1.000000e+00 : f32
    %544 = vector.broadcast %cst_246 : f32 to vector<16x64xf32>
    %545 = arith.addf %544, %543 : vector<16x64xf32>
    %546 = arith.divf %544, %545 : vector<16x64xf32>
    %547 = vector.extract_strided_slice %534 {offsets = [0, 128], sizes = [16, 64], strides = [1, 1]} : vector<16x256xf32> to vector<16x64xf32>
    %548 = math.tanh %547 : vector<16x64xf32>
    %549 = vector.extract_strided_slice %534 {offsets = [0, 192], sizes = [16, 64], strides = [1, 1]} : vector<16x256xf32> to vector<16x64xf32>
    %550 = arith.negf %549 : vector<16x64xf32>
    %551 = math.exp %550 : vector<16x64xf32>
    %cst_247 = arith.constant 1.000000e+00 : f32
    %552 = vector.broadcast %cst_247 : f32 to vector<16x64xf32>
    %553 = arith.addf %552, %551 : vector<16x64xf32>
    %554 = arith.divf %552, %553 : vector<16x64xf32>
    %555 = arith.mulf %546, %527 : vector<16x64xf32>
    %556 = arith.mulf %540, %548 : vector<16x64xf32>
    %557 = arith.addf %555, %556 : vector<16x64xf32>
    %558 = math.tanh %557 : vector<16x64xf32>
    %559 = arith.mulf %554, %558 : vector<16x64xf32>
    %c112_248 = arith.constant 112 : index
    %c0_249 = arith.constant 0 : index
    %560 = vector.load %arg10[%c112_248, %c0_249] : memref<128x256xf32, #tpu.memory_space<vmem>>, vector<16x256xf32>
    %561 = arith.truncf %559 : vector<16x64xf32> to vector<16x64xbf16>
    %c0_250 = arith.constant 0 : index
    %c0_251 = arith.constant 0 : index
    %562 = vector.load %arg5[%c0_250, %c0_251] : memref<64x256xbf16, #tpu.memory_space<vmem>>, vector<64x256xbf16>
    %cst_252 = arith.constant dense<0.000000e+00> : vector<16x256xf32>
    %563 = tpu.matmul %561, %562, %cst_252 {dimension_numbers = #tpu.dot_dimension_numbers<[1], [0], [0], [1], [0, 0, 1, 1], [], []>} : vector<16x64xbf16>, vector<64x256xbf16>, vector<16x256xf32> -> vector<16x256xf32>
    %564 = arith.addf %560, %563 : vector<16x256xf32>
    %565 = vector.extract_strided_slice %564 {offsets = [0, 0], sizes = [16, 64], strides = [1, 1]} : vector<16x256xf32> to vector<16x64xf32>
    %566 = arith.negf %565 : vector<16x64xf32>
    %567 = math.exp %566 : vector<16x64xf32>
    %cst_253 = arith.constant 1.000000e+00 : f32
    %568 = vector.broadcast %cst_253 : f32 to vector<16x64xf32>
    %569 = arith.addf %568, %567 : vector<16x64xf32>
    %570 = arith.divf %568, %569 : vector<16x64xf32>
    %571 = vector.extract_strided_slice %564 {offsets = [0, 64], sizes = [16, 64], strides = [1, 1]} : vector<16x256xf32> to vector<16x64xf32>
    %572 = arith.negf %571 : vector<16x64xf32>
    %573 = math.exp %572 : vector<16x64xf32>
    %cst_254 = arith.constant 1.000000e+00 : f32
    %574 = vector.broadcast %cst_254 : f32 to vector<16x64xf32>
    %575 = arith.addf %574, %573 : vector<16x64xf32>
    %576 = arith.divf %574, %575 : vector<16x64xf32>
    %577 = vector.extract_strided_slice %564 {offsets = [0, 128], sizes = [16, 64], strides = [1, 1]} : vector<16x256xf32> to vector<16x64xf32>
    %578 = math.tanh %577 : vector<16x64xf32>
    %579 = vector.extract_strided_slice %564 {offsets = [0, 192], sizes = [16, 64], strides = [1, 1]} : vector<16x256xf32> to vector<16x64xf32>
    %580 = arith.negf %579 : vector<16x64xf32>
    %581 = math.exp %580 : vector<16x64xf32>
    %cst_255 = arith.constant 1.000000e+00 : f32
    %582 = vector.broadcast %cst_255 : f32 to vector<16x64xf32>
    %583 = arith.addf %582, %581 : vector<16x64xf32>
    %584 = arith.divf %582, %583 : vector<16x64xf32>
    %585 = arith.mulf %576, %557 : vector<16x64xf32>
    %586 = arith.mulf %570, %578 : vector<16x64xf32>
    %587 = arith.addf %585, %586 : vector<16x64xf32>
    %588 = math.tanh %587 : vector<16x64xf32>
    %589 = arith.mulf %584, %588 : vector<16x64xf32>
    %590 = arith.truncf %379 : vector<16x64xf32> to vector<16x64xbf16>
    %c0_256 = arith.constant 0 : index
    %c0_257 = arith.constant 0 : index
    %591 = vector.load %arg7[%c0_256, %c0_257] : memref<128x6xbf16, #tpu.memory_space<vmem>>, vector<64x6xbf16>
    %cst_258 = arith.constant dense<0.000000e+00> : vector<16x6xf32>
    %592 = tpu.matmul %590, %591, %cst_258 {dimension_numbers = #tpu.dot_dimension_numbers<[1], [0], [0], [1], [0, 0, 1, 1], [], []>} : vector<16x64xbf16>, vector<64x6xbf16>, vector<16x6xf32> -> vector<16x6xf32>
    %593 = arith.truncf %589 : vector<16x64xf32> to vector<16x64xbf16>
    %c64_259 = arith.constant 64 : index
    %c0_260 = arith.constant 0 : index
    %594 = vector.load %arg7[%c64_259, %c0_260] : memref<128x6xbf16, #tpu.memory_space<vmem>>, vector<64x6xbf16>
    %cst_261 = arith.constant dense<0.000000e+00> : vector<16x6xf32>
    %595 = tpu.matmul %593, %594, %cst_261 {dimension_numbers = #tpu.dot_dimension_numbers<[1], [0], [0], [1], [0, 0, 1, 1], [], []>} : vector<16x64xbf16>, vector<64x6xbf16>, vector<16x6xf32> -> vector<16x6xf32>
    %596 = arith.addf %592, %595 : vector<16x6xf32>
    %c0_262 = arith.constant 0 : index
    %c0_263 = arith.constant 0 : index
    %597 = vector.load %arg8[%c0_262, %c0_263] : memref<1x6xf32, #tpu.memory_space<vmem>>, vector<1x6xf32>
    %598 = vector.broadcast %597 : vector<1x6xf32> to vector<16x6xf32>
    %599 = arith.addf %596, %598 : vector<16x6xf32>
    %c0_264 = arith.constant 0 : index
    %c0_265 = arith.constant 0 : index
    %600 = vector.load %arg9[%c0_264, %c0_265] : memref<16x6xf32, #tpu.memory_space<vmem>>, vector<16x6xf32>
    tpu.vector_store %arg9[%c0_264, %c0_265], %599 {strides = array<i32>} : memref<16x6xf32, #tpu.memory_space<vmem>>, vector<16x6xf32>,
    return
  }
}

</mosaic_0001>

<llo_original>
// kernel: tpu_custom_call.1
$region0: #{tpu_custom_call.1}
  #allocation0 [shape = 'u32[]', space=smem, size = 0x4, offset = 0x4, fixed_abs, tag = 'smem constant byte address 0x4 - core index']
  #allocation1 [shape = 'u32[72,128]{1,0:T(1,128)}', space=vmem, size = 0x9000, scoped, tag = 'internal scratch']
  #allocation2 [shape = 'f32[128,256]{1,0:T(8,128)}', space=vmem, size = 0x20000, scoped, tag = 'scratch operand']
  #allocation3 [shape = 'f32[128,64]{1,0:T(8,128)}', space=vmem, size = 0x10000, scoped, tag = 'scratch operand']
  %s0 = inlined_call_operand.vmem [shape: bf16[128,32], index: 0, kind: input, shape index: {}]
  %s1 = inlined_call_operand.hbm [shape: bf16[32,256], index: 1, kind: input, shape index: {}]
  %s2 = inlined_call_operand.vmem [shape: bf16[64,256], index: 2, kind: input, shape index: {}]
  %s3 = inlined_call_operand.vmem [shape: f32[1,256], index: 3, kind: input, shape index: {}]
  %s4 = inlined_call_operand.vmem [shape: bf16[64,256], index: 4, kind: input, shape index: {}]
  %s5 = inlined_call_operand.hbm [shape: bf16[64,256], index: 5, kind: input, shape index: {}]
  %s6 = inlined_call_operand.vmem [shape: f32[1,256], index: 6, kind: input, shape index: {}]
  %s7 = inlined_call_operand.vmem [shape: bf16[128,6], index: 7, kind: input, shape index: {}]
  %s8 = inlined_call_operand.vmem [shape: f32[1,6], index: 8, kind: input, shape index: {}]
  %s9 = inlined_call_operand.vmem [shape: f32[16,6], index: 9, kind: output, shape index: {}]
  %s10 = sld [smem:[#allocation0]]
  $region54: #{tpu_custom_call.1} parent=0
    _
  %s12 = ssub.s32 1, %s10
  %s13 = scalar_select 0, %s12, %s10
  $region1: #{tpu_custom_call.1} parent=0
    #allocation4 [shape = 'u8[16384]{0}', space=vmem, size = 0x4000, scoped, tag = 'input window, operand 1, single buffered']
    #allocation5 [shape = 's32[1]{0}', space=sflag, size = 0x4, scoped, tag = 'scoped memory for tpu_custom_call.1']
    #allocation6 [shape = 'u8[32768]{0}', space=vmem, size = 0x8000, scoped, tag = 'input window, operand 5, single buffered']
    #allocation7 [shape = 's32[1]{0}', space=sflag, size = 0x4, scoped, tag = 'scoped memory for tpu_custom_call.1']
    %14 = vsyncpa [#allocation5], 0
    %15 = vsyncpa [#allocation7], 0
    // Predicated region
    $region2: #{tpu_custom_call.1} parent=1 // pred_check
      _
    $region3: #{tpu_custom_call.1} parent=1 // pred_check_branch
      %17 = sbr.rel (0) target = $region5
    $region4: #{tpu_custom_call.1} parent=1 // pred_region
      _
    $region5: #{tpu_custom_call.1} parent=1 // pred_fallthru
      _
    // Predicated region
    $region6: #{tpu_custom_call.1} parent=1 // pred_check
      _
    $region7: #{tpu_custom_call.1} parent=1 // pred_check_branch
      %19 = sbr.rel (0) target = $region9
    $region8: #{tpu_custom_call.1} parent=1 // pred_region
      %21 = vsyncadd [#allocation5], 0
      %s22 = sshll.u32 %s1, 4
      %s23 = int_to_ptr.hbm [resolvable:$true] %s22
      %s24 = sshll.u32 [#allocation4], 4
      %s25 = int_to_ptr.vmem [resolvable:$true] %s24
      %30 = dma.hbm_to_vmem [thread:$0]  %s23, 512, %s25, [#allocation5], 128, 128, 8
    $region9: #{tpu_custom_call.1} parent=1 // pred_fallthru
      _
    // Predicated region
    $region10: #{tpu_custom_call.1} parent=1 // pred_check
      _
    $region11: #{tpu_custom_call.1} parent=1 // pred_check_branch
      %32 = sbr.rel (0) target = $region13
    $region12: #{tpu_custom_call.1} parent=1 // pred_region
      _
    $region13: #{tpu_custom_call.1} parent=1 // pred_fallthru
      _
    // Predicated region
    $region14: #{tpu_custom_call.1} parent=1 // pred_check
      _
    $region15: #{tpu_custom_call.1} parent=1 // pred_check_branch
      %34 = sbr.rel (0) target = $region17
    $region16: #{tpu_custom_call.1} parent=1 // pred_region
      _
    $region17: #{tpu_custom_call.1} parent=1 // pred_fallthru
      _
    // Predicated region
    $region18: #{tpu_custom_call.1} parent=1 // pred_check
      _
    $region19: #{tpu_custom_call.1} parent=1 // pred_check_branch
      %36 = sbr.rel (0) target = $region21
    $region20: #{tpu_custom_call.1} parent=1 // pred_region
      _
    $region21: #{tpu_custom_call.1} parent=1 // pred_fallthru
      _
    // Predicated region
    $region22: #{tpu_custom_call.1} parent=1 // pred_check
      _
    $region23: #{tpu_custom_call.1} parent=1 // pred_check_branch
      %38 = sbr.rel (0) target = $region25
    $region24: #{tpu_custom_call.1} parent=1 // pred_region
      %40 = vsyncadd [#allocation7], 0
      %s41 = sshll.u32 %s5, 4
      %s42 = int_to_ptr.hbm [resolvable:$true] %s41
      %s43 = sshll.u32 [#allocation6], 4
      %s44 = int_to_ptr.vmem [resolvable:$true] %s43
      %49 = dma.hbm_to_vmem [thread:$0]  %s42, 1024, %s44, [#allocation7], 128, 128, 8
    $region25: #{tpu_custom_call.1} parent=1 // pred_fallthru
      _
    // Predicated region
    $region26: #{tpu_custom_call.1} parent=1 // pred_check
      _
    $region27: #{tpu_custom_call.1} parent=1 // pred_check_branch
      %51 = sbr.rel (0) target = $region29
    $region28: #{tpu_custom_call.1} parent=1 // pred_region
      _
    $region29: #{tpu_custom_call.1} parent=1 // pred_fallthru
      _
    // Predicated region
    $region30: #{tpu_custom_call.1} parent=1 // pred_check
      _
    $region31: #{tpu_custom_call.1} parent=1 // pred_check_branch
      %53 = sbr.rel (0) target = $region33
    $region32: #{tpu_custom_call.1} parent=1 // pred_region
      _
    $region33: #{tpu_custom_call.1} parent=1 // pred_fallthru
      _
    // Predicated region
    $region34: #{tpu_custom_call.1} parent=1 // pred_check
      _
    $region35: #{tpu_custom_call.1} parent=1 // pred_check_branch
      %55 = sbr.rel (0) target = $region37
    $region36: #{tpu_custom_call.1} parent=1 // pred_region
      _
    $region37: #{tpu_custom_call.1} parent=1 // pred_fallthru
      _
    // Predicated region
    $region38: #{tpu_custom_call.1} parent=1 // pred_check
      _
    $region39: #{tpu_custom_call.1} parent=1 // pred_check_branch
      %57 = sbr.rel (0) target = $region41
    $region40: #{tpu_custom_call.1} parent=1 // pred_region
      %59 = dma.done [#allocation5], 512
    $region41: #{tpu_custom_call.1} parent=1 // pred_fallthru
      _
    // Predicated region
    $region42: #{tpu_custom_call.1} parent=1 // pred_check
      _
    $region43: #{tpu_custom_call.1} parent=1 // pred_check_branch
      %61 = sbr.rel (0) target = $region45
    $region44: #{tpu_custom_call.1} parent=1 // pred_region
      %63 = dma.done [#allocation7], 1024
    $region45: #{tpu_custom_call.1} parent=1 // pred_fallthru
      _
    %v65 = vlaneseq
    %v66 = vand.u32 %v65, 127
    %v67 = vadd.s32 %v66, 128
    %vm68 = vcmp.lt.s32.totalorder %v66, 0
    %v69 = vsub.s32 0, %v66
    %v70 = vsel %vm68, %v69, %v66
    %v71 = vshrl.u32 %v70, 6
    %v72 = vand.u32 %v70, 63
    %v73 = vsub.s32 0, %v72
    %v74 = vsel %vm68, %v73, %v72
    %vm75 = vcmp.lt.s32.totalorder %v67, 0
    %v76 = vsub.s32 0, %v67
    %v77 = vsel %vm75, %v76, %v67
    %v78 = vshrl.u32 %v77, 6
    %v79 = vand.u32 %v77, 63
    %v80 = vsub.s32 0, %v79
    %v81 = vsel %vm75, %v80, %v79
    %vm82 = vcmp.ne.s32.totalorder %v74, 0
    %vm83 = vcmp.ne.s32.totalorder %v81, 0
    %vm84 = vcmp.lt.s32.totalorder %v74, 0
    %vm85 = vcmp.lt.s32.totalorder %v81, 0
    %vm86 = vmand %vm84, %vm82
    %vm87 = vmand %vm85, %vm83
    %v88 = vadd.s32 %v74, 64
    %v89 = vadd.s32 %v81, 64
    %v90 = vsel %vm86, %v88, %v74
    %v91 = vsel %vm87, %v89, %v81
    %vm92 = vcmp.lt.s32.totalorder %v90, 32
    %vm93 = vcmp.lt.s32.totalorder %v91, 32
    %v94 = vld [vmem:[%s0] sm:$0xf]
    %v95 = vld [vmem:[%s0 + $0x4] sm:$0xf]
    %v96 = vld [vmem:[%s0 + $0x8] sm:$0xf]
    %v97 = vld [vmem:[%s0 + $0xc] sm:$0xf]
    %v98 = vld [vmem:[%s0 + $0x10] sm:$0xf]
    %v99 = vld [vmem:[%s0 + $0x14] sm:$0xf]
    %v100 = vld [vmem:[%s0 + $0x18] sm:$0xf]
    %v101 = vld [vmem:[%s0 + $0x1c] sm:$0xf]
    %v102 = vld [vmem:[%s0 + $0x20] sm:$0xf]
    %v103 = vld [vmem:[%s0 + $0x24] sm:$0xf]
    %v104 = vld [vmem:[%s0 + $0x28] sm:$0xf]
    %v105 = vld [vmem:[%s0 + $0x2c] sm:$0xf]
    %v106 = vld [vmem:[%s0 + $0x30] sm:$0xf]
    %v107 = vld [vmem:[%s0 + $0x34] sm:$0xf]
    %v108 = vld [vmem:[%s0 + $0x38] sm:$0xf]
    %v109 = vld [vmem:[%s0 + $0x3c] sm:$0xf]
    %v110 = vld [vmem:[#allocation4] sm:$0xff]
    %v111 = vld [vmem:[#allocation4 + $0x8] sm:$0xff]
    %v112 = vld [vmem:[#allocation4 + $0x10] sm:$0xff]
    %v113 = vld [vmem:[#allocation4 + $0x18] sm:$0xff]
    %v114 = vld [vmem:[%s3] sm:$0x3]
    %v116 = vperm.slane %v114, 0
    %v117 = vperm.slane %v114, 1
    %v136 = vunpack.c.l.b16 %v94
    %v137 = vunpack.c.l.b16 %v95
    %v138 = vunpack.c.l.b16 %v96
    %v139 = vunpack.c.l.b16 %v97
    %v140 = vunpack.c.l.b16 %v98
    %v141 = vunpack.c.l.b16 %v99
    %v142 = vunpack.c.l.b16 %v100
    %v143 = vunpack.c.l.b16 %v101
    %v144 = vunpack.c.l.b16 %v102
    %v145 = vunpack.c.l.b16 %v103
    %v146 = vunpack.c.l.b16 %v104
    %v147 = vunpack.c.l.b16 %v105
    %v148 = vunpack.c.l.b16 %v106
    %v149 = vunpack.c.l.b16 %v107
    %v150 = vunpack.c.l.b16 %v108
    %v151 = vunpack.c.l.b16 %v109
    %v152 = vpack.c.b16 %v137, %v136
    %v153 = vpack.c.b16 %v139, %v138
    %v154 = vpack.c.b16 %v141, %v140
    %v155 = vpack.c.b16 %v143, %v142
    %v156 = vpack.c.b16 %v145, %v144
    %v157 = vpack.c.b16 %v147, %v146
    %v158 = vpack.c.b16 %v149, %v148
    %v159 = vpack.c.b16 %v151, %v150
    %v164 = vunpack.c.l.b16 %v110
    %v165 = vunpack.c.h.b16 %v110
    %v166 = vunpack.c.l.b16 %v111
    %v167 = vunpack.c.h.b16 %v111
    %v168 = vunpack.c.l.b16 %v112
    %v169 = vunpack.c.h.b16 %v112
    %v170 = vunpack.c.l.b16 %v113
    %v171 = vunpack.c.h.b16 %v113
    %v172 = vpack.c.b16 %v166, %v164
    %v173 = vpack.c.b16 %v167, %v165
    %v174 = vpack.c.b16 %v170, %v168
    %v175 = vpack.c.b16 %v171, %v169
    %vm180 = vcmask 261120
    %v182 = vsel %vm180, %v152, 0
    %v185 = vsel %vm180, %v153, 0
    %v188 = vsel %vm180, %v154, 0
    %v191 = vsel %vm180, %v155, 0
    %v194 = vsel %vm180, %v156, 0
    %v197 = vsel %vm180, %v157, 0
    %v200 = vsel %vm180, %v158, 0
    %v203 = vsel %vm180, %v159, 0
    %205 = vmatpush.bf16.msra.mxu0 0
    %206 = vmatpush.bf16.msra.mxu0 0
    %207 = vmatpush.bf16.msra.mxu0 0
    %208 = vmatpush.bf16.msra.mxu0 0
    %209 = vmatpush.bf16.msra.mxu0 0
    %210 = vmatpush.bf16.msra.mxu0 0
    %211 = vmatpush.bf16.msra.mxu0 %v174
    %212 = vmatpush.bf16.msra.mxu0 %v172
    %213 = vmatmul.bf16.gmra.mxu0 %v182
    %v214 = vpop.f32.mrf.mxu0
    %v215 = vadd.f32 %v116, %v214
    %v216 = vpop.f32.mrf.mxu0
    %v217 = vadd.f32 %v116, %v216
    %218 = vmatmul.bf16.gmra.mxu0 %v185
    %v219 = vpop.f32.mrf.mxu0
    %v220 = vadd.f32 %v116, %v219
    %v221 = vpop.f32.mrf.mxu0
    %v222 = vadd.f32 %v116, %v221
    %223 = vmatmul.bf16.gmra.mxu0 %v188
    %v224 = vpop.f32.mrf.mxu0
    %v225 = vadd.f32 %v116, %v224
    %v226 = vpop.f32.mrf.mxu0
    %v227 = vadd.f32 %v116, %v226
    %228 = vmatmul.bf16.gmra.mxu0 %v191
    %v229 = vpop.f32.mrf.mxu0
    %v230 = vadd.f32 %v116, %v229
    %v231 = vpop.f32.mrf.mxu0
    %v232 = vadd.f32 %v116, %v231
    %233 = vmatmul.bf16.gmra.mxu0 %v194
    %v234 = vpop.f32.mrf.mxu0
    %v235 = vadd.f32 %v116, %v234
    %v236 = vpop.f32.mrf.mxu0
    %v237 = vadd.f32 %v116, %v236
    %238 = vmatmul.bf16.gmra.mxu0 %v197
    %v239 = vpop.f32.mrf.mxu0
    %v240 = vadd.f32 %v116, %v239
    %v241 = vpop.f32.mrf.mxu0
    %v242 = vadd.f32 %v116, %v241
    %243 = vmatmul.bf16.gmra.mxu0 %v200
    %v244 = vpop.f32.mrf.mxu0
    %v245 = vadd.f32 %v116, %v244
    %v246 = vpop.f32.mrf.mxu0
    %v247 = vadd.f32 %v116, %v246
    %248 = vmatmul.bf16.gmra.mxu0 %v203
    %v249 = vpop.f32.mrf.mxu0
    %v250 = vadd.f32 %v116, %v249
    %v251 = vpop.f32.mrf.mxu0
    %v252 = vadd.f32 %v116, %v251
    %253 = vdwg.mxu0
    %254 = vmatpush.bf16.msra.mxu0 0
    %255 = vmatpush.bf16.msra.mxu0 0
    %256 = vmatpush.bf16.msra.mxu0 0
    %257 = vmatpush.bf16.msra.mxu0 0
    %258 = vmatpush.bf16.msra.mxu0 0
    %259 = vmatpush.bf16.msra.mxu0 0
    %260 = vmatpush.bf16.msra.mxu0 %v175
    %261 = vmatpush.bf16.msra.mxu0 %v173
    %262 = vmatmul.bf16.gmra.mxu0 %v182
    %v263 = vpop.f32.mrf.mxu0
    %v264 = vadd.f32 %v117, %v263
    %v265 = vpop.f32.mrf.mxu0
    %v266 = vadd.f32 %v117, %v265
    %267 = vmatmul.bf16.gmra.mxu0 %v185
    %v268 = vpop.f32.mrf.mxu0
    %v269 = vadd.f32 %v117, %v268
    %v270 = vpop.f32.mrf.mxu0
    %v271 = vadd.f32 %v117, %v270
    %272 = vmatmul.bf16.gmra.mxu0 %v188
    %v273 = vpop.f32.mrf.mxu0
    %v274 = vadd.f32 %v117, %v273
    %v275 = vpop.f32.mrf.mxu0
    %v276 = vadd.f32 %v117, %v275
    %277 = vmatmul.bf16.gmra.mxu0 %v191
    %v278 = vpop.f32.mrf.mxu0
    %v279 = vadd.f32 %v117, %v278
    %v280 = vpop.f32.mrf.mxu0
    %v281 = vadd.f32 %v117, %v280
    %282 = vmatmul.bf16.gmra.mxu0 %v194
    %v283 = vpop.f32.mrf.mxu0
    %v284 = vadd.f32 %v117, %v283
    %v285 = vpop.f32.mrf.mxu0
    %v286 = vadd.f32 %v117, %v285
    %287 = vmatmul.bf16.gmra.mxu0 %v197
    %v288 = vpop.f32.mrf.mxu0
    %v289 = vadd.f32 %v117, %v288
    %v290 = vpop.f32.mrf.mxu0
    %v291 = vadd.f32 %v117, %v290
    %292 = vmatmul.bf16.gmra.mxu0 %v200
    %v293 = vpop.f32.mrf.mxu0
    %v294 = vadd.f32 %v117, %v293
    %v295 = vpop.f32.mrf.mxu0
    %v296 = vadd.f32 %v117, %v295
    %297 = vmatmul.bf16.gmra.mxu0 %v203
    %v298 = vpop.f32.mrf.mxu0
    %v299 = vadd.f32 %v117, %v298
    %v300 = vpop.f32.mrf.mxu0
    %v301 = vadd.f32 %v117, %v300
    %302 = vdwg.mxu0
    %303 = vst [vmem:[#allocation2] sm:$0xff] %v215
    %304 = vst [vmem:[#allocation2 + $0x8] sm:$0xff] %v264
    %305 = vst [vmem:[#allocation2 + $0x10] sm:$0xff] %v217
    %306 = vst [vmem:[#allocation2 + $0x18] sm:$0xff] %v266
    %307 = vst [vmem:[#allocation2 + $0x20] sm:$0xff] %v220
    %308 = vst [vmem:[#allocation2 + $0x28] sm:$0xff] %v269
    %309 = vst [vmem:[#allocation2 + $0x30] sm:$0xff] %v222
    %310 = vst [vmem:[#allocation2 + $0x38] sm:$0xff] %v271
    %311 = vst [vmem:[#allocation2 + $0x40] sm:$0xff] %v225
    %312 = vst [vmem:[#allocation2 + $0x48] sm:$0xff] %v274
    %313 = vst [vmem:[#allocation2 + $0x50] sm:$0xff] %v227
    %314 = vst [vmem:[#allocation2 + $0x58] sm:$0xff] %v276
    %315 = vst [vmem:[#allocation2 + $0x60] sm:$0xff] %v230
    %316 = vst [vmem:[#allocation2 + $0x68] sm:$0xff] %v279
    %317 = vst [vmem:[#allocation2 + $0x70] sm:$0xff] %v232
    %318 = vst [vmem:[#allocation2 + $0x78] sm:$0xff] %v281
    %319 = vst [vmem:[#allocation2 + $0x80] sm:$0xff] %v235
    %320 = vst [vmem:[#allocation2 + $0x88] sm:$0xff] %v284
    %321 = vst [vmem:[#allocation2 + $0x90] sm:$0xff] %v237
    %322 = vst [vmem:[#allocation2 + $0x98] sm:$0xff] %v286
    %323 = vst [vmem:[#allocation2 + $0xa0] sm:$0xff] %v240
    %324 = vst [vmem:[#allocation2 + $0xa8] sm:$0xff] %v289
    %325 = vst [vmem:[#allocation2 + $0xb0] sm:$0xff] %v242
    %326 = vst [vmem:[#allocation2 + $0xb8] sm:$0xff] %v291
    %327 = vst [vmem:[#allocation2 + $0xc0] sm:$0xff] %v245
    %328 = vst [vmem:[#allocation2 + $0xc8] sm:$0xff] %v294
    %329 = vst [vmem:[#allocation2 + $0xd0] sm:$0xff] %v247
    %330 = vst [vmem:[#allocation2 + $0xd8] sm:$0xff] %v296
    %331 = vst [vmem:[#allocation2 + $0xe0] sm:$0xff] %v250
    %332 = vst [vmem:[#allocation2 + $0xe8] sm:$0xff] %v299
    %333 = vst [vmem:[#allocation2 + $0xf0] sm:$0xff] %v252
    %334 = vst [vmem:[#allocation2 + $0xf8] sm:$0xff] %v301
    %v335 = vld [vmem:[#allocation2] sm:$0xff]
    %v336 = vld [vmem:[#allocation2 + $0x8] sm:$0xff]
    %v337 = vld [vmem:[#allocation2 + $0x10] sm:$0xff]
    %v338 = vld [vmem:[#allocation2 + $0x18] sm:$0xff]
    %v339 = vld [vmem:[#allocation2 + $0xe0] sm:$0xff]
    %v340 = vld [vmem:[#allocation2 + $0xe8] sm:$0xff]
    %v341 = vld [vmem:[#allocation2 + $0xf0] sm:$0xff]
    %v342 = vld [vmem:[#allocation2 + $0xf8] sm:$0xff]
    %v343 = vsel %vm92, %v335, %v339
    %v344 = vsel %vm93, %v336, %v340
    %v345 = vsel %vm92, %v337, %v341
    %v346 = vsel %vm93, %v338, %v342
    %347 = vst [vmem:[#allocation2] sm:$0xff] %v343
    %348 = vst [vmem:[#allocation2 + $0x8] sm:$0xff] %v344
    %349 = vst [vmem:[#allocation2 + $0x10] sm:$0xff] %v345
    %350 = vst [vmem:[#allocation2 + $0x18] sm:$0xff] %v346
    %v351 = vsel %vm92, %v339, %v335
    %v352 = vsel %vm93, %v340, %v336
    %v353 = vsel %vm92, %v341, %v337
    %v354 = vsel %vm93, %v342, %v338
    %355 = vst [vmem:[#allocation2 + $0xe0] sm:$0xff] %v351
    %356 = vst [vmem:[#allocation2 + $0xe8] sm:$0xff] %v352
    %357 = vst [vmem:[#allocation2 + $0xf0] sm:$0xff] %v353
    %358 = vst [vmem:[#allocation2 + $0xf8] sm:$0xff] %v354
    %v359 = vld [vmem:[#allocation2 + $0x20] sm:$0xff]
    %v360 = vld [vmem:[#allocation2 + $0x28] sm:$0xff]
    %v361 = vld [vmem:[#allocation2 + $0x30] sm:$0xff]
    %v362 = vld [vmem:[#allocation2 + $0x38] sm:$0xff]
    %v363 = vld [vmem:[#allocation2 + $0xc0] sm:$0xff]
    %v364 = vld [vmem:[#allocation2 + $0xc8] sm:$0xff]
    %v365 = vld [vmem:[#allocation2 + $0xd0] sm:$0xff]
    %v366 = vld [vmem:[#allocation2 + $0xd8] sm:$0xff]
    %v367 = vsel %vm92, %v359, %v363
    %v368 = vsel %vm93, %v360, %v364
    %v369 = vsel %vm92, %v361, %v365
    %v370 = vsel %vm93, %v362, %v366
    %371 = vst [vmem:[#allocation2 + $0x20] sm:$0xff] %v367
    %372 = vst [vmem:[#allocation2 + $0x28] sm:$0xff] %v368
    %373 = vst [vmem:[#allocation2 + $0x30] sm:$0xff] %v369
    %374 = vst [vmem:[#allocation2 + $0x38] sm:$0xff] %v370
    %v375 = vsel %vm92, %v363, %v359
    %v376 = vsel %vm93, %v364, %v360
    %v377 = vsel %vm92, %v365, %v361
    %v378 = vsel %vm93, %v366, %v362
    %379 = vst [vmem:[#allocation2 + $0xc0] sm:$0xff] %v375
    %380 = vst [vmem:[#allocation2 + $0xc8] sm:$0xff] %v376
    %381 = vst [vmem:[#allocation2 + $0xd0] sm:$0xff] %v377
    %382 = vst [vmem:[#allocation2 + $0xd8] sm:$0xff] %v378
    %v383 = vld [vmem:[#allocation2 + $0x40] sm:$0xff]
    %v384 = vld [vmem:[#allocation2 + $0x48] sm:$0xff]
    %v385 = vld [vmem:[#allocation2 + $0x50] sm:$0xff]
    %v386 = vld [vmem:[#allocation2 + $0x58] sm:$0xff]
    %v387 = vld [vmem:[#allocation2 + $0xa0] sm:$0xff]
    %v388 = vld [vmem:[#allocation2 + $0xa8] sm:$0xff]
    %v389 = vld [vmem:[#allocation2 + $0xb0] sm:$0xff]
    %v390 = vld [vmem:[#allocation2 + $0xb8] sm:$0xff]
    %v391 = vsel %vm92, %v383, %v387
    %v392 = vsel %vm93, %v384, %v388
    %v393 = vsel %vm92, %v385, %v389
    %v394 = vsel %vm93, %v386, %v390
    %395 = vst [vmem:[#allocation2 + $0x40] sm:$0xff] %v391
    %396 = vst [vmem:[#allocation2 + $0x48] sm:$0xff] %v392
    %397 = vst [vmem:[#allocation2 + $0x50] sm:$0xff] %v393
    %398 = vst [vmem:[#allocation2 + $0x58] sm:$0xff] %v394
    %v399 = vsel %vm92, %v387, %v383
    %v400 = vsel %vm93, %v388, %v384
    %v401 = vsel %vm92, %v389, %v385
    %v402 = vsel %vm93, %v390, %v386
    %403 = vst [vmem:[#allocation2 + $0xa0] sm:$0xff] %v399
    %404 = vst [vmem:[#allocation2 + $0xa8] sm:$0xff] %v400
    %405 = vst [vmem:[#allocation2 + $0xb0] sm:$0xff] %v401
    %406 = vst [vmem:[#allocation2 + $0xb8] sm:$0xff] %v402
    %v407 = vld [vmem:[#allocation2 + $0x60] sm:$0xff]
    %v408 = vld [vmem:[#allocation2 + $0x68] sm:$0xff]
    %v409 = vld [vmem:[#allocation2 + $0x70] sm:$0xff]
    %v410 = vld [vmem:[#allocation2 + $0x78] sm:$0xff]
    %v411 = vld [vmem:[#allocation2 + $0x80] sm:$0xff]
    %v412 = vld [vmem:[#allocation2 + $0x88] sm:$0xff]
    %v413 = vld [vmem:[#allocation2 + $0x90] sm:$0xff]
    %v414 = vld [vmem:[#allocation2 + $0x98] sm:$0xff]
    %v415 = vsel %vm92, %v407, %v411
    %v416 = vsel %vm93, %v408, %v412
    %v417 = vsel %vm92, %v409, %v413
    %v418 = vsel %vm93, %v410, %v414
    %419 = vst [vmem:[#allocation2 + $0x60] sm:$0xff] %v415
    %420 = vst [vmem:[#allocation2 + $0x68] sm:$0xff] %v416
    %421 = vst [vmem:[#allocation2 + $0x70] sm:$0xff] %v417
    %422 = vst [vmem:[#allocation2 + $0x78] sm:$0xff] %v418
    %v423 = vsel %vm92, %v411, %v407
    %v424 = vsel %vm93, %v412, %v408
    %v425 = vsel %vm92, %v413, %v409
    %v426 = vsel %vm93, %v414, %v410
    %427 = vst [vmem:[#allocation2 + $0x80] sm:$0xff] %v423
    %428 = vst [vmem:[#allocation2 + $0x88] sm:$0xff] %v424
    %429 = vst [vmem:[#allocation2 + $0x90] sm:$0xff] %v425
    %430 = vst [vmem:[#allocation2 + $0x98] sm:$0xff] %v426
    %v431 = vld [vmem:[#allocation2] sm:$0xff]
    %v432 = vld [vmem:[#allocation2 + $0x8] sm:$0xff]
    %v433 = vld [vmem:[#allocation2 + $0x10] sm:$0xff]
    %v434 = vld [vmem:[#allocation2 + $0x18] sm:$0xff]
    %v435 = vld [vmem:[%s2] sm:$0xff]
    %v436 = vld [vmem:[%s2 + $0x8] sm:$0xff]
    %v437 = vld [vmem:[%s2 + $0x10] sm:$0xff]
    %v438 = vld [vmem:[%s2 + $0x18] sm:$0xff]
    %v439 = vld [vmem:[%s2 + $0x20] sm:$0xff]
    %v440 = vld [vmem:[%s2 + $0x28] sm:$0xff]
    %v441 = vld [vmem:[%s2 + $0x30] sm:$0xff]
    %v442 = vld [vmem:[%s2 + $0x38] sm:$0xff]
    %v451 = vunpack.c.l.b16 %v435
    %v452 = vunpack.c.h.b16 %v435
    %v453 = vunpack.c.l.b16 %v436
    %v454 = vunpack.c.h.b16 %v436
    %v455 = vunpack.c.l.b16 %v437
    %v456 = vunpack.c.h.b16 %v437
    %v457 = vunpack.c.l.b16 %v438
    %v458 = vunpack.c.h.b16 %v438
    %v459 = vunpack.c.l.b16 %v439
    %v460 = vunpack.c.h.b16 %v439
    %v461 = vunpack.c.l.b16 %v440
    %v462 = vunpack.c.h.b16 %v440
    %v463 = vunpack.c.l.b16 %v441
    %v464 = vunpack.c.h.b16 %v441
    %v465 = vunpack.c.l.b16 %v442
    %v466 = vunpack.c.h.b16 %v442
    %v467 = vpack.c.b16 %v453, %v451
    %v468 = vpack.c.b16 %v454, %v452
    %v469 = vpack.c.b16 %v457, %v455
    %v470 = vpack.c.b16 %v458, %v456
    %v471 = vpack.c.b16 %v461, %v459
    %v472 = vpack.c.b16 %v462, %v460
    %v473 = vpack.c.b16 %v465, %v463
    %v474 = vpack.c.b16 %v466, %v464
    %vm483 = vcmask 523264
    %v485 = vsel %vm483, 0, 0
    %487 = vmatpush.bf16.msra.mxu0 0
    %488 = vmatpush.bf16.msra.mxu0 0
    %489 = vmatpush.bf16.msra.mxu0 0
    %490 = vmatpush.bf16.msra.mxu0 0
    %491 = vmatpush.bf16.msra.mxu0 %v473
    %492 = vmatpush.bf16.msra.mxu0 %v471
    %493 = vmatpush.bf16.msra.mxu0 %v469
    %494 = vmatpush.bf16.msra.mxu0 %v467
    %495 = vmatmul.bf16.gmra.mxu0 %v485
    %v496 = vpop.f32.mrf.mxu0
    %v497 = vadd.f32 0.0, %v496
    %v498 = vpop.f32.mrf.mxu0
    %v499 = vadd.f32 0.0, %v498
    %500 = vdwg.mxu0
    %501 = vmatpush.bf16.msra.mxu0 0
    %502 = vmatpush.bf16.msra.mxu0 0
    %503 = vmatpush.bf16.msra.mxu0 0
    %504 = vmatpush.bf16.msra.mxu0 0
    %505 = vmatpush.bf16.msra.mxu0 %v474
    %506 = vmatpush.bf16.msra.mxu0 %v472
    %507 = vmatpush.bf16.msra.mxu0 %v470
    %508 = vmatpush.bf16.msra.mxu0 %v468
    %509 = vmatmul.bf16.gmra.mxu0 %v485
    %v510 = vpop.f32.mrf.mxu0
    %v511 = vadd.f32 0.0, %v510
    %v512 = vpop.f32.mrf.mxu0
    %v513 = vadd.f32 0.0, %v512
    %514 = vdwg.mxu0
    %v515 = vadd.f32 %v431, %v497
    %v516 = vadd.f32 %v432, %v511
    %v517 = vadd.f32 %v433, %v499
    %v518 = vadd.f32 %v434, %v513
    %v519 = vxor.u32 %v515, 2147483648
    %v520 = vxor.u32 %v517, 2147483648
    %v521 = vmul.f32 %v519, 1.442695
    %v522 = vpow.pop %v521
    %v523 = vmul.f32 %v520, 1.442695
    %v524 = vpow.pop %v523
    %v525 = vadd.f32 %v522, 1.0
    %v526 = vadd.f32 %v524, 1.0
    %v527 = vrcp.pop %v525
    %v528 = vmul.f32 %v525, %v527
    %v529 = vsub.f32 1.0, %v528
    %v530 = vmul.f32 %v527, %v529
    %v531 = vadd.f32 %v527, %v530
    %vm532 = vweird.f32 %v525
    %vm533 = vweird.f32 %v527
    %vm534 = vmor %vm532, %vm533
    %v535 = vsel %vm534, %v527, %v531
    %v536 = vand.u32 2147483647, %v525
    %vm537 = vcmp.eq.f32.partialorder %v536, 8.507059e+37
    %v538 = vand.u32 %v525, 2147483648
    %v539 = vor.u32 1.1754944e-38, %v538
    %v540 = vsel %vm537, %v539, %v535
    %v541 = vmul.f32 1.0, %v540
    %v542 = vrcp.pop %v526
    %v543 = vmul.f32 %v526, %v542
    %v544 = vsub.f32 1.0, %v543
    %v545 = vmul.f32 %v542, %v544
    %v546 = vadd.f32 %v542, %v545
    %vm547 = vweird.f32 %v526
    %vm548 = vweird.f32 %v542
    %vm549 = vmor %vm547, %vm548
    %v550 = vsel %vm549, %v542, %v546
    %v551 = vand.u32 2147483647, %v526
    %vm552 = vcmp.eq.f32.partialorder %v551, 8.507059e+37
    %v553 = vand.u32 %v526, 2147483648
    %v554 = vor.u32 1.1754944e-38, %v553
    %v555 = vsel %vm552, %v554, %v550
    %v556 = vmul.f32 1.0, %v555
    %v557 = vtanh.pop %v516
    %v558 = vtanh.pop %v518
    %v559 = vxor.u32 %v516, 2147483648
    %v560 = vxor.u32 %v518, 2147483648
    %v561 = vmul.f32 %v559, 1.442695
    %v562 = vpow.pop %v561
    %v563 = vmul.f32 %v560, 1.442695
    %v564 = vpow.pop %v563
    %v565 = vadd.f32 %v562, 1.0
    %v566 = vadd.f32 %v564, 1.0
    %v567 = vrcp.pop %v565
    %v568 = vmul.f32 %v565, %v567
    %v569 = vsub.f32 1.0, %v568
    %v570 = vmul.f32 %v567, %v569
    %v571 = vadd.f32 %v567, %v570
    %vm572 = vweird.f32 %v565
    %vm573 = vweird.f32 %v567
    %vm574 = vmor %vm572, %vm573
    %v575 = vsel %vm574, %v567, %v571
    %v576 = vand.u32 2147483647, %v565
    %vm577 = vcmp.eq.f32.partialorder %v576, 8.507059e+37
    %v578 = vand.u32 %v565, 2147483648
    %v579 = vor.u32 1.1754944e-38, %v578
    %v580 = vsel %vm577, %v579, %v575
    %v581 = vmul.f32 1.0, %v580
    %v582 = vrcp.pop %v566
    %v583 = vmul.f32 %v566, %v582
    %v584 = vsub.f32 1.0, %v583
    %v585 = vmul.f32 %v582, %v584
    %v586 = vadd.f32 %v582, %v585
    %vm587 = vweird.f32 %v566
    %vm588 = vweird.f32 %v582
    %vm589 = vmor %vm587, %vm588
    %v590 = vsel %vm589, %v582, %v586
    %v591 = vand.u32 2147483647, %v566
    %vm592 = vcmp.eq.f32.partialorder %v591, 8.507059e+37
    %v593 = vand.u32 %v566, 2147483648
    %v594 = vor.u32 1.1754944e-38, %v593
    %v595 = vsel %vm592, %v594, %v590
    %v596 = vmul.f32 1.0, %v595
    %v597 = vmul.f32 %v541, 0.0
    %v598 = vmul.f32 %v556, 0.0
    %v599 = vmul.f32 %v541, %v557
    %v600 = vmul.f32 %v556, %v558
    %603 = vrot.lane.b32.xlu0 %v599, 64
    %v604 = vpop.permute.xlu0 %603
    %605 = vrot.lane.b32.xlu0 %v600, 64
    %v606 = vpop.permute.xlu0 %605
    %v609 = vadd.f32 %v597, %v604
    %v610 = vadd.f32 %v598, %v606
    %v611 = vtanh.pop %v609
    %v612 = vtanh.pop %v610
    %v613 = vmul.f32 %v581, %v611
    %v614 = vmul.f32 %v596, %v612
    %617 = vrot.lane.b32.xlu0 %v613, 64
    %v618 = vpop.permute.xlu0 %617
    %619 = vrot.lane.b32.xlu0 %v614, 64
    %v620 = vpop.permute.xlu0 %619
    %623 = vst.msk [vmem:[#allocation3] sm:$0xff] %vm483, %v618
    %624 = vst.msk [vmem:[#allocation3 + $0x8] sm:$0xff] %vm483, %v620
    %v625 = vld [vmem:[#allocation2 + $0x20] sm:$0xff]
    %v626 = vld [vmem:[#allocation2 + $0x28] sm:$0xff]
    %v627 = vld [vmem:[#allocation2 + $0x30] sm:$0xff]
    %v628 = vld [vmem:[#allocation2 + $0x38] sm:$0xff]
    %v629 = vpack.c.bf16 %v614, %v613
    %v630 = vld [vmem:[%s2] sm:$0xff]
    %v631 = vld [vmem:[%s2 + $0x8] sm:$0xff]
    %v632 = vld [vmem:[%s2 + $0x10] sm:$0xff]
    %v633 = vld [vmem:[%s2 + $0x18] sm:$0xff]
    %v634 = vld [vmem:[%s2 + $0x20] sm:$0xff]
    %v635 = vld [vmem:[%s2 + $0x28] sm:$0xff]
    %v636 = vld [vmem:[%s2 + $0x30] sm:$0xff]
    %v637 = vld [vmem:[%s2 + $0x38] sm:$0xff]
    %639 = vrot.lane.b32.xlu0 %v629, 64
    %v640 = vpop.permute.xlu0 %639
    %v649 = vunpack.c.l.b16 %v630
    %v650 = vunpack.c.h.b16 %v630
    %v651 = vunpack.c.l.b16 %v631
    %v652 = vunpack.c.h.b16 %v631
    %v653 = vunpack.c.l.b16 %v632
    %v654 = vunpack.c.h.b16 %v632
    %v655 = vunpack.c.l.b16 %v633
    %v656 = vunpack.c.h.b16 %v633
    %v657 = vunpack.c.l.b16 %v634
    %v658 = vunpack.c.h.b16 %v634
    %v659 = vunpack.c.l.b16 %v635
    %v660 = vunpack.c.h.b16 %v635
    %v661 = vunpack.c.l.b16 %v636
    %v662 = vunpack.c.h.b16 %v636
    %v663 = vunpack.c.l.b16 %v637
    %v664 = vunpack.c.h.b16 %v637
    %v665 = vpack.c.b16 %v651, %v649
    %v666 = vpack.c.b16 %v652, %v650
    %v667 = vpack.c.b16 %v655, %v653
    %v668 = vpack.c.b16 %v656, %v654
    %v669 = vpack.c.b16 %v659, %v657
    %v670 = vpack.c.b16 %v660, %v658
    %v671 = vpack.c.b16 %v663, %v661
    %v672 = vpack.c.b16 %v664, %v662
    %v682 = vsel %vm483, %v640, 0
    %684 = vmatpush.bf16.msra.mxu0 0
    %685 = vmatpush.bf16.msra.mxu0 0
    %686 = vmatpush.bf16.msra.mxu0 0
    %687 = vmatpush.bf16.msra.mxu0 0
    %688 = vmatpush.bf16.msra.mxu0 %v671
    %689 = vmatpush.bf16.msra.mxu0 %v669
    %690 = vmatpush.bf16.msra.mxu0 %v667
    %691 = vmatpush.bf16.msra.mxu0 %v665
    %692 = vmatmul.bf16.gmra.mxu0 %v682
    %v693 = vpop.f32.mrf.mxu0
    %v694 = vadd.f32 0.0, %v693
    %v695 = vpop.f32.mrf.mxu0
    %v696 = vadd.f32 0.0, %v695
    %697 = vdwg.mxu0
    %698 = vmatpush.bf16.msra.mxu0 0
    %699 = vmatpush.bf16.msra.mxu0 0
    %700 = vmatpush.bf16.msra.mxu0 0
    %701 = vmatpush.bf16.msra.mxu0 0
    %702 = vmatpush.bf16.msra.mxu0 %v672
    %703 = vmatpush.bf16.msra.mxu0 %v670
    %704 = vmatpush.bf16.msra.mxu0 %v668
    %705 = vmatpush.bf16.msra.mxu0 %v666
    %706 = vmatmul.bf16.gmra.mxu0 %v682
    %v707 = vpop.f32.mrf.mxu0
    %v708 = vadd.f32 0.0, %v707
    %v709 = vpop.f32.mrf.mxu0
    %v710 = vadd.f32 0.0, %v709
    %711 = vdwg.mxu0
    %v712 = vadd.f32 %v625, %v694
    %v713 = vadd.f32 %v626, %v708
    %v714 = vadd.f32 %v627, %v696
    %v715 = vadd.f32 %v628, %v710
    %v716 = vxor.u32 %v712, 2147483648
    %v717 = vxor.u32 %v714, 2147483648
    %v718 = vmul.f32 %v716, 1.442695
    %v719 = vpow.pop %v718
    %v720 = vmul.f32 %v717, 1.442695
    %v721 = vpow.pop %v720
    %v722 = vadd.f32 %v719, 1.0
    %v723 = vadd.f32 %v721, 1.0
    %v724 = vrcp.pop %v722
    %v725 = vmul.f32 %v722, %v724
    %v726 = vsub.f32 1.0, %v725
    %v727 = vmul.f32 %v724, %v726
    %v728 = vadd.f32 %v724, %v727
    %vm729 = vweird.f32 %v722
    %vm730 = vweird.f32 %v724
    %vm731 = vmor %vm729, %vm730
    %v732 = vsel %vm731, %v724, %v728
    %v733 = vand.u32 2147483647, %v722
    %vm734 = vcmp.eq.f32.partialorder %v733, 8.507059e+37
    %v735 = vand.u32 %v722, 2147483648
    %v736 = vor.u32 1.1754944e-38, %v735
    %v737 = vsel %vm734, %v736, %v732
    %v738 = vmul.f32 1.0, %v737
    %v739 = vrcp.pop %v723
    %v740 = vmul.f32 %v723, %v739
    %v741 = vsub.f32 1.0, %v740
    %v742 = vmul.f32 %v739, %v741
    %v743 = vadd.f32 %v739, %v742
    %vm744 = vweird.f32 %v723
    %vm745 = vweird.f32 %v739
    %vm746 = vmor %vm744, %vm745
    %v747 = vsel %vm746, %v739, %v743
    %v748 = vand.u32 2147483647, %v723
    %vm749 = vcmp.eq.f32.partialorder %v748, 8.507059e+37
    %v750 = vand.u32 %v723, 2147483648
    %v751 = vor.u32 1.1754944e-38, %v750
    %v752 = vsel %vm749, %v751, %v747
    %v753 = vmul.f32 1.0, %v752
    %v754 = vtanh.pop %v713
    %v755 = vtanh.pop %v715
    %v756 = vxor.u32 %v713, 2147483648
    %v757 = vxor.u32 %v715, 2147483648
    %v758 = vmul.f32 %v756, 1.442695
    %v759 = vpow.pop %v758
    %v760 = vmul.f32 %v757, 1.442695
    %v761 = vpow.pop %v760
    %v762 = vadd.f32 %v759, 1.0
    %v763 = vadd.f32 %v761, 1.0
    %v764 = vrcp.pop %v762
    %v765 = vmul.f32 %v762, %v764
    %v766 = vsub.f32 1.0, %v765
    %v767 = vmul.f32 %v764, %v766
    %v768 = vadd.f32 %v764, %v767
    %vm769 = vweird.f32 %v762
    %vm770 = vweird.f32 %v764
    %vm771 = vmor %vm769, %vm770
    %v772 = vsel %vm771, %v764, %v768
    %v773 = vand.u32 2147483647, %v762
    %vm774 = vcmp.eq.f32.partialorder %v773, 8.507059e+37
    %v775 = vand.u32 %v762, 2147483648
    %v776 = vor.u32 1.1754944e-38, %v775
    %v777 = vsel %vm774, %v776, %v772
    %v778 = vmul.f32 1.0, %v777
    %v779 = vrcp.pop %v763
    %v780 = vmul.f32 %v763, %v779
    %v781 = vsub.f32 1.0, %v780
    %v782 = vmul.f32 %v779, %v781
    %v783 = vadd.f32 %v779, %v782
    %vm784 = vweird.f32 %v763
    %vm785 = vweird.f32 %v779
    %vm786 = vmor %vm784, %vm785
    %v787 = vsel %vm786, %v779, %v783
    %v788 = vand.u32 2147483647, %v763
    %vm789 = vcmp.eq.f32.partialorder %v788, 8.507059e+37
    %v790 = vand.u32 %v763, 2147483648
    %v791 = vor.u32 1.1754944e-38, %v790
    %v792 = vsel %vm789, %v791, %v787
    %v793 = vmul.f32 1.0, %v792
    %v794 = vmul.f32 %v738, %v609
    %v795 = vmul.f32 %v753, %v610
    %v796 = vmul.f32 %v738, %v754
    %v797 = vmul.f32 %v753, %v755
    %800 = vrot.lane.b32.xlu0 %v796, 64
    %v801 = vpop.permute.xlu0 %800
    %802 = vrot.lane.b32.xlu0 %v797, 64
    %v803 = vpop.permute.xlu0 %802
    %v806 = vadd.f32 %v794, %v801
    %v807 = vadd.f32 %v795, %v803
    %v808 = vtanh.pop %v806
    %v809 = vtanh.pop %v807
    %v810 = vmul.f32 %v778, %v808
    %v811 = vmul.f32 %v793, %v809
    %814 = vrot.lane.b32.xlu0 %v810, 64
    %v815 = vpop.permute.xlu0 %814
    %816 = vrot.lane.b32.xlu0 %v811, 64
    %v817 = vpop.permute.xlu0 %816
    %820 = vst.msk [vmem:[#allocation3 + $0x10] sm:$0xff] %vm483, %v815
    %821 = vst.msk [vmem:[#allocation3 + $0x18] sm:$0xff] %vm483, %v817
    %v822 = vld [vmem:[#allocation2 + $0x40] sm:$0xff]
    %v823 = vld [vmem:[#allocation2 + $0x48] sm:$0xff]
    %v824 = vld [vmem:[#allocation2 + $0x50] sm:$0xff]
    %v825 = vld [vmem:[#allocation2 + $0x58] sm:$0xff]
    %v826 = vpack.c.bf16 %v811, %v810
    %v827 = vld [vmem:[%s2] sm:$0xff]
    %v828 = vld [vmem:[%s2 + $0x8] sm:$0xff]
    %v829 = vld [vmem:[%s2 + $0x10] sm:$0xff]
    %v830 = vld [vmem:[%s2 + $0x18] sm:$0xff]
    %v831 = vld [vmem:[%s2 + $0x20] sm:$0xff]
    %v832 = vld [vmem:[%s2 + $0x28] sm:$0xff]
    %v833 = vld [vmem:[%s2 + $0x30] sm:$0xff]
    %v834 = vld [vmem:[%s2 + $0x38] sm:$0xff]
    %836 = vrot.lane.b32.xlu0 %v826, 64
    %v837 = vpop.permute.xlu0 %836
    %v846 = vunpack.c.l.b16 %v827
    %v847 = vunpack.c.h.b16 %v827
    %v848 = vunpack.c.l.b16 %v828
    %v849 = vunpack.c.h.b16 %v828
    %v850 = vunpack.c.l.b16 %v829
    %v851 = vunpack.c.h.b16 %v829
    %v852 = vunpack.c.l.b16 %v830
    %v853 = vunpack.c.h.b16 %v830
    %v854 = vunpack.c.l.b16 %v831
    %v855 = vunpack.c.h.b16 %v831
    %v856 = vunpack.c.l.b16 %v832
    %v857 = vunpack.c.h.b16 %v832
    %v858 = vunpack.c.l.b16 %v833
    %v859 = vunpack.c.h.b16 %v833
    %v860 = vunpack.c.l.b16 %v834
    %v861 = vunpack.c.h.b16 %v834
    %v862 = vpack.c.b16 %v848, %v846
    %v863 = vpack.c.b16 %v849, %v847
    %v864 = vpack.c.b16 %v852, %v850
    %v865 = vpack.c.b16 %v853, %v851
    %v866 = vpack.c.b16 %v856, %v854
    %v867 = vpack.c.b16 %v857, %v855
    %v868 = vpack.c.b16 %v860, %v858
    %v869 = vpack.c.b16 %v861, %v859
    %v879 = vsel %vm483, %v837, 0
    %881 = vmatpush.bf16.msra.mxu0 0
    %882 = vmatpush.bf16.msra.mxu0 0
    %883 = vmatpush.bf16.msra.mxu0 0
    %884 = vmatpush.bf16.msra.mxu0 0
    %885 = vmatpush.bf16.msra.mxu0 %v868
    %886 = vmatpush.bf16.msra.mxu0 %v866
    %887 = vmatpush.bf16.msra.mxu0 %v864
    %888 = vmatpush.bf16.msra.mxu0 %v862
    %889 = vmatmul.bf16.gmra.mxu0 %v879
    %v890 = vpop.f32.mrf.mxu0
    %v891 = vadd.f32 0.0, %v890
    %v892 = vpop.f32.mrf.mxu0
    %v893 = vadd.f32 0.0, %v892
    %894 = vdwg.mxu0
    %895 = vmatpush.bf16.msra.mxu0 0
    %896 = vmatpush.bf16.msra.mxu0 0
    %897 = vmatpush.bf16.msra.mxu0 0
    %898 = vmatpush.bf16.msra.mxu0 0
    %899 = vmatpush.bf16.msra.mxu0 %v869
    %900 = vmatpush.bf16.msra.mxu0 %v867
    %901 = vmatpush.bf16.msra.mxu0 %v865
    %902 = vmatpush.bf16.msra.mxu0 %v863
    %903 = vmatmul.bf16.gmra.mxu0 %v879
    %v904 = vpop.f32.mrf.mxu0
    %v905 = vadd.f32 0.0, %v904
    %v906 = vpop.f32.mrf.mxu0
    %v907 = vadd.f32 0.0, %v906
    %908 = vdwg.mxu0
    %v909 = vadd.f32 %v822, %v891
    %v910 = vadd.f32 %v823, %v905
    %v911 = vadd.f32 %v824, %v893
    %v912 = vadd.f32 %v825, %v907
    %v913 = vxor.u32 %v909, 2147483648
    %v914 = vxor.u32 %v911, 2147483648
    %v915 = vmul.f32 %v913, 1.442695
    %v916 = vpow.pop %v915
    %v917 = vmul.f32 %v914, 1.442695
    %v918 = vpow.pop %v917
    %v919 = vadd.f32 %v916, 1.0
    %v920 = vadd.f32 %v918, 1.0
    %v921 = vrcp.pop %v919
    %v922 = vmul.f32 %v919, %v921
    %v923 = vsub.f32 1.0, %v922
    %v924 = vmul.f32 %v921, %v923
    %v925 = vadd.f32 %v921, %v924
    %vm926 = vweird.f32 %v919
    %vm927 = vweird.f32 %v921
    %vm928 = vmor %vm926, %vm927
    %v929 = vsel %vm928, %v921, %v925
    %v930 = vand.u32 2147483647, %v919
    %vm931 = vcmp.eq.f32.partialorder %v930, 8.507059e+37
    %v932 = vand.u32 %v919, 2147483648
    %v933 = vor.u32 1.1754944e-38, %v932
    %v934 = vsel %vm931, %v933, %v929
    %v935 = vmul.f32 1.0, %v934
    %v936 = vrcp.pop %v920
    %v937 = vmul.f32 %v920, %v936
    %v938 = vsub.f32 1.0, %v937
    %v939 = vmul.f32 %v936, %v938
    %v940 = vadd.f32 %v936, %v939
    %vm941 = vweird.f32 %v920
    %vm942 = vweird.f32 %v936
    %vm943 = vmor %vm941, %vm942
    %v944 = vsel %vm943, %v936, %v940
    %v945 = vand.u32 2147483647, %v920
    %vm946 = vcmp.eq.f32.partialorder %v945, 8.507059e+37
    %v947 = vand.u32 %v920, 2147483648
    %v948 = vor.u32 1.1754944e-38, %v947
    %v949 = vsel %vm946, %v948, %v944
    %v950 = vmul.f32 1.0, %v949
    %v951 = vtanh.pop %v910
    %v952 = vtanh.pop %v912
    %v953 = vxor.u32 %v910, 2147483648
    %v954 = vxor.u32 %v912, 2147483648
    %v955 = vmul.f32 %v953, 1.442695
    %v956 = vpow.pop %v955
    %v957 = vmul.f32 %v954, 1.442695
    %v958 = vpow.pop %v957
    %v959 = vadd.f32 %v956, 1.0
    %v960 = vadd.f32 %v958, 1.0
    %v961 = vrcp.pop %v959
    %v962 = vmul.f32 %v959, %v961
    %v963 = vsub.f32 1.0, %v962
    %v964 = vmul.f32 %v961, %v963
    %v965 = vadd.f32 %v961, %v964
    %vm966 = vweird.f32 %v959
    %vm967 = vweird.f32 %v961
    %vm968 = vmor %vm966, %vm967
    %v969 = vsel %vm968, %v961, %v965
    %v970 = vand.u32 2147483647, %v959
    %vm971 = vcmp.eq.f32.partialorder %v970, 8.507059e+37
    %v972 = vand.u32 %v959, 2147483648
    %v973 = vor.u32 1.1754944e-38, %v972
    %v974 = vsel %vm971, %v973, %v969
    %v975 = vmul.f32 1.0, %v974
    %v976 = vrcp.pop %v960
    %v977 = vmul.f32 %v960, %v976
    %v978 = vsub.f32 1.0, %v977
    %v979 = vmul.f32 %v976, %v978
    %v980 = vadd.f32 %v976, %v979
    %vm981 = vweird.f32 %v960
    %vm982 = vweird.f32 %v976
    %vm983 = vmor %vm981, %vm982
    %v984 = vsel %vm983, %v976, %v980
    %v985 = vand.u32 2147483647, %v960
    %vm986 = vcmp.eq.f32.partialorder %v985, 8.507059e+37
    %v987 = vand.u32 %v960, 2147483648
    %v988 = vor.u32 1.1754944e-38, %v987
    %v989 = vsel %vm986, %v988, %v984
    %v990 = vmul.f32 1.0, %v989
    %v991 = vmul.f32 %v935, %v806
    %v992 = vmul.f32 %v950, %v807
    %v993 = vmul.f32 %v935, %v951
    %v994 = vmul.f32 %v950, %v952
    %997 = vrot.lane.b32.xlu0 %v993, 64
    %v998 = vpop.permute.xlu0 %997
    %999 = vrot.lane.b32.xlu0 %v994, 64
    %v1000 = vpop.permute.xlu0 %999
    %v1003 = vadd.f32 %v991, %v998
    %v1004 = vadd.f32 %v992, %v1000
    %v1005 = vtanh.pop %v1003
    %v1006 = vtanh.pop %v1004
    %v1007 = vmul.f32 %v975, %v1005
    %v1008 = vmul.f32 %v990, %v1006
    %1011 = vrot.lane.b32.xlu0 %v1007, 64
    %v1012 = vpop.permute.xlu0 %1011
    %1013 = vrot.lane.b32.xlu0 %v1008, 64
    %v1014 = vpop.permute.xlu0 %1013
    %1017 = vst.msk [vmem:[#allocation3 + $0x20] sm:$0xff] %vm483, %v1012
    %1018 = vst.msk [vmem:[#allocation3 + $0x28] sm:$0xff] %vm483, %v1014
    %v1019 = vld [vmem:[#allocation2 + $0x60] sm:$0xff]
    %v1020 = vld [vmem:[#allocation2 + $0x68] sm:$0xff]
    %v1021 = vld [vmem:[#allocation2 + $0x70] sm:$0xff]
    %v1022 = vld [vmem:[#allocation2 + $0x78] sm:$0xff]
    %v1023 = vpack.c.bf16 %v1008, %v1007
    %v1024 = vld [vmem:[%s2] sm:$0xff]
    %v1025 = vld [vmem:[%s2 + $0x8] sm:$0xff]
    %v1026 = vld [vmem:[%s2 + $0x10] sm:$0xff]
    %v1027 = vld [vmem:[%s2 + $0x18] sm:$0xff]
    %v1028 = vld [vmem:[%s2 + $0x20] sm:$0xff]
    %v1029 = vld [vmem:[%s2 + $0x28] sm:$0xff]
    %v1030 = vld [vmem:[%s2 + $0x30] sm:$0xff]
    %v1031 = vld [vmem:[%s2 + $0x38] sm:$0xff]
    %1033 = vrot.lane.b32.xlu0 %v1023, 64
    %v1034 = vpop.permute.xlu0 %1033
    %v1043 = vunpack.c.l.b16 %v1024
    %v1044 = vunpack.c.h.b16 %v1024
    %v1045 = vunpack.c.l.b16 %v1025
    %v1046 = vunpack.c.h.b16 %v1025
    %v1047 = vunpack.c.l.b16 %v1026
    %v1048 = vunpack.c.h.b16 %v1026
    %v1049 = vunpack.c.l.b16 %v1027
    %v1050 = vunpack.c.h.b16 %v1027
    %v1051 = vunpack.c.l.b16 %v1028
    %v1052 = vunpack.c.h.b16 %v1028
    %v1053 = vunpack.c.l.b16 %v1029
    %v1054 = vunpack.c.h.b16 %v1029
    %v1055 = vunpack.c.l.b16 %v1030
    %v1056 = vunpack.c.h.b16 %v1030
    %v1057 = vunpack.c.l.b16 %v1031
    %v1058 = vunpack.c.h.b16 %v1031
    %v1059 = vpack.c.b16 %v1045, %v1043
    %v1060 = vpack.c.b16 %v1046, %v1044
    %v1061 = vpack.c.b16 %v1049, %v1047
    %v1062 = vpack.c.b16 %v1050, %v1048
    %v1063 = vpack.c.b16 %v1053, %v1051
    %v1064 = vpack.c.b16 %v1054, %v1052
    %v1065 = vpack.c.b16 %v1057, %v1055
    %v1066 = vpack.c.b16 %v1058, %v1056
    %v1076 = vsel %vm483, %v1034, 0
    %1078 = vmatpush.bf16.msra.mxu0 0
    %1079 = vmatpush.bf16.msra.mxu0 0
    %1080 = vmatpush.bf16.msra.mxu0 0
    %1081 = vmatpush.bf16.msra.mxu0 0
    %1082 = vmatpush.bf16.msra.mxu0 %v1065
    %1083 = vmatpush.bf16.msra.mxu0 %v1063
    %1084 = vmatpush.bf16.msra.mxu0 %v1061
    %1085 = vmatpush.bf16.msra.mxu0 %v1059
    %1086 = vmatmul.bf16.gmra.mxu0 %v1076
    %v1087 = vpop.f32.mrf.mxu0
    %v1088 = vadd.f32 0.0, %v1087
    %v1089 = vpop.f32.mrf.mxu0
    %v1090 = vadd.f32 0.0, %v1089
    %1091 = vdwg.mxu0
    %1092 = vmatpush.bf16.msra.mxu0 0
    %1093 = vmatpush.bf16.msra.mxu0 0
    %1094 = vmatpush.bf16.msra.mxu0 0
    %1095 = vmatpush.bf16.msra.mxu0 0
    %1096 = vmatpush.bf16.msra.mxu0 %v1066
    %1097 = vmatpush.bf16.msra.mxu0 %v1064
    %1098 = vmatpush.bf16.msra.mxu0 %v1062
    %1099 = vmatpush.bf16.msra.mxu0 %v1060
    %1100 = vmatmul.bf16.gmra.mxu0 %v1076
    %v1101 = vpop.f32.mrf.mxu0
    %v1102 = vadd.f32 0.0, %v1101
    %v1103 = vpop.f32.mrf.mxu0
    %v1104 = vadd.f32 0.0, %v1103
    %1105 = vdwg.mxu0
    %v1106 = vadd.f32 %v1019, %v1088
    %v1107 = vadd.f32 %v1020, %v1102
    %v1108 = vadd.f32 %v1021, %v1090
    %v1109 = vadd.f32 %v1022, %v1104
    %v1110 = vxor.u32 %v1106, 2147483648
    %v1111 = vxor.u32 %v1108, 2147483648
    %v1112 = vmul.f32 %v1110, 1.442695
    %v1113 = vpow.pop %v1112
    %v1114 = vmul.f32 %v1111, 1.442695
    %v1115 = vpow.pop %v1114
    %v1116 = vadd.f32 %v1113, 1.0
    %v1117 = vadd.f32 %v1115, 1.0
    %v1118 = vrcp.pop %v1116
    %v1119 = vmul.f32 %v1116, %v1118
    %v1120 = vsub.f32 1.0, %v1119
    %v1121 = vmul.f32 %v1118, %v1120
    %v1122 = vadd.f32 %v1118, %v1121
    %vm1123 = vweird.f32 %v1116
    %vm1124 = vweird.f32 %v1118
    %vm1125 = vmor %vm1123, %vm1124
    %v1126 = vsel %vm1125, %v1118, %v1122
    %v1127 = vand.u32 2147483647, %v1116
    %vm1128 = vcmp.eq.f32.partialorder %v1127, 8.507059e+37
    %v1129 = vand.u32 %v1116, 2147483648
    %v1130 = vor.u32 1.1754944e-38, %v1129
    %v1131 = vsel %vm1128, %v1130, %v1126
    %v1132 = vmul.f32 1.0, %v1131
    %v1133 = vrcp.pop %v1117
    %v1134 = vmul.f32 %v1117, %v1133
    %v1135 = vsub.f32 1.0, %v1134
    %v1136 = vmul.f32 %v1133, %v1135
    %v1137 = vadd.f32 %v1133, %v1136
    %vm1138 = vweird.f32 %v1117
    %vm1139 = vweird.f32 %v1133
    %vm1140 = vmor %vm1138, %vm1139
    %v1141 = vsel %vm1140, %v1133, %v1137
    %v1142 = vand.u32 2147483647, %v1117
    %vm1143 = vcmp.eq.f32.partialorder %v1142, 8.507059e+37
    %v1144 = vand.u32 %v1117, 2147483648
    %v1145 = vor.u32 1.1754944e-38, %v1144
    %v1146 = vsel %vm1143, %v1145, %v1141
    %v1147 = vmul.f32 1.0, %v1146
    %v1148 = vtanh.pop %v1107
    %v1149 = vtanh.pop %v1109
    %v1150 = vxor.u32 %v1107, 2147483648
    %v1151 = vxor.u32 %v1109, 2147483648
    %v1152 = vmul.f32 %v1150, 1.442695
    %v1153 = vpow.pop %v1152
    %v1154 = vmul.f32 %v1151, 1.442695
    %v1155 = vpow.pop %v1154
    %v1156 = vadd.f32 %v1153, 1.0
    %v1157 = vadd.f32 %v1155, 1.0
    %v1158 = vrcp.pop %v1156
    %v1159 = vmul.f32 %v1156, %v1158
    %v1160 = vsub.f32 1.0, %v1159
    %v1161 = vmul.f32 %v1158, %v1160
    %v1162 = vadd.f32 %v1158, %v1161
    %vm1163 = vweird.f32 %v1156
    %vm1164 = vweird.f32 %v1158
    %vm1165 = vmor %vm1163, %vm1164
    %v1166 = vsel %vm1165, %v1158, %v1162
    %v1167 = vand.u32 2147483647, %v1156
    %vm1168 = vcmp.eq.f32.partialorder %v1167, 8.507059e+37
    %v1169 = vand.u32 %v1156, 2147483648
    %v1170 = vor.u32 1.1754944e-38, %v1169
    %v1171 = vsel %vm1168, %v1170, %v1166
    %v1172 = vmul.f32 1.0, %v1171
    %v1173 = vrcp.pop %v1157
    %v1174 = vmul.f32 %v1157, %v1173
    %v1175 = vsub.f32 1.0, %v1174
    %v1176 = vmul.f32 %v1173, %v1175
    %v1177 = vadd.f32 %v1173, %v1176
    %vm1178 = vweird.f32 %v1157
    %vm1179 = vweird.f32 %v1173
    %vm1180 = vmor %vm1178, %vm1179
    %v1181 = vsel %vm1180, %v1173, %v1177
    %v1182 = vand.u32 2147483647, %v1157
    %vm1183 = vcmp.eq.f32.partialorder %v1182, 8.507059e+37
    %v1184 = vand.u32 %v1157, 2147483648
    %v1185 = vor.u32 1.1754944e-38, %v1184
    %v1186 = vsel %vm1183, %v1185, %v1181
    %v1187 = vmul.f32 1.0, %v1186
    %v1188 = vmul.f32 %v1132, %v1003
    %v1189 = vmul.f32 %v1147, %v1004
    %v1190 = vmul.f32 %v1132, %v1148
    %v1191 = vmul.f32 %v1147, %v1149
    %1194 = vrot.lane.b32.xlu0 %v1190, 64
    %v1195 = vpop.permute.xlu0 %1194
    %1196 = vrot.lane.b32.xlu0 %v1191, 64
    %v1197 = vpop.permute.xlu0 %1196
    %v1200 = vadd.f32 %v1188, %v1195
    %v1201 = vadd.f32 %v1189, %v1197
    %v1202 = vtanh.pop %v1200
    %v1203 = vtanh.pop %v1201
    %v1204 = vmul.f32 %v1172, %v1202
    %v1205 = vmul.f32 %v1187, %v1203
    %1208 = vrot.lane.b32.xlu0 %v1204, 64
    %v1209 = vpop.permute.xlu0 %1208
    %1210 = vrot.lane.b32.xlu0 %v1205, 64
    %v1211 = vpop.permute.xlu0 %1210
    %1214 = vst.msk [vmem:[#allocation3 + $0x30] sm:$0xff] %vm483, %v1209
    %1215 = vst.msk [vmem:[#allocation3 + $0x38] sm:$0xff] %vm483, %v1211
    %v1216 = vld [vmem:[#allocation2 + $0x80] sm:$0xff]
    %v1217 = vld [vmem:[#allocation2 + $0x88] sm:$0xff]
    %v1218 = vld [vmem:[#allocation2 + $0x90] sm:$0xff]
    %v1219 = vld [vmem:[#allocation2 + $0x98] sm:$0xff]
    %v1220 = vpack.c.bf16 %v1205, %v1204
    %v1221 = vld [vmem:[%s2] sm:$0xff]
    %v1222 = vld [vmem:[%s2 + $0x8] sm:$0xff]
    %v1223 = vld [vmem:[%s2 + $0x10] sm:$0xff]
    %v1224 = vld [vmem:[%s2 + $0x18] sm:$0xff]
    %v1225 = vld [vmem:[%s2 + $0x20] sm:$0xff]
    %v1226 = vld [vmem:[%s2 + $0x28] sm:$0xff]
    %v1227 = vld [vmem:[%s2 + $0x30] sm:$0xff]
    %v1228 = vld [vmem:[%s2 + $0x38] sm:$0xff]
    %1230 = vrot.lane.b32.xlu0 %v1220, 64
    %v1231 = vpop.permute.xlu0 %1230
    %v1240 = vunpack.c.l.b16 %v1221
    %v1241 = vunpack.c.h.b16 %v1221
    %v1242 = vunpack.c.l.b16 %v1222
    %v1243 = vunpack.c.h.b16 %v1222
    %v1244 = vunpack.c.l.b16 %v1223
    %v1245 = vunpack.c.h.b16 %v1223
    %v1246 = vunpack.c.l.b16 %v1224
    %v1247 = vunpack.c.h.b16 %v1224
    %v1248 = vunpack.c.l.b16 %v1225
    %v1249 = vunpack.c.h.b16 %v1225
    %v1250 = vunpack.c.l.b16 %v1226
    %v1251 = vunpack.c.h.b16 %v1226
    %v1252 = vunpack.c.l.b16 %v1227
    %v1253 = vunpack.c.h.b16 %v1227
    %v1254 = vunpack.c.l.b16 %v1228
    %v1255 = vunpack.c.h.b16 %v1228
    %v1256 = vpack.c.b16 %v1242, %v1240
    %v1257 = vpack.c.b16 %v1243, %v1241
    %v1258 = vpack.c.b16 %v1246, %v1244
    %v1259 = vpack.c.b16 %v1247, %v1245
    %v1260 = vpack.c.b16 %v1250, %v1248
    %v1261 = vpack.c.b16 %v1251, %v1249
    %v1262 = vpack.c.b16 %v1254, %v1252
    %v1263 = vpack.c.b16 %v1255, %v1253
    %v1273 = vsel %vm483, %v1231, 0
    %1275 = vmatpush.bf16.msra.mxu0 0
    %1276 = vmatpush.bf16.msra.mxu0 0
    %1277 = vmatpush.bf16.msra.mxu0 0
    %1278 = vmatpush.bf16.msra.mxu0 0
    %1279 = vmatpush.bf16.msra.mxu0 %v1262
    %1280 = vmatpush.bf16.msra.mxu0 %v1260
    %1281 = vmatpush.bf16.msra.mxu0 %v1258
    %1282 = vmatpush.bf16.msra.mxu0 %v1256
    %1283 = vmatmul.bf16.gmra.mxu0 %v1273
    %v1284 = vpop.f32.mrf.mxu0
    %v1285 = vadd.f32 0.0, %v1284
    %v1286 = vpop.f32.mrf.mxu0
    %v1287 = vadd.f32 0.0, %v1286
    %1288 = vdwg.mxu0
    %1289 = vmatpush.bf16.msra.mxu0 0
    %1290 = vmatpush.bf16.msra.mxu0 0
    %1291 = vmatpush.bf16.msra.mxu0 0
    %1292 = vmatpush.bf16.msra.mxu0 0
    %1293 = vmatpush.bf16.msra.mxu0 %v1263
    %1294 = vmatpush.bf16.msra.mxu0 %v1261
    %1295 = vmatpush.bf16.msra.mxu0 %v1259
    %1296 = vmatpush.bf16.msra.mxu0 %v1257
    %1297 = vmatmul.bf16.gmra.mxu0 %v1273
    %v1298 = vpop.f32.mrf.mxu0
    %v1299 = vadd.f32 0.0, %v1298
    %v1300 = vpop.f32.mrf.mxu0
    %v1301 = vadd.f32 0.0, %v1300
    %1302 = vdwg.mxu0
    %v1303 = vadd.f32 %v1216, %v1285
    %v1304 = vadd.f32 %v1217, %v1299
    %v1305 = vadd.f32 %v1218, %v1287
    %v1306 = vadd.f32 %v1219, %v1301
    %v1307 = vxor.u32 %v1303, 2147483648
    %v1308 = vxor.u32 %v1305, 2147483648
    %v1309 = vmul.f32 %v1307, 1.442695
    %v1310 = vpow.pop %v1309
    %v1311 = vmul.f32 %v1308, 1.442695
    %v1312 = vpow.pop %v1311
    %v1313 = vadd.f32 %v1310, 1.0
    %v1314 = vadd.f32 %v1312, 1.0
    %v1315 = vrcp.pop %v1313
    %v1316 = vmul.f32 %v1313, %v1315
    %v1317 = vsub.f32 1.0, %v1316
    %v1318 = vmul.f32 %v1315, %v1317
    %v1319 = vadd.f32 %v1315, %v1318
    %vm1320 = vweird.f32 %v1313
    %vm1321 = vweird.f32 %v1315
    %vm1322 = vmor %vm1320, %vm1321
    %v1323 = vsel %vm1322, %v1315, %v1319
    %v1324 = vand.u32 2147483647, %v1313
    %vm1325 = vcmp.eq.f32.partialorder %v1324, 8.507059e+37
    %v1326 = vand.u32 %v1313, 2147483648
    %v1327 = vor.u32 1.1754944e-38, %v1326
    %v1328 = vsel %vm1325, %v1327, %v1323
    %v1329 = vmul.f32 1.0, %v1328
    %v1330 = vrcp.pop %v1314
    %v1331 = vmul.f32 %v1314, %v1330
    %v1332 = vsub.f32 1.0, %v1331
    %v1333 = vmul.f32 %v1330, %v1332
    %v1334 = vadd.f32 %v1330, %v1333
    %vm1335 = vweird.f32 %v1314
    %vm1336 = vweird.f32 %v1330
    %vm1337 = vmor %vm1335, %vm1336
    %v1338 = vsel %vm1337, %v1330, %v1334
    %v1339 = vand.u32 2147483647, %v1314
    %vm1340 = vcmp.eq.f32.partialorder %v1339, 8.507059e+37
    %v1341 = vand.u32 %v1314, 2147483648
    %v1342 = vor.u32 1.1754944e-38, %v1341
    %v1343 = vsel %vm1340, %v1342, %v1338
    %v1344 = vmul.f32 1.0, %v1343
    %v1345 = vtanh.pop %v1304
    %v1346 = vtanh.pop %v1306
    %v1347 = vxor.u32 %v1304, 2147483648
    %v1348 = vxor.u32 %v1306, 2147483648
    %v1349 = vmul.f32 %v1347, 1.442695
    %v1350 = vpow.pop %v1349
    %v1351 = vmul.f32 %v1348, 1.442695
    %v1352 = vpow.pop %v1351
    %v1353 = vadd.f32 %v1350, 1.0
    %v1354 = vadd.f32 %v1352, 1.0
    %v1355 = vrcp.pop %v1353
    %v1356 = vmul.f32 %v1353, %v1355
    %v1357 = vsub.f32 1.0, %v1356
    %v1358 = vmul.f32 %v1355, %v1357
    %v1359 = vadd.f32 %v1355, %v1358
    %vm1360 = vweird.f32 %v1353
    %vm1361 = vweird.f32 %v1355
    %vm1362 = vmor %vm1360, %vm1361
    %v1363 = vsel %vm1362, %v1355, %v1359
    %v1364 = vand.u32 2147483647, %v1353
    %vm1365 = vcmp.eq.f32.partialorder %v1364, 8.507059e+37
    %v1366 = vand.u32 %v1353, 2147483648
    %v1367 = vor.u32 1.1754944e-38, %v1366
    %v1368 = vsel %vm1365, %v1367, %v1363
    %v1369 = vmul.f32 1.0, %v1368
    %v1370 = vrcp.pop %v1354
    %v1371 = vmul.f32 %v1354, %v1370
    %v1372 = vsub.f32 1.0, %v1371
    %v1373 = vmul.f32 %v1370, %v1372
    %v1374 = vadd.f32 %v1370, %v1373
    %vm1375 = vweird.f32 %v1354
    %vm1376 = vweird.f32 %v1370
    %vm1377 = vmor %vm1375, %vm1376
    %v1378 = vsel %vm1377, %v1370, %v1374
    %v1379 = vand.u32 2147483647, %v1354
    %vm1380 = vcmp.eq.f32.partialorder %v1379, 8.507059e+37
    %v1381 = vand.u32 %v1354, 2147483648
    %v1382 = vor.u32 1.1754944e-38, %v1381
    %v1383 = vsel %vm1380, %v1382, %v1378
    %v1384 = vmul.f32 1.0, %v1383
    %v1385 = vmul.f32 %v1329, %v1200
    %v1386 = vmul.f32 %v1344, %v1201
    %v1387 = vmul.f32 %v1329, %v1345
    %v1388 = vmul.f32 %v1344, %v1346
    %1391 = vrot.lane.b32.xlu0 %v1387, 64
    %v1392 = vpop.permute.xlu0 %1391
    %1393 = vrot.lane.b32.xlu0 %v1388, 64
    %v1394 = vpop.permute.xlu0 %1393
    %v1397 = vadd.f32 %v1385, %v1392
    %v1398 = vadd.f32 %v1386, %v1394
    %v1399 = vtanh.pop %v1397
    %v1400 = vtanh.pop %v1398
    %v1401 = vmul.f32 %v1369, %v1399
    %v1402 = vmul.f32 %v1384, %v1400
    %1405 = vrot.lane.b32.xlu0 %v1401, 64
    %v1406 = vpop.permute.xlu0 %1405
    %1407 = vrot.lane.b32.xlu0 %v1402, 64
    %v1408 = vpop.permute.xlu0 %1407
    %1411 = vst.msk [vmem:[#allocation3 + $0x40] sm:$0xff] %vm483, %v1406
    %1412 = vst.msk [vmem:[#allocation3 + $0x48] sm:$0xff] %vm483, %v1408
    %v1413 = vld [vmem:[#allocation2 + $0xa0] sm:$0xff]
    %v1414 = vld [vmem:[#allocation2 + $0xa8] sm:$0xff]
    %v1415 = vld [vmem:[#allocation2 + $0xb0] sm:$0xff]
    %v1416 = vld [vmem:[#allocation2 + $0xb8] sm:$0xff]
    %v1417 = vpack.c.bf16 %v1402, %v1401
    %v1418 = vld [vmem:[%s2] sm:$0xff]
    %v1419 = vld [vmem:[%s2 + $0x8] sm:$0xff]
    %v1420 = vld [vmem:[%s2 + $0x10] sm:$0xff]
    %v1421 = vld [vmem:[%s2 + $0x18] sm:$0xff]
    %v1422 = vld [vmem:[%s2 + $0x20] sm:$0xff]
    %v1423 = vld [vmem:[%s2 + $0x28] sm:$0xff]
    %v1424 = vld [vmem:[%s2 + $0x30] sm:$0xff]
    %v1425 = vld [vmem:[%s2 + $0x38] sm:$0xff]
    %1427 = vrot.lane.b32.xlu0 %v1417, 64
    %v1428 = vpop.permute.xlu0 %1427
    %v1437 = vunpack.c.l.b16 %v1418
    %v1438 = vunpack.c.h.b16 %v1418
    %v1439 = vunpack.c.l.b16 %v1419
    %v1440 = vunpack.c.h.b16 %v1419
    %v1441 = vunpack.c.l.b16 %v1420
    %v1442 = vunpack.c.h.b16 %v1420
    %v1443 = vunpack.c.l.b16 %v1421
    %v1444 = vunpack.c.h.b16 %v1421
    %v1445 = vunpack.c.l.b16 %v1422
    %v1446 = vunpack.c.h.b16 %v1422
    %v1447 = vunpack.c.l.b16 %v1423
    %v1448 = vunpack.c.h.b16 %v1423
    %v1449 = vunpack.c.l.b16 %v1424
    %v1450 = vunpack.c.h.b16 %v1424
    %v1451 = vunpack.c.l.b16 %v1425
    %v1452 = vunpack.c.h.b16 %v1425
    %v1453 = vpack.c.b16 %v1439, %v1437
    %v1454 = vpack.c.b16 %v1440, %v1438
    %v1455 = vpack.c.b16 %v1443, %v1441
    %v1456 = vpack.c.b16 %v1444, %v1442
    %v1457 = vpack.c.b16 %v1447, %v1445
    %v1458 = vpack.c.b16 %v1448, %v1446
    %v1459 = vpack.c.b16 %v1451, %v1449
    %v1460 = vpack.c.b16 %v1452, %v1450
    %v1470 = vsel %vm483, %v1428, 0
    %1472 = vmatpush.bf16.msra.mxu0 0
    %1473 = vmatpush.bf16.msra.mxu0 0
    %1474 = vmatpush.bf16.msra.mxu0 0
    %1475 = vmatpush.bf16.msra.mxu0 0
    %1476 = vmatpush.bf16.msra.mxu0 %v1459
    %1477 = vmatpush.bf16.msra.mxu0 %v1457
    %1478 = vmatpush.bf16.msra.mxu0 %v1455
    %1479 = vmatpush.bf16.msra.mxu0 %v1453
    %1480 = vmatmul.bf16.gmra.mxu0 %v1470
    %v1481 = vpop.f32.mrf.mxu0
    %v1482 = vadd.f32 0.0, %v1481
    %v1483 = vpop.f32.mrf.mxu0
    %v1484 = vadd.f32 0.0, %v1483
    %1485 = vdwg.mxu0
    %1486 = vmatpush.bf16.msra.mxu0 0
    %1487 = vmatpush.bf16.msra.mxu0 0
    %1488 = vmatpush.bf16.msra.mxu0 0
    %1489 = vmatpush.bf16.msra.mxu0 0
    %1490 = vmatpush.bf16.msra.mxu0 %v1460
    %1491 = vmatpush.bf16.msra.mxu0 %v1458
    %1492 = vmatpush.bf16.msra.mxu0 %v1456
    %1493 = vmatpush.bf16.msra.mxu0 %v1454
    %1494 = vmatmul.bf16.gmra.mxu0 %v1470
    %v1495 = vpop.f32.mrf.mxu0
    %v1496 = vadd.f32 0.0, %v1495
    %v1497 = vpop.f32.mrf.mxu0
    %v1498 = vadd.f32 0.0, %v1497
    %1499 = vdwg.mxu0
    %v1500 = vadd.f32 %v1413, %v1482
    %v1501 = vadd.f32 %v1414, %v1496
    %v1502 = vadd.f32 %v1415, %v1484
    %v1503 = vadd.f32 %v1416, %v1498
    %v1504 = vxor.u32 %v1500, 2147483648
    %v1505 = vxor.u32 %v1502, 2147483648
    %v1506 = vmul.f32 %v1504, 1.442695
    %v1507 = vpow.pop %v1506
    %v1508 = vmul.f32 %v1505, 1.442695
    %v1509 = vpow.pop %v1508
    %v1510 = vadd.f32 %v1507, 1.0
    %v1511 = vadd.f32 %v1509, 1.0
    %v1512 = vrcp.pop %v1510
    %v1513 = vmul.f32 %v1510, %v1512
    %v1514 = vsub.f32 1.0, %v1513
    %v1515 = vmul.f32 %v1512, %v1514
    %v1516 = vadd.f32 %v1512, %v1515
    %vm1517 = vweird.f32 %v1510
    %vm1518 = vweird.f32 %v1512
    %vm1519 = vmor %vm1517, %vm1518
    %v1520 = vsel %vm1519, %v1512, %v1516
    %v1521 = vand.u32 2147483647, %v1510
    %vm1522 = vcmp.eq.f32.partialorder %v1521, 8.507059e+37
    %v1523 = vand.u32 %v1510, 2147483648
    %v1524 = vor.u32 1.1754944e-38, %v1523
    %v1525 = vsel %vm1522, %v1524, %v1520
    %v1526 = vmul.f32 1.0, %v1525
    %v1527 = vrcp.pop %v1511
    %v1528 = vmul.f32 %v1511, %v1527
    %v1529 = vsub.f32 1.0, %v1528
    %v1530 = vmul.f32 %v1527, %v1529
    %v1531 = vadd.f32 %v1527, %v1530
    %vm1532 = vweird.f32 %v1511
    %vm1533 = vweird.f32 %v1527
    %vm1534 = vmor %vm1532, %vm1533
    %v1535 = vsel %vm1534, %v1527, %v1531
    %v1536 = vand.u32 2147483647, %v1511
    %vm1537 = vcmp.eq.f32.partialorder %v1536, 8.507059e+37
    %v1538 = vand.u32 %v1511, 2147483648
    %v1539 = vor.u32 1.1754944e-38, %v1538
    %v1540 = vsel %vm1537, %v1539, %v1535
    %v1541 = vmul.f32 1.0, %v1540
    %v1542 = vtanh.pop %v1501
    %v1543 = vtanh.pop %v1503
    %v1544 = vxor.u32 %v1501, 2147483648
    %v1545 = vxor.u32 %v1503, 2147483648
    %v1546 = vmul.f32 %v1544, 1.442695
    %v1547 = vpow.pop %v1546
    %v1548 = vmul.f32 %v1545, 1.442695
    %v1549 = vpow.pop %v1548
    %v1550 = vadd.f32 %v1547, 1.0
    %v1551 = vadd.f32 %v1549, 1.0
    %v1552 = vrcp.pop %v1550
    %v1553 = vmul.f32 %v1550, %v1552
    %v1554 = vsub.f32 1.0, %v1553
    %v1555 = vmul.f32 %v1552, %v1554
    %v1556 = vadd.f32 %v1552, %v1555
    %vm1557 = vweird.f32 %v1550
    %vm1558 = vweird.f32 %v1552
    %vm1559 = vmor %vm1557, %vm1558
    %v1560 = vsel %vm1559, %v1552, %v1556
    %v1561 = vand.u32 2147483647, %v1550
    %vm1562 = vcmp.eq.f32.partialorder %v1561, 8.507059e+37
    %v1563 = vand.u32 %v1550, 2147483648
    %v1564 = vor.u32 1.1754944e-38, %v1563
    %v1565 = vsel %vm1562, %v1564, %v1560
    %v1566 = vmul.f32 1.0, %v1565
    %v1567 = vrcp.pop %v1551
    %v1568 = vmul.f32 %v1551, %v1567
    %v1569 = vsub.f32 1.0, %v1568
    %v1570 = vmul.f32 %v1567, %v1569
    %v1571 = vadd.f32 %v1567, %v1570
    %vm1572 = vweird.f32 %v1551
    %vm1573 = vweird.f32 %v1567
    %vm1574 = vmor %vm1572, %vm1573
    %v1575 = vsel %vm1574, %v1567, %v1571
    %v1576 = vand.u32 2147483647, %v1551
    %vm1577 = vcmp.eq.f32.partialorder %v1576, 8.507059e+37
    %v1578 = vand.u32 %v1551, 2147483648
    %v1579 = vor.u32 1.1754944e-38, %v1578
    %v1580 = vsel %vm1577, %v1579, %v1575
    %v1581 = vmul.f32 1.0, %v1580
    %v1582 = vmul.f32 %v1526, %v1397
    %v1583 = vmul.f32 %v1541, %v1398
    %v1584 = vmul.f32 %v1526, %v1542
    %v1585 = vmul.f32 %v1541, %v1543
    %1588 = vrot.lane.b32.xlu0 %v1584, 64
    %v1589 = vpop.permute.xlu0 %1588
    %1590 = vrot.lane.b32.xlu0 %v1585, 64
    %v1591 = vpop.permute.xlu0 %1590
    %v1594 = vadd.f32 %v1582, %v1589
    %v1595 = vadd.f32 %v1583, %v1591
    %v1596 = vtanh.pop %v1594
    %v1597 = vtanh.pop %v1595
    %v1598 = vmul.f32 %v1566, %v1596
    %v1599 = vmul.f32 %v1581, %v1597
    %1602 = vrot.lane.b32.xlu0 %v1598, 64
    %v1603 = vpop.permute.xlu0 %1602
    %1604 = vrot.lane.b32.xlu0 %v1599, 64
    %v1605 = vpop.permute.xlu0 %1604
    %1608 = vst.msk [vmem:[#allocation3 + $0x50] sm:$0xff] %vm483, %v1603
    %1609 = vst.msk [vmem:[#allocation3 + $0x58] sm:$0xff] %vm483, %v1605
    %v1610 = vld [vmem:[#allocation2 + $0xc0] sm:$0xff]
    %v1611 = vld [vmem:[#allocation2 + $0xc8] sm:$0xff]
    %v1612 = vld [vmem:[#allocation2 + $0xd0] sm:$0xff]
    %v1613 = vld [vmem:[#allocation2 + $0xd8] sm:$0xff]
    %v1614 = vpack.c.bf16 %v1599, %v1598
    %v1615 = vld [vmem:[%s2] sm:$0xff]
    %v1616 = vld [vmem:[%s2 + $0x8] sm:$0xff]
    %v1617 = vld [vmem:[%s2 + $0x10] sm:$0xff]
    %v1618 = vld [vmem:[%s2 + $0x18] sm:$0xff]
    %v1619 = vld [vmem:[%s2 + $0x20] sm:$0xff]
    %v1620 = vld [vmem:[%s2 + $0x28] sm:$0xff]
    %v1621 = vld [vmem:[%s2 + $0x30] sm:$0xff]
    %v1622 = vld [vmem:[%s2 + $0x38] sm:$0xff]
    %1624 = vrot.lane.b32.xlu0 %v1614, 64
    %v1625 = vpop.permute.xlu0 %1624
    %v1634 = vunpack.c.l.b16 %v1615
    %v1635 = vunpack.c.h.b16 %v1615
    %v1636 = vunpack.c.l.b16 %v1616
    %v1637 = vunpack.c.h.b16 %v1616
    %v1638 = vunpack.c.l.b16 %v1617
    %v1639 = vunpack.c.h.b16 %v1617
    %v1640 = vunpack.c.l.b16 %v1618
    %v1641 = vunpack.c.h.b16 %v1618
    %v1642 = vunpack.c.l.b16 %v1619
    %v1643 = vunpack.c.h.b16 %v1619
    %v1644 = vunpack.c.l.b16 %v1620
    %v1645 = vunpack.c.h.b16 %v1620
    %v1646 = vunpack.c.l.b16 %v1621
    %v1647 = vunpack.c.h.b16 %v1621
    %v1648 = vunpack.c.l.b16 %v1622
    %v1649 = vunpack.c.h.b16 %v1622
    %v1650 = vpack.c.b16 %v1636, %v1634
    %v1651 = vpack.c.b16 %v1637, %v1635
    %v1652 = vpack.c.b16 %v1640, %v1638
    %v1653 = vpack.c.b16 %v1641, %v1639
    %v1654 = vpack.c.b16 %v1644, %v1642
    %v1655 = vpack.c.b16 %v1645, %v1643
    %v1656 = vpack.c.b16 %v1648, %v1646
    %v1657 = vpack.c.b16 %v1649, %v1647
    %v1667 = vsel %vm483, %v1625, 0
    %1669 = vmatpush.bf16.msra.mxu0 0
    %1670 = vmatpush.bf16.msra.mxu0 0
    %1671 = vmatpush.bf16.msra.mxu0 0
    %1672 = vmatpush.bf16.msra.mxu0 0
    %1673 = vmatpush.bf16.msra.mxu0 %v1656
    %1674 = vmatpush.bf16.msra.mxu0 %v1654
    %1675 = vmatpush.bf16.msra.mxu0 %v1652
    %1676 = vmatpush.bf16.msra.mxu0 %v1650
    %1677 = vmatmul.bf16.gmra.mxu0 %v1667
    %v1678 = vpop.f32.mrf.mxu0
    %v1679 = vadd.f32 0.0, %v1678
    %v1680 = vpop.f32.mrf.mxu0
    %v1681 = vadd.f32 0.0, %v1680
    %1682 = vdwg.mxu0
    %1683 = vmatpush.bf16.msra.mxu0 0
    %1684 = vmatpush.bf16.msra.mxu0 0
    %1685 = vmatpush.bf16.msra.mxu0 0
    %1686 = vmatpush.bf16.msra.mxu0 0
    %1687 = vmatpush.bf16.msra.mxu0 %v1657
    %1688 = vmatpush.bf16.msra.mxu0 %v1655
    %1689 = vmatpush.bf16.msra.mxu0 %v1653
    %1690 = vmatpush.bf16.msra.mxu0 %v1651
    %1691 = vmatmul.bf16.gmra.mxu0 %v1667
    %v1692 = vpop.f32.mrf.mxu0
    %v1693 = vadd.f32 0.0, %v1692
    %v1694 = vpop.f32.mrf.mxu0
    %v1695 = vadd.f32 0.0, %v1694
    %1696 = vdwg.mxu0
    %v1697 = vadd.f32 %v1610, %v1679
    %v1698 = vadd.f32 %v1611, %v1693
    %v1699 = vadd.f32 %v1612, %v1681
    %v1700 = vadd.f32 %v1613, %v1695
    %v1701 = vxor.u32 %v1697, 2147483648
    %v1702 = vxor.u32 %v1699, 2147483648
    %v1703 = vmul.f32 %v1701, 1.442695
    %v1704 = vpow.pop %v1703
    %v1705 = vmul.f32 %v1702, 1.442695
    %v1706 = vpow.pop %v1705
    %v1707 = vadd.f32 %v1704, 1.0
    %v1708 = vadd.f32 %v1706, 1.0
    %v1709 = vrcp.pop %v1707
    %v1710 = vmul.f32 %v1707, %v1709
    %v1711 = vsub.f32 1.0, %v1710
    %v1712 = vmul.f32 %v1709, %v1711
    %v1713 = vadd.f32 %v1709, %v1712
    %vm1714 = vweird.f32 %v1707
    %vm1715 = vweird.f32 %v1709
    %vm1716 = vmor %vm1714, %vm1715
    %v1717 = vsel %vm1716, %v1709, %v1713
    %v1718 = vand.u32 2147483647, %v1707
    %vm1719 = vcmp.eq.f32.partialorder %v1718, 8.507059e+37
    %v1720 = vand.u32 %v1707, 2147483648
    %v1721 = vor.u32 1.1754944e-38, %v1720
    %v1722 = vsel %vm1719, %v1721, %v1717
    %v1723 = vmul.f32 1.0, %v1722
    %v1724 = vrcp.pop %v1708
    %v1725 = vmul.f32 %v1708, %v1724
    %v1726 = vsub.f32 1.0, %v1725
    %v1727 = vmul.f32 %v1724, %v1726
    %v1728 = vadd.f32 %v1724, %v1727
    %vm1729 = vweird.f32 %v1708
    %vm1730 = vweird.f32 %v1724
    %vm1731 = vmor %vm1729, %vm1730
    %v1732 = vsel %vm1731, %v1724, %v1728
    %v1733 = vand.u32 2147483647, %v1708
    %vm1734 = vcmp.eq.f32.partialorder %v1733, 8.507059e+37
    %v1735 = vand.u32 %v1708, 2147483648
    %v1736 = vor.u32 1.1754944e-38, %v1735
    %v1737 = vsel %vm1734, %v1736, %v1732
    %v1738 = vmul.f32 1.0, %v1737
    %v1739 = vtanh.pop %v1698
    %v1740 = vtanh.pop %v1700
    %v1741 = vxor.u32 %v1698, 2147483648
    %v1742 = vxor.u32 %v1700, 2147483648
    %v1743 = vmul.f32 %v1741, 1.442695
    %v1744 = vpow.pop %v1743
    %v1745 = vmul.f32 %v1742, 1.442695
    %v1746 = vpow.pop %v1745
    %v1747 = vadd.f32 %v1744, 1.0
    %v1748 = vadd.f32 %v1746, 1.0
    %v1749 = vrcp.pop %v1747
    %v1750 = vmul.f32 %v1747, %v1749
    %v1751 = vsub.f32 1.0, %v1750
    %v1752 = vmul.f32 %v1749, %v1751
    %v1753 = vadd.f32 %v1749, %v1752
    %vm1754 = vweird.f32 %v1747
    %vm1755 = vweird.f32 %v1749
    %vm1756 = vmor %vm1754, %vm1755
    %v1757 = vsel %vm1756, %v1749, %v1753
    %v1758 = vand.u32 2147483647, %v1747
    %vm1759 = vcmp.eq.f32.partialorder %v1758, 8.507059e+37
    %v1760 = vand.u32 %v1747, 2147483648
    %v1761 = vor.u32 1.1754944e-38, %v1760
    %v1762 = vsel %vm1759, %v1761, %v1757
    %v1763 = vmul.f32 1.0, %v1762
    %v1764 = vrcp.pop %v1748
    %v1765 = vmul.f32 %v1748, %v1764
    %v1766 = vsub.f32 1.0, %v1765
    %v1767 = vmul.f32 %v1764, %v1766
    %v1768 = vadd.f32 %v1764, %v1767
    %vm1769 = vweird.f32 %v1748
    %vm1770 = vweird.f32 %v1764
    %vm1771 = vmor %vm1769, %vm1770
    %v1772 = vsel %vm1771, %v1764, %v1768
    %v1773 = vand.u32 2147483647, %v1748
    %vm1774 = vcmp.eq.f32.partialorder %v1773, 8.507059e+37
    %v1775 = vand.u32 %v1748, 2147483648
    %v1776 = vor.u32 1.1754944e-38, %v1775
    %v1777 = vsel %vm1774, %v1776, %v1772
    %v1778 = vmul.f32 1.0, %v1777
    %v1779 = vmul.f32 %v1723, %v1594
    %v1780 = vmul.f32 %v1738, %v1595
    %v1781 = vmul.f32 %v1723, %v1739
    %v1782 = vmul.f32 %v1738, %v1740
    %1785 = vrot.lane.b32.xlu0 %v1781, 64
    %v1786 = vpop.permute.xlu0 %1785
    %1787 = vrot.lane.b32.xlu0 %v1782, 64
    %v1788 = vpop.permute.xlu0 %1787
    %v1791 = vadd.f32 %v1779, %v1786
    %v1792 = vadd.f32 %v1780, %v1788
    %v1793 = vtanh.pop %v1791
    %v1794 = vtanh.pop %v1792
    %v1795 = vmul.f32 %v1763, %v1793
    %v1796 = vmul.f32 %v1778, %v1794
    %1799 = vrot.lane.b32.xlu0 %v1795, 64
    %v1800 = vpop.permute.xlu0 %1799
    %1801 = vrot.lane.b32.xlu0 %v1796, 64
    %v1802 = vpop.permute.xlu0 %1801
    %1805 = vst.msk [vmem:[#allocation3 + $0x60] sm:$0xff] %vm483, %v1800
    %1806 = vst.msk [vmem:[#allocation3 + $0x68] sm:$0xff] %vm483, %v1802
    %v1807 = vld [vmem:[#allocation2 + $0xe0] sm:$0xff]
    %v1808 = vld [vmem:[#allocation2 + $0xe8] sm:$0xff]
    %v1809 = vld [vmem:[#allocation2 + $0xf0] sm:$0xff]
    %v1810 = vld [vmem:[#allocation2 + $0xf8] sm:$0xff]
    %v1811 = vpack.c.bf16 %v1796, %v1795
    %v1812 = vld [vmem:[%s2] sm:$0xff]
    %v1813 = vld [vmem:[%s2 + $0x8] sm:$0xff]
    %v1814 = vld [vmem:[%s2 + $0x10] sm:$0xff]
    %v1815 = vld [vmem:[%s2 + $0x18] sm:$0xff]
    %v1816 = vld [vmem:[%s2 + $0x20] sm:$0xff]
    %v1817 = vld [vmem:[%s2 + $0x28] sm:$0xff]
    %v1818 = vld [vmem:[%s2 + $0x30] sm:$0xff]
    %v1819 = vld [vmem:[%s2 + $0x38] sm:$0xff]
    %1821 = vrot.lane.b32.xlu0 %v1811, 64
    %v1822 = vpop.permute.xlu0 %1821
    %v1831 = vunpack.c.l.b16 %v1812
    %v1832 = vunpack.c.h.b16 %v1812
    %v1833 = vunpack.c.l.b16 %v1813
    %v1834 = vunpack.c.h.b16 %v1813
    %v1835 = vunpack.c.l.b16 %v1814
    %v1836 = vunpack.c.h.b16 %v1814
    %v1837 = vunpack.c.l.b16 %v1815
    %v1838 = vunpack.c.h.b16 %v1815
    %v1839 = vunpack.c.l.b16 %v1816
    %v1840 = vunpack.c.h.b16 %v1816
    %v1841 = vunpack.c.l.b16 %v1817
    %v1842 = vunpack.c.h.b16 %v1817
    %v1843 = vunpack.c.l.b16 %v1818
    %v1844 = vunpack.c.h.b16 %v1818
    %v1845 = vunpack.c.l.b16 %v1819
    %v1846 = vunpack.c.h.b16 %v1819
    %v1847 = vpack.c.b16 %v1833, %v1831
    %v1848 = vpack.c.b16 %v1834, %v1832
    %v1849 = vpack.c.b16 %v1837, %v1835
    %v1850 = vpack.c.b16 %v1838, %v1836
    %v1851 = vpack.c.b16 %v1841, %v1839
    %v1852 = vpack.c.b16 %v1842, %v1840
    %v1853 = vpack.c.b16 %v1845, %v1843
    %v1854 = vpack.c.b16 %v1846, %v1844
    %v1864 = vsel %vm483, %v1822, 0
    %1866 = vmatpush.bf16.msra.mxu0 0
    %1867 = vmatpush.bf16.msra.mxu0 0
    %1868 = vmatpush.bf16.msra.mxu0 0
    %1869 = vmatpush.bf16.msra.mxu0 0
    %1870 = vmatpush.bf16.msra.mxu0 %v1853
    %1871 = vmatpush.bf16.msra.mxu0 %v1851
    %1872 = vmatpush.bf16.msra.mxu0 %v1849
    %1873 = vmatpush.bf16.msra.mxu0 %v1847
    %1874 = vmatmul.bf16.gmra.mxu0 %v1864
    %v1875 = vpop.f32.mrf.mxu0
    %v1876 = vadd.f32 0.0, %v1875
    %v1877 = vpop.f32.mrf.mxu0
    %v1878 = vadd.f32 0.0, %v1877
    %1879 = vdwg.mxu0
    %1880 = vmatpush.bf16.msra.mxu0 0
    %1881 = vmatpush.bf16.msra.mxu0 0
    %1882 = vmatpush.bf16.msra.mxu0 0
    %1883 = vmatpush.bf16.msra.mxu0 0
    %1884 = vmatpush.bf16.msra.mxu0 %v1854
    %1885 = vmatpush.bf16.msra.mxu0 %v1852
    %1886 = vmatpush.bf16.msra.mxu0 %v1850
    %1887 = vmatpush.bf16.msra.mxu0 %v1848
    %1888 = vmatmul.bf16.gmra.mxu0 %v1864
    %v1889 = vpop.f32.mrf.mxu0
    %v1890 = vadd.f32 0.0, %v1889
    %v1891 = vpop.f32.mrf.mxu0
    %v1892 = vadd.f32 0.0, %v1891
    %1893 = vdwg.mxu0
    %v1894 = vadd.f32 %v1807, %v1876
    %v1895 = vadd.f32 %v1808, %v1890
    %v1896 = vadd.f32 %v1809, %v1878
    %v1897 = vadd.f32 %v1810, %v1892
    %v1898 = vxor.u32 %v1894, 2147483648
    %v1899 = vxor.u32 %v1896, 2147483648
    %v1900 = vmul.f32 %v1898, 1.442695
    %v1901 = vpow.pop %v1900
    %v1902 = vmul.f32 %v1899, 1.442695
    %v1903 = vpow.pop %v1902
    %v1904 = vadd.f32 %v1901, 1.0
    %v1905 = vadd.f32 %v1903, 1.0
    %v1906 = vrcp.pop %v1904
    %v1907 = vmul.f32 %v1904, %v1906
    %v1908 = vsub.f32 1.0, %v1907
    %v1909 = vmul.f32 %v1906, %v1908
    %v1910 = vadd.f32 %v1906, %v1909
    %vm1911 = vweird.f32 %v1904
    %vm1912 = vweird.f32 %v1906
    %vm1913 = vmor %vm1911, %vm1912
    %v1914 = vsel %vm1913, %v1906, %v1910
    %v1915 = vand.u32 2147483647, %v1904
    %vm1916 = vcmp.eq.f32.partialorder %v1915, 8.507059e+37
    %v1917 = vand.u32 %v1904, 2147483648
    %v1918 = vor.u32 1.1754944e-38, %v1917
    %v1919 = vsel %vm1916, %v1918, %v1914
    %v1920 = vmul.f32 1.0, %v1919
    %v1921 = vrcp.pop %v1905
    %v1922 = vmul.f32 %v1905, %v1921
    %v1923 = vsub.f32 1.0, %v1922
    %v1924 = vmul.f32 %v1921, %v1923
    %v1925 = vadd.f32 %v1921, %v1924
    %vm1926 = vweird.f32 %v1905
    %vm1927 = vweird.f32 %v1921
    %vm1928 = vmor %vm1926, %vm1927
    %v1929 = vsel %vm1928, %v1921, %v1925
    %v1930 = vand.u32 2147483647, %v1905
    %vm1931 = vcmp.eq.f32.partialorder %v1930, 8.507059e+37
    %v1932 = vand.u32 %v1905, 2147483648
    %v1933 = vor.u32 1.1754944e-38, %v1932
    %v1934 = vsel %vm1931, %v1933, %v1929
    %v1935 = vmul.f32 1.0, %v1934
    %v1936 = vtanh.pop %v1895
    %v1937 = vtanh.pop %v1897
    %v1938 = vxor.u32 %v1895, 2147483648
    %v1939 = vxor.u32 %v1897, 2147483648
    %v1940 = vmul.f32 %v1938, 1.442695
    %v1941 = vpow.pop %v1940
    %v1942 = vmul.f32 %v1939, 1.442695
    %v1943 = vpow.pop %v1942
    %v1944 = vadd.f32 %v1941, 1.0
    %v1945 = vadd.f32 %v1943, 1.0
    %v1946 = vrcp.pop %v1944
    %v1947 = vmul.f32 %v1944, %v1946
    %v1948 = vsub.f32 1.0, %v1947
    %v1949 = vmul.f32 %v1946, %v1948
    %v1950 = vadd.f32 %v1946, %v1949
    %vm1951 = vweird.f32 %v1944
    %vm1952 = vweird.f32 %v1946
    %vm1953 = vmor %vm1951, %vm1952
    %v1954 = vsel %vm1953, %v1946, %v1950
    %v1955 = vand.u32 2147483647, %v1944
    %vm1956 = vcmp.eq.f32.partialorder %v1955, 8.507059e+37
    %v1957 = vand.u32 %v1944, 2147483648
    %v1958 = vor.u32 1.1754944e-38, %v1957
    %v1959 = vsel %vm1956, %v1958, %v1954
    %v1960 = vmul.f32 1.0, %v1959
    %v1961 = vrcp.pop %v1945
    %v1962 = vmul.f32 %v1945, %v1961
    %v1963 = vsub.f32 1.0, %v1962
    %v1964 = vmul.f32 %v1961, %v1963
    %v1965 = vadd.f32 %v1961, %v1964
    %vm1966 = vweird.f32 %v1945
    %vm1967 = vweird.f32 %v1961
    %vm1968 = vmor %vm1966, %vm1967
    %v1969 = vsel %vm1968, %v1961, %v1965
    %v1970 = vand.u32 2147483647, %v1945
    %vm1971 = vcmp.eq.f32.partialorder %v1970, 8.507059e+37
    %v1972 = vand.u32 %v1945, 2147483648
    %v1973 = vor.u32 1.1754944e-38, %v1972
    %v1974 = vsel %vm1971, %v1973, %v1969
    %v1975 = vmul.f32 1.0, %v1974
    %v1976 = vmul.f32 %v1920, %v1791
    %v1977 = vmul.f32 %v1935, %v1792
    %v1978 = vmul.f32 %v1920, %v1936
    %v1979 = vmul.f32 %v1935, %v1937
    %1982 = vrot.lane.b32.xlu0 %v1978, 64
    %v1983 = vpop.permute.xlu0 %1982
    %1984 = vrot.lane.b32.xlu0 %v1979, 64
    %v1985 = vpop.permute.xlu0 %1984
    %v1988 = vadd.f32 %v1976, %v1983
    %v1989 = vadd.f32 %v1977, %v1985
    %v1990 = vtanh.pop %v1988
    %v1991 = vtanh.pop %v1989
    %v1992 = vmul.f32 %v1960, %v1990
    %v1993 = vmul.f32 %v1975, %v1991
    %1996 = vrot.lane.b32.xlu0 %v1992, 64
    %v1997 = vpop.permute.xlu0 %1996
    %1998 = vrot.lane.b32.xlu0 %v1993, 64
    %v1999 = vpop.permute.xlu0 %1998
    %2002 = vst.msk [vmem:[#allocation3 + $0x70] sm:$0xff] %vm483, %v1997
    %2003 = vst.msk [vmem:[#allocation3 + $0x78] sm:$0xff] %vm483, %v1999
    %v2004 = vld [vmem:[#allocation3] sm:$0xff]
    %v2005 = vld [vmem:[#allocation3 + $0x8] sm:$0xff]
    %v2006 = vld [vmem:[#allocation3 + $0x70] sm:$0xff]
    %v2007 = vld [vmem:[#allocation3 + $0x78] sm:$0xff]
    %vm2008 = vcmask 523520
    %2009 = vst.msk [vmem:[#allocation3] sm:$0xff] %vm2008, %v2006
    %2010 = vst.msk [vmem:[#allocation3 + $0x8] sm:$0xff] %vm2008, %v2007
    %2011 = vst.msk [vmem:[#allocation3 + $0x70] sm:$0xff] %vm2008, %v2004
    %2012 = vst.msk [vmem:[#allocation3 + $0x78] sm:$0xff] %vm2008, %v2005
    %v2013 = vld [vmem:[#allocation3 + $0x10] sm:$0xff]
    %v2014 = vld [vmem:[#allocation3 + $0x18] sm:$0xff]
    %v2015 = vld [vmem:[#allocation3 + $0x60] sm:$0xff]
    %v2016 = vld [vmem:[#allocation3 + $0x68] sm:$0xff]
    %2017 = vst.msk [vmem:[#allocation3 + $0x10] sm:$0xff] %vm2008, %v2015
    %2018 = vst.msk [vmem:[#allocation3 + $0x18] sm:$0xff] %vm2008, %v2016
    %2019 = vst.msk [vmem:[#allocation3 + $0x60] sm:$0xff] %vm2008, %v2013
    %2020 = vst.msk [vmem:[#allocation3 + $0x68] sm:$0xff] %vm2008, %v2014
    %v2021 = vld [vmem:[#allocation3 + $0x20] sm:$0xff]
    %v2022 = vld [vmem:[#allocation3 + $0x28] sm:$0xff]
    %v2023 = vld [vmem:[#allocation3 + $0x50] sm:$0xff]
    %v2024 = vld [vmem:[#allocation3 + $0x58] sm:$0xff]
    %2025 = vst.msk [vmem:[#allocation3 + $0x20] sm:$0xff] %vm2008, %v2023
    %2026 = vst.msk [vmem:[#allocation3 + $0x28] sm:$0xff] %vm2008, %v2024
    %2027 = vst.msk [vmem:[#allocation3 + $0x50] sm:$0xff] %vm2008, %v2021
    %2028 = vst.msk [vmem:[#allocation3 + $0x58] sm:$0xff] %vm2008, %v2022
    %v2029 = vld [vmem:[#allocation3 + $0x30] sm:$0xff]
    %v2030 = vld [vmem:[#allocation3 + $0x38] sm:$0xff]
    %v2031 = vld [vmem:[#allocation3 + $0x40] sm:$0xff]
    %v2032 = vld [vmem:[#allocation3 + $0x48] sm:$0xff]
    %2033 = vst.msk [vmem:[#allocation3 + $0x30] sm:$0xff] %vm2008, %v2031
    %2034 = vst.msk [vmem:[#allocation3 + $0x38] sm:$0xff] %vm2008, %v2032
    %2035 = vst.msk [vmem:[#allocation3 + $0x40] sm:$0xff] %vm2008, %v2029
    %2036 = vst.msk [vmem:[#allocation3 + $0x48] sm:$0xff] %vm2008, %v2030
    %v2037 = vld [vmem:[#allocation3] sm:$0xff]
    %v2038 = vld [vmem:[#allocation3 + $0x8] sm:$0xff]
    %v2039 = vld [vmem:[#allocation3 + $0x10] sm:$0xff]
    %v2040 = vld [vmem:[#allocation3 + $0x18] sm:$0xff]
    %v2041 = vld [vmem:[#allocation3 + $0x20] sm:$0xff]
    %v2042 = vld [vmem:[#allocation3 + $0x28] sm:$0xff]
    %v2043 = vld [vmem:[#allocation3 + $0x30] sm:$0xff]
    %v2044 = vld [vmem:[#allocation3 + $0x38] sm:$0xff]
    %v2045 = vld [vmem:[#allocation3 + $0x40] sm:$0xff]
    %v2046 = vld [vmem:[#allocation3 + $0x48] sm:$0xff]
    %v2047 = vld [vmem:[#allocation3 + $0x50] sm:$0xff]
    %v2048 = vld [vmem:[#allocation3 + $0x58] sm:$0xff]
    %v2049 = vld [vmem:[#allocation3 + $0x60] sm:$0xff]
    %v2050 = vld [vmem:[#allocation3 + $0x68] sm:$0xff]
    %v2051 = vld [vmem:[#allocation3 + $0x70] sm:$0xff]
    %v2052 = vld [vmem:[#allocation3 + $0x78] sm:$0xff]
    %v2053 = vpack.c.bf16 %v2038, %v2037
    %v2054 = vpack.c.bf16 %v2040, %v2039
    %v2055 = vpack.c.bf16 %v2042, %v2041
    %v2056 = vpack.c.bf16 %v2044, %v2043
    %v2057 = vpack.c.bf16 %v2046, %v2045
    %v2058 = vpack.c.bf16 %v2048, %v2047
    %v2059 = vpack.c.bf16 %v2050, %v2049
    %v2060 = vpack.c.bf16 %v2052, %v2051
    %v2061 = vld [vmem:[%s4] sm:$0xff]
    %v2062 = vld [vmem:[%s4 + $0x8] sm:$0xff]
    %v2063 = vld [vmem:[%s4 + $0x10] sm:$0xff]
    %v2064 = vld [vmem:[%s4 + $0x18] sm:$0xff]
    %v2065 = vld [vmem:[%s4 + $0x20] sm:$0xff]
    %v2066 = vld [vmem:[%s4 + $0x28] sm:$0xff]
    %v2067 = vld [vmem:[%s4 + $0x30] sm:$0xff]
    %v2068 = vld [vmem:[%s4 + $0x38] sm:$0xff]
    %v2069 = vld [vmem:[%s6] sm:$0x3]
    %v2071 = vperm.slane %v2069, 0
    %v2072 = vperm.slane %v2069, 1
    %v2083 = vunpack.c.l.b16 %v2061
    %v2084 = vunpack.c.h.b16 %v2061
    %v2085 = vunpack.c.l.b16 %v2062
    %v2086 = vunpack.c.h.b16 %v2062
    %v2087 = vunpack.c.l.b16 %v2063
    %v2088 = vunpack.c.h.b16 %v2063
    %v2089 = vunpack.c.l.b16 %v2064
    %v2090 = vunpack.c.h.b16 %v2064
    %v2091 = vunpack.c.l.b16 %v2065
    %v2092 = vunpack.c.h.b16 %v2065
    %v2093 = vunpack.c.l.b16 %v2066
    %v2094 = vunpack.c.h.b16 %v2066
    %v2095 = vunpack.c.l.b16 %v2067
    %v2096 = vunpack.c.h.b16 %v2067
    %v2097 = vunpack.c.l.b16 %v2068
    %v2098 = vunpack.c.h.b16 %v2068
    %v2099 = vpack.c.b16 %v2085, %v2083
    %v2100 = vpack.c.b16 %v2086, %v2084
    %v2101 = vpack.c.b16 %v2089, %v2087
    %v2102 = vpack.c.b16 %v2090, %v2088
    %v2103 = vpack.c.b16 %v2093, %v2091
    %v2104 = vpack.c.b16 %v2094, %v2092
    %v2105 = vpack.c.b16 %v2097, %v2095
    %v2106 = vpack.c.b16 %v2098, %v2096
    %v2116 = vsel %vm483, %v2053, 0
    %v2119 = vsel %vm483, %v2054, 0
    %v2122 = vsel %vm483, %v2055, 0
    %v2125 = vsel %vm483, %v2056, 0
    %v2128 = vsel %vm483, %v2057, 0
    %v2131 = vsel %vm483, %v2058, 0
    %v2134 = vsel %vm483, %v2059, 0
    %v2137 = vsel %vm483, %v2060, 0
    %2139 = vmatpush.bf16.msra.mxu0 0
    %2140 = vmatpush.bf16.msra.mxu0 0
    %2141 = vmatpush.bf16.msra.mxu0 0
    %2142 = vmatpush.bf16.msra.mxu0 0
    %2143 = vmatpush.bf16.msra.mxu0 %v2105
    %2144 = vmatpush.bf16.msra.mxu0 %v2103
    %2145 = vmatpush.bf16.msra.mxu0 %v2101
    %2146 = vmatpush.bf16.msra.mxu0 %v2099
    %2147 = vmatmul.bf16.gmra.mxu0 %v2116
    %v2148 = vpop.f32.mrf.mxu0
    %v2149 = vadd.f32 %v2071, %v2148
    %v2150 = vpop.f32.mrf.mxu0
    %v2151 = vadd.f32 %v2071, %v2150
    %2152 = vmatmul.bf16.gmra.mxu0 %v2119
    %v2153 = vpop.f32.mrf.mxu0
    %v2154 = vadd.f32 %v2071, %v2153
    %v2155 = vpop.f32.mrf.mxu0
    %v2156 = vadd.f32 %v2071, %v2155
    %2157 = vmatmul.bf16.gmra.mxu0 %v2122
    %v2158 = vpop.f32.mrf.mxu0
    %v2159 = vadd.f32 %v2071, %v2158
    %v2160 = vpop.f32.mrf.mxu0
    %v2161 = vadd.f32 %v2071, %v2160
    %2162 = vmatmul.bf16.gmra.mxu0 %v2125
    %v2163 = vpop.f32.mrf.mxu0
    %v2164 = vadd.f32 %v2071, %v2163
    %v2165 = vpop.f32.mrf.mxu0
    %v2166 = vadd.f32 %v2071, %v2165
    %2167 = vmatmul.bf16.gmra.mxu0 %v2128
    %v2168 = vpop.f32.mrf.mxu0
    %v2169 = vadd.f32 %v2071, %v2168
    %v2170 = vpop.f32.mrf.mxu0
    %v2171 = vadd.f32 %v2071, %v2170
    %2172 = vmatmul.bf16.gmra.mxu0 %v2131
    %v2173 = vpop.f32.mrf.mxu0
    %v2174 = vadd.f32 %v2071, %v2173
    %v2175 = vpop.f32.mrf.mxu0
    %v2176 = vadd.f32 %v2071, %v2175
    %2177 = vmatmul.bf16.gmra.mxu0 %v2134
    %v2178 = vpop.f32.mrf.mxu0
    %v2179 = vadd.f32 %v2071, %v2178
    %v2180 = vpop.f32.mrf.mxu0
    %v2181 = vadd.f32 %v2071, %v2180
    %2182 = vmatmul.bf16.gmra.mxu0 %v2137
    %v2183 = vpop.f32.mrf.mxu0
    %v2184 = vadd.f32 %v2071, %v2183
    %v2185 = vpop.f32.mrf.mxu0
    %v2186 = vadd.f32 %v2071, %v2185
    %2187 = vdwg.mxu0
    %2188 = vmatpush.bf16.msra.mxu0 0
    %2189 = vmatpush.bf16.msra.mxu0 0
    %2190 = vmatpush.bf16.msra.mxu0 0
    %2191 = vmatpush.bf16.msra.mxu0 0
    %2192 = vmatpush.bf16.msra.mxu0 %v2106
    %2193 = vmatpush.bf16.msra.mxu0 %v2104
    %2194 = vmatpush.bf16.msra.mxu0 %v2102
    %2195 = vmatpush.bf16.msra.mxu0 %v2100
    %2196 = vmatmul.bf16.gmra.mxu0 %v2116
    %v2197 = vpop.f32.mrf.mxu0
    %v2198 = vadd.f32 %v2072, %v2197
    %v2199 = vpop.f32.mrf.mxu0
    %v2200 = vadd.f32 %v2072, %v2199
    %2201 = vmatmul.bf16.gmra.mxu0 %v2119
    %v2202 = vpop.f32.mrf.mxu0
    %v2203 = vadd.f32 %v2072, %v2202
    %v2204 = vpop.f32.mrf.mxu0
    %v2205 = vadd.f32 %v2072, %v2204
    %2206 = vmatmul.bf16.gmra.mxu0 %v2122
    %v2207 = vpop.f32.mrf.mxu0
    %v2208 = vadd.f32 %v2072, %v2207
    %v2209 = vpop.f32.mrf.mxu0
    %v2210 = vadd.f32 %v2072, %v2209
    %2211 = vmatmul.bf16.gmra.mxu0 %v2125
    %v2212 = vpop.f32.mrf.mxu0
    %v2213 = vadd.f32 %v2072, %v2212
    %v2214 = vpop.f32.mrf.mxu0
    %v2215 = vadd.f32 %v2072, %v2214
    %2216 = vmatmul.bf16.gmra.mxu0 %v2128
    %v2217 = vpop.f32.mrf.mxu0
    %v2218 = vadd.f32 %v2072, %v2217
    %v2219 = vpop.f32.mrf.mxu0
    %v2220 = vadd.f32 %v2072, %v2219
    %2221 = vmatmul.bf16.gmra.mxu0 %v2131
    %v2222 = vpop.f32.mrf.mxu0
    %v2223 = vadd.f32 %v2072, %v2222
    %v2224 = vpop.f32.mrf.mxu0
    %v2225 = vadd.f32 %v2072, %v2224
    %2226 = vmatmul.bf16.gmra.mxu0 %v2134
    %v2227 = vpop.f32.mrf.mxu0
    %v2228 = vadd.f32 %v2072, %v2227
    %v2229 = vpop.f32.mrf.mxu0
    %v2230 = vadd.f32 %v2072, %v2229
    %2231 = vmatmul.bf16.gmra.mxu0 %v2137
    %v2232 = vpop.f32.mrf.mxu0
    %v2233 = vadd.f32 %v2072, %v2232
    %v2234 = vpop.f32.mrf.mxu0
    %v2235 = vadd.f32 %v2072, %v2234
    %2236 = vdwg.mxu0
    %2237 = vst [vmem:[#allocation2] sm:$0xff] %v2149
    %2238 = vst [vmem:[#allocation2 + $0x8] sm:$0xff] %v2198
    %2239 = vst [vmem:[#allocation2 + $0x10] sm:$0xff] %v2151
    %2240 = vst [vmem:[#allocation2 + $0x18] sm:$0xff] %v2200
    %2241 = vst [vmem:[#allocation2 + $0x20] sm:$0xff] %v2154
    %2242 = vst [vmem:[#allocation2 + $0x28] sm:$0xff] %v2203
    %2243 = vst [vmem:[#allocation2 + $0x30] sm:$0xff] %v2156
    %2244 = vst [vmem:[#allocation2 + $0x38] sm:$0xff] %v2205
    %2245 = vst [vmem:[#allocation2 + $0x40] sm:$0xff] %v2159
    %2246 = vst [vmem:[#allocation2 + $0x48] sm:$0xff] %v2208
    %2247 = vst [vmem:[#allocation2 + $0x50] sm:$0xff] %v2161
    %2248 = vst [vmem:[#allocation2 + $0x58] sm:$0xff] %v2210
    %2249 = vst [vmem:[#allocation2 + $0x60] sm:$0xff] %v2164
    %2250 = vst [vmem:[#allocation2 + $0x68] sm:$0xff] %v2213
    %2251 = vst [vmem:[#allocation2 + $0x70] sm:$0xff] %v2166
    %2252 = vst [vmem:[#allocation2 + $0x78] sm:$0xff] %v2215
    %2253 = vst [vmem:[#allocation2 + $0x80] sm:$0xff] %v2169
    %2254 = vst [vmem:[#allocation2 + $0x88] sm:$0xff] %v2218
    %2255 = vst [vmem:[#allocation2 + $0x90] sm:$0xff] %v2171
    %2256 = vst [vmem:[#allocation2 + $0x98] sm:$0xff] %v2220
    %2257 = vst [vmem:[#allocation2 + $0xa0] sm:$0xff] %v2174
    %2258 = vst [vmem:[#allocation2 + $0xa8] sm:$0xff] %v2223
    %2259 = vst [vmem:[#allocation2 + $0xb0] sm:$0xff] %v2176
    %2260 = vst [vmem:[#allocation2 + $0xb8] sm:$0xff] %v2225
    %2261 = vst [vmem:[#allocation2 + $0xc0] sm:$0xff] %v2179
    %2262 = vst [vmem:[#allocation2 + $0xc8] sm:$0xff] %v2228
    %2263 = vst [vmem:[#allocation2 + $0xd0] sm:$0xff] %v2181
    %2264 = vst [vmem:[#allocation2 + $0xd8] sm:$0xff] %v2230
    %2265 = vst [vmem:[#allocation2 + $0xe0] sm:$0xff] %v2184
    %2266 = vst [vmem:[#allocation2 + $0xe8] sm:$0xff] %v2233
    %2267 = vst [vmem:[#allocation2 + $0xf0] sm:$0xff] %v2186
    %2268 = vst [vmem:[#allocation2 + $0xf8] sm:$0xff] %v2235
    %v2269 = vld [vmem:[#allocation2] sm:$0xff]
    %v2270 = vld [vmem:[#allocation2 + $0x8] sm:$0xff]
    %v2271 = vld [vmem:[#allocation2 + $0x10] sm:$0xff]
    %v2272 = vld [vmem:[#allocation2 + $0x18] sm:$0xff]
    %v2273 = vld [vmem:[#allocation2 + $0xe0] sm:$0xff]
    %v2274 = vld [vmem:[#allocation2 + $0xe8] sm:$0xff]
    %v2275 = vld [vmem:[#allocation2 + $0xf0] sm:$0xff]
    %v2276 = vld [vmem:[#allocation2 + $0xf8] sm:$0xff]
    %v2277 = vsel %vm92, %v2269, %v2273
    %v2278 = vsel %vm93, %v2270, %v2274
    %v2279 = vsel %vm92, %v2271, %v2275
    %v2280 = vsel %vm93, %v2272, %v2276
    %2281 = vst [vmem:[#allocation2] sm:$0xff] %v2277
    %2282 = vst [vmem:[#allocation2 + $0x8] sm:$0xff] %v2278
    %2283 = vst [vmem:[#allocation2 + $0x10] sm:$0xff] %v2279
    %2284 = vst [vmem:[#allocation2 + $0x18] sm:$0xff] %v2280
    %v2285 = vsel %vm92, %v2273, %v2269
    %v2286 = vsel %vm93, %v2274, %v2270
    %v2287 = vsel %vm92, %v2275, %v2271
    %v2288 = vsel %vm93, %v2276, %v2272
    %2289 = vst [vmem:[#allocation2 + $0xe0] sm:$0xff] %v2285
    %2290 = vst [vmem:[#allocation2 + $0xe8] sm:$0xff] %v2286
    %2291 = vst [vmem:[#allocation2 + $0xf0] sm:$0xff] %v2287
    %2292 = vst [vmem:[#allocation2 + $0xf8] sm:$0xff] %v2288
    %v2293 = vld [vmem:[#allocation2 + $0x20] sm:$0xff]
    %v2294 = vld [vmem:[#allocation2 + $0x28] sm:$0xff]
    %v2295 = vld [vmem:[#allocation2 + $0x30] sm:$0xff]
    %v2296 = vld [vmem:[#allocation2 + $0x38] sm:$0xff]
    %v2297 = vld [vmem:[#allocation2 + $0xc0] sm:$0xff]
    %v2298 = vld [vmem:[#allocation2 + $0xc8] sm:$0xff]
    %v2299 = vld [vmem:[#allocation2 + $0xd0] sm:$0xff]
    %v2300 = vld [vmem:[#allocation2 + $0xd8] sm:$0xff]
    %v2301 = vsel %vm92, %v2293, %v2297
    %v2302 = vsel %vm93, %v2294, %v2298
    %v2303 = vsel %vm92, %v2295, %v2299
    %v2304 = vsel %vm93, %v2296, %v2300
    %2305 = vst [vmem:[#allocation2 + $0x20] sm:$0xff] %v2301
    %2306 = vst [vmem:[#allocation2 + $0x28] sm:$0xff] %v2302
    %2307 = vst [vmem:[#allocation2 + $0x30] sm:$0xff] %v2303
    %2308 = vst [vmem:[#allocation2 + $0x38] sm:$0xff] %v2304
    %v2309 = vsel %vm92, %v2297, %v2293
    %v2310 = vsel %vm93, %v2298, %v2294
    %v2311 = vsel %vm92, %v2299, %v2295
    %v2312 = vsel %vm93, %v2300, %v2296
    %2313 = vst [vmem:[#allocation2 + $0xc0] sm:$0xff] %v2309
    %2314 = vst [vmem:[#allocation2 + $0xc8] sm:$0xff] %v2310
    %2315 = vst [vmem:[#allocation2 + $0xd0] sm:$0xff] %v2311
    %2316 = vst [vmem:[#allocation2 + $0xd8] sm:$0xff] %v2312
    %v2317 = vld [vmem:[#allocation2 + $0x40] sm:$0xff]
    %v2318 = vld [vmem:[#allocation2 + $0x48] sm:$0xff]
    %v2319 = vld [vmem:[#allocation2 + $0x50] sm:$0xff]
    %v2320 = vld [vmem:[#allocation2 + $0x58] sm:$0xff]
    %v2321 = vld [vmem:[#allocation2 + $0xa0] sm:$0xff]
    %v2322 = vld [vmem:[#allocation2 + $0xa8] sm:$0xff]
    %v2323 = vld [vmem:[#allocation2 + $0xb0] sm:$0xff]
    %v2324 = vld [vmem:[#allocation2 + $0xb8] sm:$0xff]
    %v2325 = vsel %vm92, %v2317, %v2321
    %v2326 = vsel %vm93, %v2318, %v2322
    %v2327 = vsel %vm92, %v2319, %v2323
    %v2328 = vsel %vm93, %v2320, %v2324
    %2329 = vst [vmem:[#allocation2 + $0x40] sm:$0xff] %v2325
    %2330 = vst [vmem:[#allocation2 + $0x48] sm:$0xff] %v2326
    %2331 = vst [vmem:[#allocation2 + $0x50] sm:$0xff] %v2327
    %2332 = vst [vmem:[#allocation2 + $0x58] sm:$0xff] %v2328
    %v2333 = vsel %vm92, %v2321, %v2317
    %v2334 = vsel %vm93, %v2322, %v2318
    %v2335 = vsel %vm92, %v2323, %v2319
    %v2336 = vsel %vm93, %v2324, %v2320
    %2337 = vst [vmem:[#allocation2 + $0xa0] sm:$0xff] %v2333
    %2338 = vst [vmem:[#allocation2 + $0xa8] sm:$0xff] %v2334
    %2339 = vst [vmem:[#allocation2 + $0xb0] sm:$0xff] %v2335
    %2340 = vst [vmem:[#allocation2 + $0xb8] sm:$0xff] %v2336
    %v2341 = vld [vmem:[#allocation2 + $0x60] sm:$0xff]
    %v2342 = vld [vmem:[#allocation2 + $0x68] sm:$0xff]
    %v2343 = vld [vmem:[#allocation2 + $0x70] sm:$0xff]
    %v2344 = vld [vmem:[#allocation2 + $0x78] sm:$0xff]
    %v2345 = vld [vmem:[#allocation2 + $0x80] sm:$0xff]
    %v2346 = vld [vmem:[#allocation2 + $0x88] sm:$0xff]
    %v2347 = vld [vmem:[#allocation2 + $0x90] sm:$0xff]
    %v2348 = vld [vmem:[#allocation2 + $0x98] sm:$0xff]
    %v2349 = vsel %vm92, %v2341, %v2345
    %v2350 = vsel %vm93, %v2342, %v2346
    %v2351 = vsel %vm92, %v2343, %v2347
    %v2352 = vsel %vm93, %v2344, %v2348
    %2353 = vst [vmem:[#allocation2 + $0x60] sm:$0xff] %v2349
    %2354 = vst [vmem:[#allocation2 + $0x68] sm:$0xff] %v2350
    %2355 = vst [vmem:[#allocation2 + $0x70] sm:$0xff] %v2351
    %2356 = vst [vmem:[#allocation2 + $0x78] sm:$0xff] %v2352
    %v2357 = vsel %vm92, %v2345, %v2341
    %v2358 = vsel %vm93, %v2346, %v2342
    %v2359 = vsel %vm92, %v2347, %v2343
    %v2360 = vsel %vm93, %v2348, %v2344
    %2361 = vst [vmem:[#allocation2 + $0x80] sm:$0xff] %v2357
    %2362 = vst [vmem:[#allocation2 + $0x88] sm:$0xff] %v2358
    %2363 = vst [vmem:[#allocation2 + $0x90] sm:$0xff] %v2359
    %2364 = vst [vmem:[#allocation2 + $0x98] sm:$0xff] %v2360
    %v2365 = vld [vmem:[#allocation2] sm:$0xff]
    %v2366 = vld [vmem:[#allocation2 + $0x8] sm:$0xff]
    %v2367 = vld [vmem:[#allocation2 + $0x10] sm:$0xff]
    %v2368 = vld [vmem:[#allocation2 + $0x18] sm:$0xff]
    %v2369 = vld [vmem:[#allocation6] sm:$0xff]
    %v2370 = vld [vmem:[#allocation6 + $0x8] sm:$0xff]
    %v2371 = vld [vmem:[#allocation6 + $0x10] sm:$0xff]
    %v2372 = vld [vmem:[#allocation6 + $0x18] sm:$0xff]
    %v2373 = vld [vmem:[#allocation6 + $0x20] sm:$0xff]
    %v2374 = vld [vmem:[#allocation6 + $0x28] sm:$0xff]
    %v2375 = vld [vmem:[#allocation6 + $0x30] sm:$0xff]
    %v2376 = vld [vmem:[#allocation6 + $0x38] sm:$0xff]
    %v2385 = vunpack.c.l.b16 %v2369
    %v2386 = vunpack.c.h.b16 %v2369
    %v2387 = vunpack.c.l.b16 %v2370
    %v2388 = vunpack.c.h.b16 %v2370
    %v2389 = vunpack.c.l.b16 %v2371
    %v2390 = vunpack.c.h.b16 %v2371
    %v2391 = vunpack.c.l.b16 %v2372
    %v2392 = vunpack.c.h.b16 %v2372
    %v2393 = vunpack.c.l.b16 %v2373
    %v2394 = vunpack.c.h.b16 %v2373
    %v2395 = vunpack.c.l.b16 %v2374
    %v2396 = vunpack.c.h.b16 %v2374
    %v2397 = vunpack.c.l.b16 %v2375
    %v2398 = vunpack.c.h.b16 %v2375
    %v2399 = vunpack.c.l.b16 %v2376
    %v2400 = vunpack.c.h.b16 %v2376
    %v2401 = vpack.c.b16 %v2387, %v2385
    %v2402 = vpack.c.b16 %v2388, %v2386
    %v2403 = vpack.c.b16 %v2391, %v2389
    %v2404 = vpack.c.b16 %v2392, %v2390
    %v2405 = vpack.c.b16 %v2395, %v2393
    %v2406 = vpack.c.b16 %v2396, %v2394
    %v2407 = vpack.c.b16 %v2399, %v2397
    %v2408 = vpack.c.b16 %v2400, %v2398
    %2417 = vmatpush.bf16.msra.mxu0 0
    %2418 = vmatpush.bf16.msra.mxu0 0
    %2419 = vmatpush.bf16.msra.mxu0 0
    %2420 = vmatpush.bf16.msra.mxu0 0
    %2421 = vmatpush.bf16.msra.mxu0 %v2407
    %2422 = vmatpush.bf16.msra.mxu0 %v2405
    %2423 = vmatpush.bf16.msra.mxu0 %v2403
    %2424 = vmatpush.bf16.msra.mxu0 %v2401
    %2425 = vmatmul.bf16.gmra.mxu0 %v485
    %v2426 = vpop.f32.mrf.mxu0
    %v2427 = vadd.f32 0.0, %v2426
    %v2428 = vpop.f32.mrf.mxu0
    %v2429 = vadd.f32 0.0, %v2428
    %2430 = vdwg.mxu0
    %2431 = vmatpush.bf16.msra.mxu0 0
    %2432 = vmatpush.bf16.msra.mxu0 0
    %2433 = vmatpush.bf16.msra.mxu0 0
    %2434 = vmatpush.bf16.msra.mxu0 0
    %2435 = vmatpush.bf16.msra.mxu0 %v2408
    %2436 = vmatpush.bf16.msra.mxu0 %v2406
    %2437 = vmatpush.bf16.msra.mxu0 %v2404
    %2438 = vmatpush.bf16.msra.mxu0 %v2402
    %2439 = vmatmul.bf16.gmra.mxu0 %v485
    %v2440 = vpop.f32.mrf.mxu0
    %v2441 = vadd.f32 0.0, %v2440
    %v2442 = vpop.f32.mrf.mxu0
    %v2443 = vadd.f32 0.0, %v2442
    %2444 = vdwg.mxu0
    %v2445 = vadd.f32 %v2365, %v2427
    %v2446 = vadd.f32 %v2366, %v2441
    %v2447 = vadd.f32 %v2367, %v2429
    %v2448 = vadd.f32 %v2368, %v2443
    %v2449 = vxor.u32 %v2445, 2147483648
    %v2450 = vxor.u32 %v2447, 2147483648
    %v2451 = vmul.f32 %v2449, 1.442695
    %v2452 = vpow.pop %v2451
    %v2453 = vmul.f32 %v2450, 1.442695
    %v2454 = vpow.pop %v2453
    %v2455 = vadd.f32 %v2452, 1.0
    %v2456 = vadd.f32 %v2454, 1.0
    %v2457 = vrcp.pop %v2455
    %v2458 = vmul.f32 %v2455, %v2457
    %v2459 = vsub.f32 1.0, %v2458
    %v2460 = vmul.f32 %v2457, %v2459
    %v2461 = vadd.f32 %v2457, %v2460
    %vm2462 = vweird.f32 %v2455
    %vm2463 = vweird.f32 %v2457
    %vm2464 = vmor %vm2462, %vm2463
    %v2465 = vsel %vm2464, %v2457, %v2461
    %v2466 = vand.u32 2147483647, %v2455
    %vm2467 = vcmp.eq.f32.partialorder %v2466, 8.507059e+37
    %v2468 = vand.u32 %v2455, 2147483648
    %v2469 = vor.u32 1.1754944e-38, %v2468
    %v2470 = vsel %vm2467, %v2469, %v2465
    %v2471 = vmul.f32 1.0, %v2470
    %v2472 = vrcp.pop %v2456
    %v2473 = vmul.f32 %v2456, %v2472
    %v2474 = vsub.f32 1.0, %v2473
    %v2475 = vmul.f32 %v2472, %v2474
    %v2476 = vadd.f32 %v2472, %v2475
    %vm2477 = vweird.f32 %v2456
    %vm2478 = vweird.f32 %v2472
    %vm2479 = vmor %vm2477, %vm2478
    %v2480 = vsel %vm2479, %v2472, %v2476
    %v2481 = vand.u32 2147483647, %v2456
    %vm2482 = vcmp.eq.f32.partialorder %v2481, 8.507059e+37
    %v2483 = vand.u32 %v2456, 2147483648
    %v2484 = vor.u32 1.1754944e-38, %v2483
    %v2485 = vsel %vm2482, %v2484, %v2480
    %v2486 = vmul.f32 1.0, %v2485
    %v2487 = vtanh.pop %v2446
    %v2488 = vtanh.pop %v2448
    %v2489 = vxor.u32 %v2446, 2147483648
    %v2490 = vxor.u32 %v2448, 2147483648
    %v2491 = vmul.f32 %v2489, 1.442695
    %v2492 = vpow.pop %v2491
    %v2493 = vmul.f32 %v2490, 1.442695
    %v2494 = vpow.pop %v2493
    %v2495 = vadd.f32 %v2492, 1.0
    %v2496 = vadd.f32 %v2494, 1.0
    %v2497 = vrcp.pop %v2495
    %v2498 = vmul.f32 %v2495, %v2497
    %v2499 = vsub.f32 1.0, %v2498
    %v2500 = vmul.f32 %v2497, %v2499
    %v2501 = vadd.f32 %v2497, %v2500
    %vm2502 = vweird.f32 %v2495
    %vm2503 = vweird.f32 %v2497
    %vm2504 = vmor %vm2502, %vm2503
    %v2505 = vsel %vm2504, %v2497, %v2501
    %v2506 = vand.u32 2147483647, %v2495
    %vm2507 = vcmp.eq.f32.partialorder %v2506, 8.507059e+37
    %v2508 = vand.u32 %v2495, 2147483648
    %v2509 = vor.u32 1.1754944e-38, %v2508
    %v2510 = vsel %vm2507, %v2509, %v2505
    %v2511 = vmul.f32 1.0, %v2510
    %v2512 = vrcp.pop %v2496
    %v2513 = vmul.f32 %v2496, %v2512
    %v2514 = vsub.f32 1.0, %v2513
    %v2515 = vmul.f32 %v2512, %v2514
    %v2516 = vadd.f32 %v2512, %v2515
    %vm2517 = vweird.f32 %v2496
    %vm2518 = vweird.f32 %v2512
    %vm2519 = vmor %vm2517, %vm2518
    %v2520 = vsel %vm2519, %v2512, %v2516
    %v2521 = vand.u32 2147483647, %v2496
    %vm2522 = vcmp.eq.f32.partialorder %v2521, 8.507059e+37
    %v2523 = vand.u32 %v2496, 2147483648
    %v2524 = vor.u32 1.1754944e-38, %v2523
    %v2525 = vsel %vm2522, %v2524, %v2520
    %v2526 = vmul.f32 1.0, %v2525
    %v2527 = vmul.f32 %v2471, 0.0
    %v2528 = vmul.f32 %v2486, 0.0
    %v2529 = vmul.f32 %v2471, %v2487
    %v2530 = vmul.f32 %v2486, %v2488
    %2533 = vrot.lane.b32.xlu0 %v2529, 64
    %v2534 = vpop.permute.xlu0 %2533
    %2535 = vrot.lane.b32.xlu0 %v2530, 64
    %v2536 = vpop.permute.xlu0 %2535
    %v2539 = vadd.f32 %v2527, %v2534
    %v2540 = vadd.f32 %v2528, %v2536
    %v2541 = vtanh.pop %v2539
    %v2542 = vtanh.pop %v2540
    %v2543 = vmul.f32 %v2511, %v2541
    %v2544 = vmul.f32 %v2526, %v2542
    %v2545 = vld [vmem:[#allocation2 + $0x20] sm:$0xff]
    %v2546 = vld [vmem:[#allocation2 + $0x28] sm:$0xff]
    %v2547 = vld [vmem:[#allocation2 + $0x30] sm:$0xff]
    %v2548 = vld [vmem:[#allocation2 + $0x38] sm:$0xff]
    %v2549 = vpack.c.bf16 %v2544, %v2543
    %2551 = vrot.lane.b32.xlu0 %v2549, 64
    %v2552 = vpop.permute.xlu0 %2551
    %v2554 = vsel %vm483, %v2552, 0
    %2556 = vmatpush.bf16.msra.mxu0 0
    %2557 = vmatpush.bf16.msra.mxu0 0
    %2558 = vmatpush.bf16.msra.mxu0 0
    %2559 = vmatpush.bf16.msra.mxu0 0
    %2560 = vmatpush.bf16.msra.mxu0 %v2407
    %2561 = vmatpush.bf16.msra.mxu0 %v2405
    %2562 = vmatpush.bf16.msra.mxu0 %v2403
    %2563 = vmatpush.bf16.msra.mxu0 %v2401
    %2564 = vmatmul.bf16.gmra.mxu0 %v2554
    %v2565 = vpop.f32.mrf.mxu0
    %v2566 = vadd.f32 0.0, %v2565
    %v2567 = vpop.f32.mrf.mxu0
    %v2568 = vadd.f32 0.0, %v2567
    %2569 = vdwg.mxu0
    %2570 = vmatpush.bf16.msra.mxu0 0
    %2571 = vmatpush.bf16.msra.mxu0 0
    %2572 = vmatpush.bf16.msra.mxu0 0
    %2573 = vmatpush.bf16.msra.mxu0 0
    %2574 = vmatpush.bf16.msra.mxu0 %v2408
    %2575 = vmatpush.bf16.msra.mxu0 %v2406
    %2576 = vmatpush.bf16.msra.mxu0 %v2404
    %2577 = vmatpush.bf16.msra.mxu0 %v2402
    %2578 = vmatmul.bf16.gmra.mxu0 %v2554
    %v2579 = vpop.f32.mrf.mxu0
    %v2580 = vadd.f32 0.0, %v2579
    %v2581 = vpop.f32.mrf.mxu0
    %v2582 = vadd.f32 0.0, %v2581
    %2583 = vdwg.mxu0
    %v2584 = vadd.f32 %v2545, %v2566
    %v2585 = vadd.f32 %v2546, %v2580
    %v2586 = vadd.f32 %v2547, %v2568
    %v2587 = vadd.f32 %v2548, %v2582
    %v2588 = vxor.u32 %v2584, 2147483648
    %v2589 = vxor.u32 %v2586, 2147483648
    %v2590 = vmul.f32 %v2588, 1.442695
    %v2591 = vpow.pop %v2590
    %v2592 = vmul.f32 %v2589, 1.442695
    %v2593 = vpow.pop %v2592
    %v2594 = vadd.f32 %v2591, 1.0
    %v2595 = vadd.f32 %v2593, 1.0
    %v2596 = vrcp.pop %v2594
    %v2597 = vmul.f32 %v2594, %v2596
    %v2598 = vsub.f32 1.0, %v2597
    %v2599 = vmul.f32 %v2596, %v2598
    %v2600 = vadd.f32 %v2596, %v2599
    %vm2601 = vweird.f32 %v2594
    %vm2602 = vweird.f32 %v2596
    %vm2603 = vmor %vm2601, %vm2602
    %v2604 = vsel %vm2603, %v2596, %v2600
    %v2605 = vand.u32 2147483647, %v2594
    %vm2606 = vcmp.eq.f32.partialorder %v2605, 8.507059e+37
    %v2607 = vand.u32 %v2594, 2147483648
    %v2608 = vor.u32 1.1754944e-38, %v2607
    %v2609 = vsel %vm2606, %v2608, %v2604
    %v2610 = vmul.f32 1.0, %v2609
    %v2611 = vrcp.pop %v2595
    %v2612 = vmul.f32 %v2595, %v2611
    %v2613 = vsub.f32 1.0, %v2612
    %v2614 = vmul.f32 %v2611, %v2613
    %v2615 = vadd.f32 %v2611, %v2614
    %vm2616 = vweird.f32 %v2595
    %vm2617 = vweird.f32 %v2611
    %vm2618 = vmor %vm2616, %vm2617
    %v2619 = vsel %vm2618, %v2611, %v2615
    %v2620 = vand.u32 2147483647, %v2595
    %vm2621 = vcmp.eq.f32.partialorder %v2620, 8.507059e+37
    %v2622 = vand.u32 %v2595, 2147483648
    %v2623 = vor.u32 1.1754944e-38, %v2622
    %v2624 = vsel %vm2621, %v2623, %v2619
    %v2625 = vmul.f32 1.0, %v2624
    %v2626 = vtanh.pop %v2585
    %v2627 = vtanh.pop %v2587
    %v2628 = vxor.u32 %v2585, 2147483648
    %v2629 = vxor.u32 %v2587, 2147483648
    %v2630 = vmul.f32 %v2628, 1.442695
    %v2631 = vpow.pop %v2630
    %v2632 = vmul.f32 %v2629, 1.442695
    %v2633 = vpow.pop %v2632
    %v2634 = vadd.f32 %v2631, 1.0
    %v2635 = vadd.f32 %v2633, 1.0
    %v2636 = vrcp.pop %v2634
    %v2637 = vmul.f32 %v2634, %v2636
    %v2638 = vsub.f32 1.0, %v2637
    %v2639 = vmul.f32 %v2636, %v2638
    %v2640 = vadd.f32 %v2636, %v2639
    %vm2641 = vweird.f32 %v2634
    %vm2642 = vweird.f32 %v2636
    %vm2643 = vmor %vm2641, %vm2642
    %v2644 = vsel %vm2643, %v2636, %v2640
    %v2645 = vand.u32 2147483647, %v2634
    %vm2646 = vcmp.eq.f32.partialorder %v2645, 8.507059e+37
    %v2647 = vand.u32 %v2634, 2147483648
    %v2648 = vor.u32 1.1754944e-38, %v2647
    %v2649 = vsel %vm2646, %v2648, %v2644
    %v2650 = vmul.f32 1.0, %v2649
    %v2651 = vrcp.pop %v2635
    %v2652 = vmul.f32 %v2635, %v2651
    %v2653 = vsub.f32 1.0, %v2652
    %v2654 = vmul.f32 %v2651, %v2653
    %v2655 = vadd.f32 %v2651, %v2654
    %vm2656 = vweird.f32 %v2635
    %vm2657 = vweird.f32 %v2651
    %vm2658 = vmor %vm2656, %vm2657
    %v2659 = vsel %vm2658, %v2651, %v2655
    %v2660 = vand.u32 2147483647, %v2635
    %vm2661 = vcmp.eq.f32.partialorder %v2660, 8.507059e+37
    %v2662 = vand.u32 %v2635, 2147483648
    %v2663 = vor.u32 1.1754944e-38, %v2662
    %v2664 = vsel %vm2661, %v2663, %v2659
    %v2665 = vmul.f32 1.0, %v2664
    %v2666 = vmul.f32 %v2610, %v2539
    %v2667 = vmul.f32 %v2625, %v2540
    %v2668 = vmul.f32 %v2610, %v2626
    %v2669 = vmul.f32 %v2625, %v2627
    %2672 = vrot.lane.b32.xlu0 %v2668, 64
    %v2673 = vpop.permute.xlu0 %2672
    %2674 = vrot.lane.b32.xlu0 %v2669, 64
    %v2675 = vpop.permute.xlu0 %2674
    %v2678 = vadd.f32 %v2666, %v2673
    %v2679 = vadd.f32 %v2667, %v2675
    %v2680 = vtanh.pop %v2678
    %v2681 = vtanh.pop %v2679
    %v2682 = vmul.f32 %v2650, %v2680
    %v2683 = vmul.f32 %v2665, %v2681
    %v2684 = vld [vmem:[#allocation2 + $0x40] sm:$0xff]
    %v2685 = vld [vmem:[#allocation2 + $0x48] sm:$0xff]
    %v2686 = vld [vmem:[#allocation2 + $0x50] sm:$0xff]
    %v2687 = vld [vmem:[#allocation2 + $0x58] sm:$0xff]
    %v2688 = vpack.c.bf16 %v2683, %v2682
    %2690 = vrot.lane.b32.xlu0 %v2688, 64
    %v2691 = vpop.permute.xlu0 %2690
    %v2693 = vsel %vm483, %v2691, 0
    %2695 = vmatpush.bf16.msra.mxu0 0
    %2696 = vmatpush.bf16.msra.mxu0 0
    %2697 = vmatpush.bf16.msra.mxu0 0
    %2698 = vmatpush.bf16.msra.mxu0 0
    %2699 = vmatpush.bf16.msra.mxu0 %v2407
    %2700 = vmatpush.bf16.msra.mxu0 %v2405
    %2701 = vmatpush.bf16.msra.mxu0 %v2403
    %2702 = vmatpush.bf16.msra.mxu0 %v2401
    %2703 = vmatmul.bf16.gmra.mxu0 %v2693
    %v2704 = vpop.f32.mrf.mxu0
    %v2705 = vadd.f32 0.0, %v2704
    %v2706 = vpop.f32.mrf.mxu0
    %v2707 = vadd.f32 0.0, %v2706
    %2708 = vdwg.mxu0
    %2709 = vmatpush.bf16.msra.mxu0 0
    %2710 = vmatpush.bf16.msra.mxu0 0
    %2711 = vmatpush.bf16.msra.mxu0 0
    %2712 = vmatpush.bf16.msra.mxu0 0
    %2713 = vmatpush.bf16.msra.mxu0 %v2408
    %2714 = vmatpush.bf16.msra.mxu0 %v2406
    %2715 = vmatpush.bf16.msra.mxu0 %v2404
    %2716 = vmatpush.bf16.msra.mxu0 %v2402
    %2717 = vmatmul.bf16.gmra.mxu0 %v2693
    %v2718 = vpop.f32.mrf.mxu0
    %v2719 = vadd.f32 0.0, %v2718
    %v2720 = vpop.f32.mrf.mxu0
    %v2721 = vadd.f32 0.0, %v2720
    %2722 = vdwg.mxu0
    %v2723 = vadd.f32 %v2684, %v2705
    %v2724 = vadd.f32 %v2685, %v2719
    %v2725 = vadd.f32 %v2686, %v2707
    %v2726 = vadd.f32 %v2687, %v2721
    %v2727 = vxor.u32 %v2723, 2147483648
    %v2728 = vxor.u32 %v2725, 2147483648
    %v2729 = vmul.f32 %v2727, 1.442695
    %v2730 = vpow.pop %v2729
    %v2731 = vmul.f32 %v2728, 1.442695
    %v2732 = vpow.pop %v2731
    %v2733 = vadd.f32 %v2730, 1.0
    %v2734 = vadd.f32 %v2732, 1.0
    %v2735 = vrcp.pop %v2733
    %v2736 = vmul.f32 %v2733, %v2735
    %v2737 = vsub.f32 1.0, %v2736
    %v2738 = vmul.f32 %v2735, %v2737
    %v2739 = vadd.f32 %v2735, %v2738
    %vm2740 = vweird.f32 %v2733
    %vm2741 = vweird.f32 %v2735
    %vm2742 = vmor %vm2740, %vm2741
    %v2743 = vsel %vm2742, %v2735, %v2739
    %v2744 = vand.u32 2147483647, %v2733
    %vm2745 = vcmp.eq.f32.partialorder %v2744, 8.507059e+37
    %v2746 = vand.u32 %v2733, 2147483648
    %v2747 = vor.u32 1.1754944e-38, %v2746
    %v2748 = vsel %vm2745, %v2747, %v2743
    %v2749 = vmul.f32 1.0, %v2748
    %v2750 = vrcp.pop %v2734
    %v2751 = vmul.f32 %v2734, %v2750
    %v2752 = vsub.f32 1.0, %v2751
    %v2753 = vmul.f32 %v2750, %v2752
    %v2754 = vadd.f32 %v2750, %v2753
    %vm2755 = vweird.f32 %v2734
    %vm2756 = vweird.f32 %v2750
    %vm2757 = vmor %vm2755, %vm2756
    %v2758 = vsel %vm2757, %v2750, %v2754
    %v2759 = vand.u32 2147483647, %v2734
    %vm2760 = vcmp.eq.f32.partialorder %v2759, 8.507059e+37
    %v2761 = vand.u32 %v2734, 2147483648
    %v2762 = vor.u32 1.1754944e-38, %v2761
    %v2763 = vsel %vm2760, %v2762, %v2758
    %v2764 = vmul.f32 1.0, %v2763
    %v2765 = vtanh.pop %v2724
    %v2766 = vtanh.pop %v2726
    %v2767 = vxor.u32 %v2724, 2147483648
    %v2768 = vxor.u32 %v2726, 2147483648
    %v2769 = vmul.f32 %v2767, 1.442695
    %v2770 = vpow.pop %v2769
    %v2771 = vmul.f32 %v2768, 1.442695
    %v2772 = vpow.pop %v2771
    %v2773 = vadd.f32 %v2770, 1.0
    %v2774 = vadd.f32 %v2772, 1.0
    %v2775 = vrcp.pop %v2773
    %v2776 = vmul.f32 %v2773, %v2775
    %v2777 = vsub.f32 1.0, %v2776
    %v2778 = vmul.f32 %v2775, %v2777
    %v2779 = vadd.f32 %v2775, %v2778
    %vm2780 = vweird.f32 %v2773
    %vm2781 = vweird.f32 %v2775
    %vm2782 = vmor %vm2780, %vm2781
    %v2783 = vsel %vm2782, %v2775, %v2779
    %v2784 = vand.u32 2147483647, %v2773
    %vm2785 = vcmp.eq.f32.partialorder %v2784, 8.507059e+37
    %v2786 = vand.u32 %v2773, 2147483648
    %v2787 = vor.u32 1.1754944e-38, %v2786
    %v2788 = vsel %vm2785, %v2787, %v2783
    %v2789 = vmul.f32 1.0, %v2788
    %v2790 = vrcp.pop %v2774
    %v2791 = vmul.f32 %v2774, %v2790
    %v2792 = vsub.f32 1.0, %v2791
    %v2793 = vmul.f32 %v2790, %v2792
    %v2794 = vadd.f32 %v2790, %v2793
    %vm2795 = vweird.f32 %v2774
    %vm2796 = vweird.f32 %v2790
    %vm2797 = vmor %vm2795, %vm2796
    %v2798 = vsel %vm2797, %v2790, %v2794
    %v2799 = vand.u32 2147483647, %v2774
    %vm2800 = vcmp.eq.f32.partialorder %v2799, 8.507059e+37
    %v2801 = vand.u32 %v2774, 2147483648
    %v2802 = vor.u32 1.1754944e-38, %v2801
    %v2803 = vsel %vm2800, %v2802, %v2798
    %v2804 = vmul.f32 1.0, %v2803
    %v2805 = vmul.f32 %v2749, %v2678
    %v2806 = vmul.f32 %v2764, %v2679
    %v2807 = vmul.f32 %v2749, %v2765
    %v2808 = vmul.f32 %v2764, %v2766
    %2811 = vrot.lane.b32.xlu0 %v2807, 64
    %v2812 = vpop.permute.xlu0 %2811
    %2813 = vrot.lane.b32.xlu0 %v2808, 64
    %v2814 = vpop.permute.xlu0 %2813
    %v2817 = vadd.f32 %v2805, %v2812
    %v2818 = vadd.f32 %v2806, %v2814
    %v2819 = vtanh.pop %v2817
    %v2820 = vtanh.pop %v2818
    %v2821 = vmul.f32 %v2789, %v2819
    %v2822 = vmul.f32 %v2804, %v2820
    %v2823 = vld [vmem:[#allocation2 + $0x60] sm:$0xff]
    %v2824 = vld [vmem:[#allocation2 + $0x68] sm:$0xff]
    %v2825 = vld [vmem:[#allocation2 + $0x70] sm:$0xff]
    %v2826 = vld [vmem:[#allocation2 + $0x78] sm:$0xff]
    %v2827 = vpack.c.bf16 %v2822, %v2821
    %2829 = vrot.lane.b32.xlu0 %v2827, 64
    %v2830 = vpop.permute.xlu0 %2829
    %v2832 = vsel %vm483, %v2830, 0
    %2834 = vmatpush.bf16.msra.mxu0 0
    %2835 = vmatpush.bf16.msra.mxu0 0
    %2836 = vmatpush.bf16.msra.mxu0 0
    %2837 = vmatpush.bf16.msra.mxu0 0
    %2838 = vmatpush.bf16.msra.mxu0 %v2407
    %2839 = vmatpush.bf16.msra.mxu0 %v2405
    %2840 = vmatpush.bf16.msra.mxu0 %v2403
    %2841 = vmatpush.bf16.msra.mxu0 %v2401
    %2842 = vmatmul.bf16.gmra.mxu0 %v2832
    %v2843 = vpop.f32.mrf.mxu0
    %v2844 = vadd.f32 0.0, %v2843
    %v2845 = vpop.f32.mrf.mxu0
    %v2846 = vadd.f32 0.0, %v2845
    %2847 = vdwg.mxu0
    %2848 = vmatpush.bf16.msra.mxu0 0
    %2849 = vmatpush.bf16.msra.mxu0 0
    %2850 = vmatpush.bf16.msra.mxu0 0
    %2851 = vmatpush.bf16.msra.mxu0 0
    %2852 = vmatpush.bf16.msra.mxu0 %v2408
    %2853 = vmatpush.bf16.msra.mxu0 %v2406
    %2854 = vmatpush.bf16.msra.mxu0 %v2404
    %2855 = vmatpush.bf16.msra.mxu0 %v2402
    %2856 = vmatmul.bf16.gmra.mxu0 %v2832
    %v2857 = vpop.f32.mrf.mxu0
    %v2858 = vadd.f32 0.0, %v2857
    %v2859 = vpop.f32.mrf.mxu0
    %v2860 = vadd.f32 0.0, %v2859
    %2861 = vdwg.mxu0
    %v2862 = vadd.f32 %v2823, %v2844
    %v2863 = vadd.f32 %v2824, %v2858
    %v2864 = vadd.f32 %v2825, %v2846
    %v2865 = vadd.f32 %v2826, %v2860
    %v2866 = vxor.u32 %v2862, 2147483648
    %v2867 = vxor.u32 %v2864, 2147483648
    %v2868 = vmul.f32 %v2866, 1.442695
    %v2869 = vpow.pop %v2868
    %v2870 = vmul.f32 %v2867, 1.442695
    %v2871 = vpow.pop %v2870
    %v2872 = vadd.f32 %v2869, 1.0
    %v2873 = vadd.f32 %v2871, 1.0
    %v2874 = vrcp.pop %v2872
    %v2875 = vmul.f32 %v2872, %v2874
    %v2876 = vsub.f32 1.0, %v2875
    %v2877 = vmul.f32 %v2874, %v2876
    %v2878 = vadd.f32 %v2874, %v2877
    %vm2879 = vweird.f32 %v2872
    %vm2880 = vweird.f32 %v2874
    %vm2881 = vmor %vm2879, %vm2880
    %v2882 = vsel %vm2881, %v2874, %v2878
    %v2883 = vand.u32 2147483647, %v2872
    %vm2884 = vcmp.eq.f32.partialorder %v2883, 8.507059e+37
    %v2885 = vand.u32 %v2872, 2147483648
    %v2886 = vor.u32 1.1754944e-38, %v2885
    %v2887 = vsel %vm2884, %v2886, %v2882
    %v2888 = vmul.f32 1.0, %v2887
    %v2889 = vrcp.pop %v2873
    %v2890 = vmul.f32 %v2873, %v2889
    %v2891 = vsub.f32 1.0, %v2890
    %v2892 = vmul.f32 %v2889, %v2891
    %v2893 = vadd.f32 %v2889, %v2892
    %vm2894 = vweird.f32 %v2873
    %vm2895 = vweird.f32 %v2889
    %vm2896 = vmor %vm2894, %vm2895
    %v2897 = vsel %vm2896, %v2889, %v2893
    %v2898 = vand.u32 2147483647, %v2873
    %vm2899 = vcmp.eq.f32.partialorder %v2898, 8.507059e+37
    %v2900 = vand.u32 %v2873, 2147483648
    %v2901 = vor.u32 1.1754944e-38, %v2900
    %v2902 = vsel %vm2899, %v2901, %v2897
    %v2903 = vmul.f32 1.0, %v2902
    %v2904 = vtanh.pop %v2863
    %v2905 = vtanh.pop %v2865
    %v2906 = vxor.u32 %v2863, 2147483648
    %v2907 = vxor.u32 %v2865, 2147483648
    %v2908 = vmul.f32 %v2906, 1.442695
    %v2909 = vpow.pop %v2908
    %v2910 = vmul.f32 %v2907, 1.442695
    %v2911 = vpow.pop %v2910
    %v2912 = vadd.f32 %v2909, 1.0
    %v2913 = vadd.f32 %v2911, 1.0
    %v2914 = vrcp.pop %v2912
    %v2915 = vmul.f32 %v2912, %v2914
    %v2916 = vsub.f32 1.0, %v2915
    %v2917 = vmul.f32 %v2914, %v2916
    %v2918 = vadd.f32 %v2914, %v2917
    %vm2919 = vweird.f32 %v2912
    %vm2920 = vweird.f32 %v2914
    %vm2921 = vmor %vm2919, %vm2920
    %v2922 = vsel %vm2921, %v2914, %v2918
    %v2923 = vand.u32 2147483647, %v2912
    %vm2924 = vcmp.eq.f32.partialorder %v2923, 8.507059e+37
    %v2925 = vand.u32 %v2912, 2147483648
    %v2926 = vor.u32 1.1754944e-38, %v2925
    %v2927 = vsel %vm2924, %v2926, %v2922
    %v2928 = vmul.f32 1.0, %v2927
    %v2929 = vrcp.pop %v2913
    %v2930 = vmul.f32 %v2913, %v2929
    %v2931 = vsub.f32 1.0, %v2930
    %v2932 = vmul.f32 %v2929, %v2931
    %v2933 = vadd.f32 %v2929, %v2932
    %vm2934 = vweird.f32 %v2913
    %vm2935 = vweird.f32 %v2929
    %vm2936 = vmor %vm2934, %vm2935
    %v2937 = vsel %vm2936, %v2929, %v2933
    %v2938 = vand.u32 2147483647, %v2913
    %vm2939 = vcmp.eq.f32.partialorder %v2938, 8.507059e+37
    %v2940 = vand.u32 %v2913, 2147483648
    %v2941 = vor.u32 1.1754944e-38, %v2940
    %v2942 = vsel %vm2939, %v2941, %v2937
    %v2943 = vmul.f32 1.0, %v2942
    %v2944 = vmul.f32 %v2888, %v2817
    %v2945 = vmul.f32 %v2903, %v2818
    %v2946 = vmul.f32 %v2888, %v2904
    %v2947 = vmul.f32 %v2903, %v2905
    %2950 = vrot.lane.b32.xlu0 %v2946, 64
    %v2951 = vpop.permute.xlu0 %2950
    %2952 = vrot.lane.b32.xlu0 %v2947, 64
    %v2953 = vpop.permute.xlu0 %2952
    %v2956 = vadd.f32 %v2944, %v2951
    %v2957 = vadd.f32 %v2945, %v2953
    %v2958 = vtanh.pop %v2956
    %v2959 = vtanh.pop %v2957
    %v2960 = vmul.f32 %v2928, %v2958
    %v2961 = vmul.f32 %v2943, %v2959
    %v2962 = vld [vmem:[#allocation2 + $0x80] sm:$0xff]
    %v2963 = vld [vmem:[#allocation2 + $0x88] sm:$0xff]
    %v2964 = vld [vmem:[#allocation2 + $0x90] sm:$0xff]
    %v2965 = vld [vmem:[#allocation2 + $0x98] sm:$0xff]
    %v2966 = vpack.c.bf16 %v2961, %v2960
    %2968 = vrot.lane.b32.xlu0 %v2966, 64
    %v2969 = vpop.permute.xlu0 %2968
    %v2971 = vsel %vm483, %v2969, 0
    %2973 = vmatpush.bf16.msra.mxu0 0
    %2974 = vmatpush.bf16.msra.mxu0 0
    %2975 = vmatpush.bf16.msra.mxu0 0
    %2976 = vmatpush.bf16.msra.mxu0 0
    %2977 = vmatpush.bf16.msra.mxu0 %v2407
    %2978 = vmatpush.bf16.msra.mxu0 %v2405
    %2979 = vmatpush.bf16.msra.mxu0 %v2403
    %2980 = vmatpush.bf16.msra.mxu0 %v2401
    %2981 = vmatmul.bf16.gmra.mxu0 %v2971
    %v2982 = vpop.f32.mrf.mxu0
    %v2983 = vadd.f32 0.0, %v2982
    %v2984 = vpop.f32.mrf.mxu0
    %v2985 = vadd.f32 0.0, %v2984
    %2986 = vdwg.mxu0
    %2987 = vmatpush.bf16.msra.mxu0 0
    %2988 = vmatpush.bf16.msra.mxu0 0
    %2989 = vmatpush.bf16.msra.mxu0 0
    %2990 = vmatpush.bf16.msra.mxu0 0
    %2991 = vmatpush.bf16.msra.mxu0 %v2408
    %2992 = vmatpush.bf16.msra.mxu0 %v2406
    %2993 = vmatpush.bf16.msra.mxu0 %v2404
    %2994 = vmatpush.bf16.msra.mxu0 %v2402
    %2995 = vmatmul.bf16.gmra.mxu0 %v2971
    %v2996 = vpop.f32.mrf.mxu0
    %v2997 = vadd.f32 0.0, %v2996
    %v2998 = vpop.f32.mrf.mxu0
    %v2999 = vadd.f32 0.0, %v2998
    %3000 = vdwg.mxu0
    %v3001 = vadd.f32 %v2962, %v2983
    %v3002 = vadd.f32 %v2963, %v2997
    %v3003 = vadd.f32 %v2964, %v2985
    %v3004 = vadd.f32 %v2965, %v2999
    %v3005 = vxor.u32 %v3001, 2147483648
    %v3006 = vxor.u32 %v3003, 2147483648
    %v3007 = vmul.f32 %v3005, 1.442695
    %v3008 = vpow.pop %v3007
    %v3009 = vmul.f32 %v3006, 1.442695
    %v3010 = vpow.pop %v3009
    %v3011 = vadd.f32 %v3008, 1.0
    %v3012 = vadd.f32 %v3010, 1.0
    %v3013 = vrcp.pop %v3011
    %v3014 = vmul.f32 %v3011, %v3013
    %v3015 = vsub.f32 1.0, %v3014
    %v3016 = vmul.f32 %v3013, %v3015
    %v3017 = vadd.f32 %v3013, %v3016
    %vm3018 = vweird.f32 %v3011
    %vm3019 = vweird.f32 %v3013
    %vm3020 = vmor %vm3018, %vm3019
    %v3021 = vsel %vm3020, %v3013, %v3017
    %v3022 = vand.u32 2147483647, %v3011
    %vm3023 = vcmp.eq.f32.partialorder %v3022, 8.507059e+37
    %v3024 = vand.u32 %v3011, 2147483648
    %v3025 = vor.u32 1.1754944e-38, %v3024
    %v3026 = vsel %vm3023, %v3025, %v3021
    %v3027 = vmul.f32 1.0, %v3026
    %v3028 = vrcp.pop %v3012
    %v3029 = vmul.f32 %v3012, %v3028
    %v3030 = vsub.f32 1.0, %v3029
    %v3031 = vmul.f32 %v3028, %v3030
    %v3032 = vadd.f32 %v3028, %v3031
    %vm3033 = vweird.f32 %v3012
    %vm3034 = vweird.f32 %v3028
    %vm3035 = vmor %vm3033, %vm3034
    %v3036 = vsel %vm3035, %v3028, %v3032
    %v3037 = vand.u32 2147483647, %v3012
    %vm3038 = vcmp.eq.f32.partialorder %v3037, 8.507059e+37
    %v3039 = vand.u32 %v3012, 2147483648
    %v3040 = vor.u32 1.1754944e-38, %v3039
    %v3041 = vsel %vm3038, %v3040, %v3036
    %v3042 = vmul.f32 1.0, %v3041
    %v3043 = vtanh.pop %v3002
    %v3044 = vtanh.pop %v3004
    %v3045 = vxor.u32 %v3002, 2147483648
    %v3046 = vxor.u32 %v3004, 2147483648
    %v3047 = vmul.f32 %v3045, 1.442695
    %v3048 = vpow.pop %v3047
    %v3049 = vmul.f32 %v3046, 1.442695
    %v3050 = vpow.pop %v3049
    %v3051 = vadd.f32 %v3048, 1.0
    %v3052 = vadd.f32 %v3050, 1.0
    %v3053 = vrcp.pop %v3051
    %v3054 = vmul.f32 %v3051, %v3053
    %v3055 = vsub.f32 1.0, %v3054
    %v3056 = vmul.f32 %v3053, %v3055
    %v3057 = vadd.f32 %v3053, %v3056
    %vm3058 = vweird.f32 %v3051
    %vm3059 = vweird.f32 %v3053
    %vm3060 = vmor %vm3058, %vm3059
    %v3061 = vsel %vm3060, %v3053, %v3057
    %v3062 = vand.u32 2147483647, %v3051
    %vm3063 = vcmp.eq.f32.partialorder %v3062, 8.507059e+37
    %v3064 = vand.u32 %v3051, 2147483648
    %v3065 = vor.u32 1.1754944e-38, %v3064
    %v3066 = vsel %vm3063, %v3065, %v3061
    %v3067 = vmul.f32 1.0, %v3066
    %v3068 = vrcp.pop %v3052
    %v3069 = vmul.f32 %v3052, %v3068
    %v3070 = vsub.f32 1.0, %v3069
    %v3071 = vmul.f32 %v3068, %v3070
    %v3072 = vadd.f32 %v3068, %v3071
    %vm3073 = vweird.f32 %v3052
    %vm3074 = vweird.f32 %v3068
    %vm3075 = vmor %vm3073, %vm3074
    %v3076 = vsel %vm3075, %v3068, %v3072
    %v3077 = vand.u32 2147483647, %v3052
    %vm3078 = vcmp.eq.f32.partialorder %v3077, 8.507059e+37
    %v3079 = vand.u32 %v3052, 2147483648
    %v3080 = vor.u32 1.1754944e-38, %v3079
    %v3081 = vsel %vm3078, %v3080, %v3076
    %v3082 = vmul.f32 1.0, %v3081
    %v3083 = vmul.f32 %v3027, %v2956
    %v3084 = vmul.f32 %v3042, %v2957
    %v3085 = vmul.f32 %v3027, %v3043
    %v3086 = vmul.f32 %v3042, %v3044
    %3089 = vrot.lane.b32.xlu0 %v3085, 64
    %v3090 = vpop.permute.xlu0 %3089
    %3091 = vrot.lane.b32.xlu0 %v3086, 64
    %v3092 = vpop.permute.xlu0 %3091
    %v3095 = vadd.f32 %v3083, %v3090
    %v3096 = vadd.f32 %v3084, %v3092
    %v3097 = vtanh.pop %v3095
    %v3098 = vtanh.pop %v3096
    %v3099 = vmul.f32 %v3067, %v3097
    %v3100 = vmul.f32 %v3082, %v3098
    %v3101 = vld [vmem:[#allocation2 + $0xa0] sm:$0xff]
    %v3102 = vld [vmem:[#allocation2 + $0xa8] sm:$0xff]
    %v3103 = vld [vmem:[#allocation2 + $0xb0] sm:$0xff]
    %v3104 = vld [vmem:[#allocation2 + $0xb8] sm:$0xff]
    %v3105 = vpack.c.bf16 %v3100, %v3099
    %3107 = vrot.lane.b32.xlu0 %v3105, 64
    %v3108 = vpop.permute.xlu0 %3107
    %v3110 = vsel %vm483, %v3108, 0
    %3112 = vmatpush.bf16.msra.mxu0 0
    %3113 = vmatpush.bf16.msra.mxu0 0
    %3114 = vmatpush.bf16.msra.mxu0 0
    %3115 = vmatpush.bf16.msra.mxu0 0
    %3116 = vmatpush.bf16.msra.mxu0 %v2407
    %3117 = vmatpush.bf16.msra.mxu0 %v2405
    %3118 = vmatpush.bf16.msra.mxu0 %v2403
    %3119 = vmatpush.bf16.msra.mxu0 %v2401
    %3120 = vmatmul.bf16.gmra.mxu0 %v3110
    %v3121 = vpop.f32.mrf.mxu0
    %v3122 = vadd.f32 0.0, %v3121
    %v3123 = vpop.f32.mrf.mxu0
    %v3124 = vadd.f32 0.0, %v3123
    %3125 = vdwg.mxu0
    %3126 = vmatpush.bf16.msra.mxu0 0
    %3127 = vmatpush.bf16.msra.mxu0 0
    %3128 = vmatpush.bf16.msra.mxu0 0
    %3129 = vmatpush.bf16.msra.mxu0 0
    %3130 = vmatpush.bf16.msra.mxu0 %v2408
    %3131 = vmatpush.bf16.msra.mxu0 %v2406
    %3132 = vmatpush.bf16.msra.mxu0 %v2404
    %3133 = vmatpush.bf16.msra.mxu0 %v2402
    %3134 = vmatmul.bf16.gmra.mxu0 %v3110
    %v3135 = vpop.f32.mrf.mxu0
    %v3136 = vadd.f32 0.0, %v3135
    %v3137 = vpop.f32.mrf.mxu0
    %v3138 = vadd.f32 0.0, %v3137
    %3139 = vdwg.mxu0
    %v3140 = vadd.f32 %v3101, %v3122
    %v3141 = vadd.f32 %v3102, %v3136
    %v3142 = vadd.f32 %v3103, %v3124
    %v3143 = vadd.f32 %v3104, %v3138
    %v3144 = vxor.u32 %v3140, 2147483648
    %v3145 = vxor.u32 %v3142, 2147483648
    %v3146 = vmul.f32 %v3144, 1.442695
    %v3147 = vpow.pop %v3146
    %v3148 = vmul.f32 %v3145, 1.442695
    %v3149 = vpow.pop %v3148
    %v3150 = vadd.f32 %v3147, 1.0
    %v3151 = vadd.f32 %v3149, 1.0
    %v3152 = vrcp.pop %v3150
    %v3153 = vmul.f32 %v3150, %v3152
    %v3154 = vsub.f32 1.0, %v3153
    %v3155 = vmul.f32 %v3152, %v3154
    %v3156 = vadd.f32 %v3152, %v3155
    %vm3157 = vweird.f32 %v3150
    %vm3158 = vweird.f32 %v3152
    %vm3159 = vmor %vm3157, %vm3158
    %v3160 = vsel %vm3159, %v3152, %v3156
    %v3161 = vand.u32 2147483647, %v3150
    %vm3162 = vcmp.eq.f32.partialorder %v3161, 8.507059e+37
    %v3163 = vand.u32 %v3150, 2147483648
    %v3164 = vor.u32 1.1754944e-38, %v3163
    %v3165 = vsel %vm3162, %v3164, %v3160
    %v3166 = vmul.f32 1.0, %v3165
    %v3167 = vrcp.pop %v3151
    %v3168 = vmul.f32 %v3151, %v3167
    %v3169 = vsub.f32 1.0, %v3168
    %v3170 = vmul.f32 %v3167, %v3169
    %v3171 = vadd.f32 %v3167, %v3170
    %vm3172 = vweird.f32 %v3151
    %vm3173 = vweird.f32 %v3167
    %vm3174 = vmor %vm3172, %vm3173
    %v3175 = vsel %vm3174, %v3167, %v3171
    %v3176 = vand.u32 2147483647, %v3151
    %vm3177 = vcmp.eq.f32.partialorder %v3176, 8.507059e+37
    %v3178 = vand.u32 %v3151, 2147483648
    %v3179 = vor.u32 1.1754944e-38, %v3178
    %v3180 = vsel %vm3177, %v3179, %v3175
    %v3181 = vmul.f32 1.0, %v3180
    %v3182 = vtanh.pop %v3141
    %v3183 = vtanh.pop %v3143
    %v3184 = vxor.u32 %v3141, 2147483648
    %v3185 = vxor.u32 %v3143, 2147483648
    %v3186 = vmul.f32 %v3184, 1.442695
    %v3187 = vpow.pop %v3186
    %v3188 = vmul.f32 %v3185, 1.442695
    %v3189 = vpow.pop %v3188
    %v3190 = vadd.f32 %v3187, 1.0
    %v3191 = vadd.f32 %v3189, 1.0
    %v3192 = vrcp.pop %v3190
    %v3193 = vmul.f32 %v3190, %v3192
    %v3194 = vsub.f32 1.0, %v3193
    %v3195 = vmul.f32 %v3192, %v3194
    %v3196 = vadd.f32 %v3192, %v3195
    %vm3197 = vweird.f32 %v3190
    %vm3198 = vweird.f32 %v3192
    %vm3199 = vmor %vm3197, %vm3198
    %v3200 = vsel %vm3199, %v3192, %v3196
    %v3201 = vand.u32 2147483647, %v3190
    %vm3202 = vcmp.eq.f32.partialorder %v3201, 8.507059e+37
    %v3203 = vand.u32 %v3190, 2147483648
    %v3204 = vor.u32 1.1754944e-38, %v3203
    %v3205 = vsel %vm3202, %v3204, %v3200
    %v3206 = vmul.f32 1.0, %v3205
    %v3207 = vrcp.pop %v3191
    %v3208 = vmul.f32 %v3191, %v3207
    %v3209 = vsub.f32 1.0, %v3208
    %v3210 = vmul.f32 %v3207, %v3209
    %v3211 = vadd.f32 %v3207, %v3210
    %vm3212 = vweird.f32 %v3191
    %vm3213 = vweird.f32 %v3207
    %vm3214 = vmor %vm3212, %vm3213
    %v3215 = vsel %vm3214, %v3207, %v3211
    %v3216 = vand.u32 2147483647, %v3191
    %vm3217 = vcmp.eq.f32.partialorder %v3216, 8.507059e+37
    %v3218 = vand.u32 %v3191, 2147483648
    %v3219 = vor.u32 1.1754944e-38, %v3218
    %v3220 = vsel %vm3217, %v3219, %v3215
    %v3221 = vmul.f32 1.0, %v3220
    %v3222 = vmul.f32 %v3166, %v3095
    %v3223 = vmul.f32 %v3181, %v3096
    %v3224 = vmul.f32 %v3166, %v3182
    %v3225 = vmul.f32 %v3181, %v3183
    %3228 = vrot.lane.b32.xlu0 %v3224, 64
    %v3229 = vpop.permute.xlu0 %3228
    %3230 = vrot.lane.b32.xlu0 %v3225, 64
    %v3231 = vpop.permute.xlu0 %3230
    %v3234 = vadd.f32 %v3222, %v3229
    %v3235 = vadd.f32 %v3223, %v3231
    %v3236 = vtanh.pop %v3234
    %v3237 = vtanh.pop %v3235
    %v3238 = vmul.f32 %v3206, %v3236
    %v3239 = vmul.f32 %v3221, %v3237
    %v3240 = vld [vmem:[#allocation2 + $0xc0] sm:$0xff]
    %v3241 = vld [vmem:[#allocation2 + $0xc8] sm:$0xff]
    %v3242 = vld [vmem:[#allocation2 + $0xd0] sm:$0xff]
    %v3243 = vld [vmem:[#allocation2 + $0xd8] sm:$0xff]
    %v3244 = vpack.c.bf16 %v3239, %v3238
    %3246 = vrot.lane.b32.xlu0 %v3244, 64
    %v3247 = vpop.permute.xlu0 %3246
    %v3249 = vsel %vm483, %v3247, 0
    %3251 = vmatpush.bf16.msra.mxu0 0
    %3252 = vmatpush.bf16.msra.mxu0 0
    %3253 = vmatpush.bf16.msra.mxu0 0
    %3254 = vmatpush.bf16.msra.mxu0 0
    %3255 = vmatpush.bf16.msra.mxu0 %v2407
    %3256 = vmatpush.bf16.msra.mxu0 %v2405
    %3257 = vmatpush.bf16.msra.mxu0 %v2403
    %3258 = vmatpush.bf16.msra.mxu0 %v2401
    %3259 = vmatmul.bf16.gmra.mxu0 %v3249
    %v3260 = vpop.f32.mrf.mxu0
    %v3261 = vadd.f32 0.0, %v3260
    %v3262 = vpop.f32.mrf.mxu0
    %v3263 = vadd.f32 0.0, %v3262
    %3264 = vdwg.mxu0
    %3265 = vmatpush.bf16.msra.mxu0 0
    %3266 = vmatpush.bf16.msra.mxu0 0
    %3267 = vmatpush.bf16.msra.mxu0 0
    %3268 = vmatpush.bf16.msra.mxu0 0
    %3269 = vmatpush.bf16.msra.mxu0 %v2408
    %3270 = vmatpush.bf16.msra.mxu0 %v2406
    %3271 = vmatpush.bf16.msra.mxu0 %v2404
    %3272 = vmatpush.bf16.msra.mxu0 %v2402
    %3273 = vmatmul.bf16.gmra.mxu0 %v3249
    %v3274 = vpop.f32.mrf.mxu0
    %v3275 = vadd.f32 0.0, %v3274
    %v3276 = vpop.f32.mrf.mxu0
    %v3277 = vadd.f32 0.0, %v3276
    %3278 = vdwg.mxu0
    %v3279 = vadd.f32 %v3240, %v3261
    %v3280 = vadd.f32 %v3241, %v3275
    %v3281 = vadd.f32 %v3242, %v3263
    %v3282 = vadd.f32 %v3243, %v3277
    %v3283 = vxor.u32 %v3279, 2147483648
    %v3284 = vxor.u32 %v3281, 2147483648
    %v3285 = vmul.f32 %v3283, 1.442695
    %v3286 = vpow.pop %v3285
    %v3287 = vmul.f32 %v3284, 1.442695
    %v3288 = vpow.pop %v3287
    %v3289 = vadd.f32 %v3286, 1.0
    %v3290 = vadd.f32 %v3288, 1.0
    %v3291 = vrcp.pop %v3289
    %v3292 = vmul.f32 %v3289, %v3291
    %v3293 = vsub.f32 1.0, %v3292
    %v3294 = vmul.f32 %v3291, %v3293
    %v3295 = vadd.f32 %v3291, %v3294
    %vm3296 = vweird.f32 %v3289
    %vm3297 = vweird.f32 %v3291
    %vm3298 = vmor %vm3296, %vm3297
    %v3299 = vsel %vm3298, %v3291, %v3295
    %v3300 = vand.u32 2147483647, %v3289
    %vm3301 = vcmp.eq.f32.partialorder %v3300, 8.507059e+37
    %v3302 = vand.u32 %v3289, 2147483648
    %v3303 = vor.u32 1.1754944e-38, %v3302
    %v3304 = vsel %vm3301, %v3303, %v3299
    %v3305 = vmul.f32 1.0, %v3304
    %v3306 = vrcp.pop %v3290
    %v3307 = vmul.f32 %v3290, %v3306
    %v3308 = vsub.f32 1.0, %v3307
    %v3309 = vmul.f32 %v3306, %v3308
    %v3310 = vadd.f32 %v3306, %v3309
    %vm3311 = vweird.f32 %v3290
    %vm3312 = vweird.f32 %v3306
    %vm3313 = vmor %vm3311, %vm3312
    %v3314 = vsel %vm3313, %v3306, %v3310
    %v3315 = vand.u32 2147483647, %v3290
    %vm3316 = vcmp.eq.f32.partialorder %v3315, 8.507059e+37
    %v3317 = vand.u32 %v3290, 2147483648
    %v3318 = vor.u32 1.1754944e-38, %v3317
    %v3319 = vsel %vm3316, %v3318, %v3314
    %v3320 = vmul.f32 1.0, %v3319
    %v3321 = vtanh.pop %v3280
    %v3322 = vtanh.pop %v3282
    %v3323 = vxor.u32 %v3280, 2147483648
    %v3324 = vxor.u32 %v3282, 2147483648
    %v3325 = vmul.f32 %v3323, 1.442695
    %v3326 = vpow.pop %v3325
    %v3327 = vmul.f32 %v3324, 1.442695
    %v3328 = vpow.pop %v3327
    %v3329 = vadd.f32 %v3326, 1.0
    %v3330 = vadd.f32 %v3328, 1.0
    %v3331 = vrcp.pop %v3329
    %v3332 = vmul.f32 %v3329, %v3331
    %v3333 = vsub.f32 1.0, %v3332
    %v3334 = vmul.f32 %v3331, %v3333
    %v3335 = vadd.f32 %v3331, %v3334
    %vm3336 = vweird.f32 %v3329
    %vm3337 = vweird.f32 %v3331
    %vm3338 = vmor %vm3336, %vm3337
    %v3339 = vsel %vm3338, %v3331, %v3335
    %v3340 = vand.u32 2147483647, %v3329
    %vm3341 = vcmp.eq.f32.partialorder %v3340, 8.507059e+37
    %v3342 = vand.u32 %v3329, 2147483648
    %v3343 = vor.u32 1.1754944e-38, %v3342
    %v3344 = vsel %vm3341, %v3343, %v3339
    %v3345 = vmul.f32 1.0, %v3344
    %v3346 = vrcp.pop %v3330
    %v3347 = vmul.f32 %v3330, %v3346
    %v3348 = vsub.f32 1.0, %v3347
    %v3349 = vmul.f32 %v3346, %v3348
    %v3350 = vadd.f32 %v3346, %v3349
    %vm3351 = vweird.f32 %v3330
    %vm3352 = vweird.f32 %v3346
    %vm3353 = vmor %vm3351, %vm3352
    %v3354 = vsel %vm3353, %v3346, %v3350
    %v3355 = vand.u32 2147483647, %v3330
    %vm3356 = vcmp.eq.f32.partialorder %v3355, 8.507059e+37
    %v3357 = vand.u32 %v3330, 2147483648
    %v3358 = vor.u32 1.1754944e-38, %v3357
    %v3359 = vsel %vm3356, %v3358, %v3354
    %v3360 = vmul.f32 1.0, %v3359
    %v3361 = vmul.f32 %v3305, %v3234
    %v3362 = vmul.f32 %v3320, %v3235
    %v3363 = vmul.f32 %v3305, %v3321
    %v3364 = vmul.f32 %v3320, %v3322
    %3367 = vrot.lane.b32.xlu0 %v3363, 64
    %v3368 = vpop.permute.xlu0 %3367
    %3369 = vrot.lane.b32.xlu0 %v3364, 64
    %v3370 = vpop.permute.xlu0 %3369
    %v3373 = vadd.f32 %v3361, %v3368
    %v3374 = vadd.f32 %v3362, %v3370
    %v3375 = vtanh.pop %v3373
    %v3376 = vtanh.pop %v3374
    %v3377 = vmul.f32 %v3345, %v3375
    %v3378 = vmul.f32 %v3360, %v3376
    %v3379 = vld [vmem:[#allocation2 + $0xe0] sm:$0xff]
    %v3380 = vld [vmem:[#allocation2 + $0xe8] sm:$0xff]
    %v3381 = vld [vmem:[#allocation2 + $0xf0] sm:$0xff]
    %v3382 = vld [vmem:[#allocation2 + $0xf8] sm:$0xff]
    %v3383 = vpack.c.bf16 %v3378, %v3377
    %3385 = vrot.lane.b32.xlu0 %v3383, 64
    %v3386 = vpop.permute.xlu0 %3385
    %v3388 = vsel %vm483, %v3386, 0
    %3390 = vmatpush.bf16.msra.mxu0 0
    %3391 = vmatpush.bf16.msra.mxu0 0
    %3392 = vmatpush.bf16.msra.mxu0 0
    %3393 = vmatpush.bf16.msra.mxu0 0
    %3394 = vmatpush.bf16.msra.mxu0 %v2407
    %3395 = vmatpush.bf16.msra.mxu0 %v2405
    %3396 = vmatpush.bf16.msra.mxu0 %v2403
    %3397 = vmatpush.bf16.msra.mxu0 %v2401
    %3398 = vmatmul.bf16.gmra.mxu0 %v3388
    %v3399 = vpop.f32.mrf.mxu0
    %v3400 = vadd.f32 0.0, %v3399
    %v3401 = vpop.f32.mrf.mxu0
    %v3402 = vadd.f32 0.0, %v3401
    %3403 = vdwg.mxu0
    %3404 = vmatpush.bf16.msra.mxu0 0
    %3405 = vmatpush.bf16.msra.mxu0 0
    %3406 = vmatpush.bf16.msra.mxu0 0
    %3407 = vmatpush.bf16.msra.mxu0 0
    %3408 = vmatpush.bf16.msra.mxu0 %v2408
    %3409 = vmatpush.bf16.msra.mxu0 %v2406
    %3410 = vmatpush.bf16.msra.mxu0 %v2404
    %3411 = vmatpush.bf16.msra.mxu0 %v2402
    %3412 = vmatmul.bf16.gmra.mxu0 %v3388
    %v3413 = vpop.f32.mrf.mxu0
    %v3414 = vadd.f32 0.0, %v3413
    %v3415 = vpop.f32.mrf.mxu0
    %v3416 = vadd.f32 0.0, %v3415
    %3417 = vdwg.mxu0
    %v3418 = vadd.f32 %v3379, %v3400
    %v3419 = vadd.f32 %v3380, %v3414
    %v3420 = vadd.f32 %v3381, %v3402
    %v3421 = vadd.f32 %v3382, %v3416
    %v3422 = vxor.u32 %v3418, 2147483648
    %v3423 = vxor.u32 %v3420, 2147483648
    %v3424 = vmul.f32 %v3422, 1.442695
    %v3425 = vpow.pop %v3424
    %v3426 = vmul.f32 %v3423, 1.442695
    %v3427 = vpow.pop %v3426
    %v3428 = vadd.f32 %v3425, 1.0
    %v3429 = vadd.f32 %v3427, 1.0
    %v3430 = vrcp.pop %v3428
    %v3431 = vmul.f32 %v3428, %v3430
    %v3432 = vsub.f32 1.0, %v3431
    %v3433 = vmul.f32 %v3430, %v3432
    %v3434 = vadd.f32 %v3430, %v3433
    %vm3435 = vweird.f32 %v3428
    %vm3436 = vweird.f32 %v3430
    %vm3437 = vmor %vm3435, %vm3436
    %v3438 = vsel %vm3437, %v3430, %v3434
    %v3439 = vand.u32 2147483647, %v3428
    %vm3440 = vcmp.eq.f32.partialorder %v3439, 8.507059e+37
    %v3441 = vand.u32 %v3428, 2147483648
    %v3442 = vor.u32 1.1754944e-38, %v3441
    %v3443 = vsel %vm3440, %v3442, %v3438
    %v3444 = vmul.f32 1.0, %v3443
    %v3445 = vrcp.pop %v3429
    %v3446 = vmul.f32 %v3429, %v3445
    %v3447 = vsub.f32 1.0, %v3446
    %v3448 = vmul.f32 %v3445, %v3447
    %v3449 = vadd.f32 %v3445, %v3448
    %vm3450 = vweird.f32 %v3429
    %vm3451 = vweird.f32 %v3445
    %vm3452 = vmor %vm3450, %vm3451
    %v3453 = vsel %vm3452, %v3445, %v3449
    %v3454 = vand.u32 2147483647, %v3429
    %vm3455 = vcmp.eq.f32.partialorder %v3454, 8.507059e+37
    %v3456 = vand.u32 %v3429, 2147483648
    %v3457 = vor.u32 1.1754944e-38, %v3456
    %v3458 = vsel %vm3455, %v3457, %v3453
    %v3459 = vmul.f32 1.0, %v3458
    %v3460 = vtanh.pop %v3419
    %v3461 = vtanh.pop %v3421
    %v3462 = vxor.u32 %v3419, 2147483648
    %v3463 = vxor.u32 %v3421, 2147483648
    %v3464 = vmul.f32 %v3462, 1.442695
    %v3465 = vpow.pop %v3464
    %v3466 = vmul.f32 %v3463, 1.442695
    %v3467 = vpow.pop %v3466
    %v3468 = vadd.f32 %v3465, 1.0
    %v3469 = vadd.f32 %v3467, 1.0
    %v3470 = vrcp.pop %v3468
    %v3471 = vmul.f32 %v3468, %v3470
    %v3472 = vsub.f32 1.0, %v3471
    %v3473 = vmul.f32 %v3470, %v3472
    %v3474 = vadd.f32 %v3470, %v3473
    %vm3475 = vweird.f32 %v3468
    %vm3476 = vweird.f32 %v3470
    %vm3477 = vmor %vm3475, %vm3476
    %v3478 = vsel %vm3477, %v3470, %v3474
    %v3479 = vand.u32 2147483647, %v3468
    %vm3480 = vcmp.eq.f32.partialorder %v3479, 8.507059e+37
    %v3481 = vand.u32 %v3468, 2147483648
    %v3482 = vor.u32 1.1754944e-38, %v3481
    %v3483 = vsel %vm3480, %v3482, %v3478
    %v3484 = vmul.f32 1.0, %v3483
    %v3485 = vrcp.pop %v3469
    %v3486 = vmul.f32 %v3469, %v3485
    %v3487 = vsub.f32 1.0, %v3486
    %v3488 = vmul.f32 %v3485, %v3487
    %v3489 = vadd.f32 %v3485, %v3488
    %vm3490 = vweird.f32 %v3469
    %vm3491 = vweird.f32 %v3485
    %vm3492 = vmor %vm3490, %vm3491
    %v3493 = vsel %vm3492, %v3485, %v3489
    %v3494 = vand.u32 2147483647, %v3469
    %vm3495 = vcmp.eq.f32.partialorder %v3494, 8.507059e+37
    %v3496 = vand.u32 %v3469, 2147483648
    %v3497 = vor.u32 1.1754944e-38, %v3496
    %v3498 = vsel %vm3495, %v3497, %v3493
    %v3499 = vmul.f32 1.0, %v3498
    %v3500 = vmul.f32 %v3444, %v3373
    %v3501 = vmul.f32 %v3459, %v3374
    %v3502 = vmul.f32 %v3444, %v3460
    %v3503 = vmul.f32 %v3459, %v3461
    %3506 = vrot.lane.b32.xlu0 %v3502, 64
    %v3507 = vpop.permute.xlu0 %3506
    %3508 = vrot.lane.b32.xlu0 %v3503, 64
    %v3509 = vpop.permute.xlu0 %3508
    %v3512 = vadd.f32 %v3500, %v3507
    %v3513 = vadd.f32 %v3501, %v3509
    %v3514 = vtanh.pop %v3512
    %v3515 = vtanh.pop %v3513
    %v3516 = vmul.f32 %v3484, %v3514
    %v3517 = vmul.f32 %v3499, %v3515
    %v3518 = vld [vmem:[%s7] sm:$0xf]
    %v3519 = vld [vmem:[%s7 + $0x4] sm:$0xf]
    %v3520 = vld [vmem:[%s7 + $0x8] sm:$0xf]
    %v3521 = vld [vmem:[%s7 + $0xc] sm:$0xf]
    %v3522 = vld [vmem:[%s7 + $0x10] sm:$0xf]
    %v3523 = vld [vmem:[%s7 + $0x14] sm:$0xf]
    %v3524 = vld [vmem:[%s7 + $0x18] sm:$0xf]
    %v3525 = vld [vmem:[%s7 + $0x1c] sm:$0xf]
    %v3526 = vpack.c.bf16 %v3517, %v3516
    %v3527 = vld [vmem:[%s7 + $0x20] sm:$0xf]
    %v3528 = vld [vmem:[%s7 + $0x24] sm:$0xf]
    %v3529 = vld [vmem:[%s7 + $0x28] sm:$0xf]
    %v3530 = vld [vmem:[%s7 + $0x2c] sm:$0xf]
    %v3531 = vld [vmem:[%s7 + $0x30] sm:$0xf]
    %v3532 = vld [vmem:[%s7 + $0x34] sm:$0xf]
    %v3533 = vld [vmem:[%s7 + $0x38] sm:$0xf]
    %v3534 = vld [vmem:[%s7 + $0x3c] sm:$0xf]
    %3536 = vrot.lane.b32.xlu0 %v3526, 64
    %v3537 = vpop.permute.xlu0 %3536
    %v3546 = vunpack.c.l.b16 %v3527
    %v3547 = vunpack.c.l.b16 %v3528
    %v3548 = vunpack.c.l.b16 %v3529
    %v3549 = vunpack.c.l.b16 %v3530
    %v3550 = vunpack.c.l.b16 %v3531
    %v3551 = vunpack.c.l.b16 %v3532
    %v3552 = vunpack.c.l.b16 %v3533
    %v3553 = vunpack.c.l.b16 %v3534
    %v3554 = vpack.c.b16 %v3547, %v3546
    %v3555 = vpack.c.b16 %v3549, %v3548
    %v3556 = vpack.c.b16 %v3551, %v3550
    %v3557 = vpack.c.b16 %v3553, %v3552
    %v3563 = vsel %vm483, %v3537, 0
    %3565 = vmatpush.bf16.msra.mxu0 0
    %3566 = vmatpush.bf16.msra.mxu0 0
    %3567 = vmatpush.bf16.msra.mxu0 0
    %3568 = vmatpush.bf16.msra.mxu0 0
    %3569 = vmatpush.bf16.msra.mxu0 %v3557
    %3570 = vmatpush.bf16.msra.mxu0 %v3556
    %3571 = vmatpush.bf16.msra.mxu0 %v3555
    %3572 = vmatpush.bf16.msra.mxu0 %v3554
    %3573 = vmatmul.bf16.gmra.mxu0 %v3563
    %v3574 = vpop.f32.mrf.mxu0
    %v3575 = vadd.f32 0.0, %v3574
    %v3576 = vpop.f32.mrf.mxu0
    %v3577 = vadd.f32 0.0, %v3576
    %3578 = vdwg.mxu0
    %v3587 = vunpack.c.l.b16 %v3518
    %v3588 = vunpack.c.l.b16 %v3519
    %v3589 = vunpack.c.l.b16 %v3520
    %v3590 = vunpack.c.l.b16 %v3521
    %v3591 = vunpack.c.l.b16 %v3522
    %v3592 = vunpack.c.l.b16 %v3523
    %v3593 = vunpack.c.l.b16 %v3524
    %v3594 = vunpack.c.l.b16 %v3525
    %v3595 = vpack.c.b16 %v3588, %v3587
    %v3596 = vpack.c.b16 %v3590, %v3589
    %v3597 = vpack.c.b16 %v3592, %v3591
    %v3598 = vpack.c.b16 %v3594, %v3593
    %3603 = vmatpush.bf16.msra.mxu0 0
    %3604 = vmatpush.bf16.msra.mxu0 0
    %3605 = vmatpush.bf16.msra.mxu0 0
    %3606 = vmatpush.bf16.msra.mxu0 0
    %3607 = vmatpush.bf16.msra.mxu0 %v3598
    %3608 = vmatpush.bf16.msra.mxu0 %v3597
    %3609 = vmatpush.bf16.msra.mxu0 %v3596
    %3610 = vmatpush.bf16.msra.mxu0 %v3595
    %3611 = vmatmul.bf16.gmra.mxu0 %v2554
    %v3612 = vpop.f32.mrf.mxu0
    %v3613 = vadd.f32 %v3575, %v3612
    %v3614 = vpop.f32.mrf.mxu0
    %v3615 = vadd.f32 %v3577, %v3614
    %3616 = vdwg.mxu0
    %v3617 = vld [vmem:[%s8] sm:$0x1]
    %v3619 = vperm.slane %v3617, 0
    %v3621 = vadd.f32 %v3613, %v3619
    %v3622 = vadd.f32 %v3615, %v3619
    %vm3623 = vcmask 48128
    %3624 = vst.msk [vmem:[%s9] sm:$0xff] %vm3623, %v3621
    %3625 = vst.msk [vmem:[%s9 + $0x8] sm:$0xff] %vm3623, %v3622
    // Predicated region
    $region46: #{tpu_custom_call.1} parent=1 // pred_check
      _
    $region47: #{tpu_custom_call.1} parent=1 // pred_check_branch
      %3627 = sbr.rel (0) target = $region49
    $region48: #{tpu_custom_call.1} parent=1 // pred_region
      _
    $region49: #{tpu_custom_call.1} parent=1 // pred_fallthru
      _
    // Predicated region
    $region50: #{tpu_custom_call.1} parent=1 // pred_check
      _
    $region51: #{tpu_custom_call.1} parent=1 // pred_check_branch
      %3629 = sbr.rel (0) target = $region53
    $region52: #{tpu_custom_call.1} parent=1 // pred_region
      _
    $region53: #{tpu_custom_call.1} parent=1 // pred_fallthru
      _
    %3630 = vsyncpa [#allocation5], 1
    %3631 = vsyncpa [#allocation7], 1

</llo_original>
